<compile_context>
chip_gen: v7x
topology: tpu7x:2x2x1
jax: 0.10.0
libtpu: 0.0.40
codegen_flags: <defaults>
</compile_context>

<pallas_src>
import numpy as np
import jax
import jax.numpy as jnp
from jax import lax
from jax.experimental import pallas as pl
from jax.experimental.pallas import tpu as pltpu

EPS = 1e-5


# ---------------------------------------------------------------------------
# Kernel helpers
# ---------------------------------------------------------------------------
def _pool2x2(ref, rows_out, wp):
    """2x2 / stride-2 max pool of a (2*rows_out, 2*wp, C) VMEM ref -> (rows_out, wp, C)."""
    a = ref[:, pl.ds(0, wp, stride=2), :]            # even columns
    b = ref[:, pl.ds(1, wp, stride=2), :]            # odd columns
    m = jnp.maximum(a, b)                            # pooled over W: (2*rows_out, wp, C)
    m = m.reshape(rows_out, 2, wp, m.shape[-1])      # split row pairs (leading dim: free)
    return jnp.maximum(m[:, 0], m[:, 1])             # pooled over H


def _conv3x3_im2col(pad_ref, w_ref, shift_ref, rows, cols):
    """3x3 'same' conv as ONE MXU matmul with K = 9*Cin.

    pad_ref:   (rows+2, cols+2, cin) bf16  zero-padded activation (VMEM scratch)
    w_ref:     (9*cin, cout)         bf16  weights with BN scale folded in
    shift_ref: (1, cout)             f32   folded BN shift (+ conv bias)
    returns:   (rows*cols, cout)     f32   after shift + ReLU
    """
    cin = pad_ref.shape[-1]
    taps = []
    for di in range(3):                              # tap order must match the
        for dj in range(3):                          # (kh, kw, cin) weight flattening
            taps.append(pad_ref[di:di + rows, dj:dj + cols, :]
                        .reshape(rows * cols, cin))
    slab = jnp.concatenate(taps, axis=-1)            # (rows*cols, 9*cin) bf16 im2col
    y = jnp.dot(slab, w_ref[...], preferred_element_type=jnp.float32)
    return jnp.maximum(y + shift_ref[...], 0.0)


def _down_kernel(xc_ref, xh_ref, w1_ref, s1_ref, w2_ref, s2_ref, o_ref,
                 pad1_ref, pad2_ref):
    bp, wp, cout = o_ref.shape                       # pooled rows of this band, pooled W
    cin = xc_ref.shape[-1]
    cmid = w1_ref.shape[-1]

    # Zero only the 1-pixel W borders of the padded scratches (conv zero padding).
    pad1_ref[:, 0:1, :] = jnp.zeros((bp + 4, 1, cin), pad1_ref.dtype)
    pad1_ref[:, wp + 1:wp + 2, :] = jnp.zeros((bp + 4, 1, cin), pad1_ref.dtype)
    pad2_ref[:, 0:1, :] = jnp.zeros((bp + 2, 1, cmid), pad2_ref.dtype)
    pad2_ref[:, wp + 1:wp + 2, :] = jnp.zeros((bp + 2, 1, cmid), pad2_ref.dtype)

    # ---- fused 2x2 max-pool of the core band and of the halo rows ----------
    pooled_core = _pool2x2(xc_ref, bp, wp)           # (bp, wp, cin), input dtype
    pooled_halo = _pool2x2(xh_ref, 4, wp)            # rows 0:2 above band, 2:4 below

    # pad1 interior rows hold pooled rows [band_start-2, band_start+bp+2).
    pad1_ref[0:2, 1:wp + 1, :] = pooled_halo[0:2].astype(pad1_ref.dtype)
    pad1_ref[2:bp + 2, 1:wp + 1, :] = pooled_core.astype(pad1_ref.dtype)
    pad1_ref[bp + 2:bp + 4, 1:wp + 1, :] = pooled_halo[2:4].astype(pad1_ref.dtype)

    # ---- conv1 (3x3) + folded BN + ReLU: one matmul, K = 9*cin --------------
    # Produces bp+2 rows of h1 (band plus one halo row above/below) so conv2
    # never needs neighbouring bands' h1.
    h1 = _conv3x3_im2col(pad1_ref, w1_ref, s1_ref, bp + 2, wp)
    pad2_ref[:, 1:wp + 1, :] = h1.reshape(bp + 2, wp, cmid).astype(pad2_ref.dtype)

    # conv2's zero padding at the image top/bottom edge: the halo h1 row there
    # must be exactly zero (it was computed from zero-padded pooled rows, which
    # is not the same thing).
    @pl.when(pl.program_id(1) == 0)
    def _():
        pad2_ref[0:1, :, :] = jnp.zeros((1, wp + 2, cmid), pad2_ref.dtype)

    @pl.when(pl.program_id(1) == pl.num_programs(1) - 1)
    def _():
        pad2_ref[bp + 1:bp + 2, :, :] = jnp.zeros((1, wp + 2, cmid), pad2_ref.dtype)

    # ---- conv2 (3x3) + folded BN + ReLU -------------------------------------
    h2 = _conv3x3_im2col(pad2_ref, w2_ref, s2_ref, bp, wp)       # (bp*wp, cout) f32
    o_ref[...] = h2.reshape(bp, wp, cout).astype(o_ref.dtype)


# ---------------------------------------------------------------------------
# Wrapper
# ---------------------------------------------------------------------------
def _fold_conv_bn(p):
    """Fold inference-mode BN (+ conv bias) into (bf16 im2col weights, f32 shift)."""
    scale = p["gamma"] / jnp.sqrt(p["var"] + EPS)
    shift = p["beta"] + scale * (p["bias"] - p["mean"])
    kh, kw, cin, cout = p["w"].shape
    w_folded = (p["w"] * scale[None, None, None, :]).reshape(kh * kw * cin, cout)
    return w_folded.astype(jnp.bfloat16), shift.reshape(1, cout).astype(jnp.float32)


def _pick_band_rows(hp, wp, w, cin, cmid, cout, budget_bytes=10 << 20):
    """Largest pooled-row band that (a) divides hp, (b) is 8-aligned (or the whole
    image), and (c) keeps the per-step VMEM working set under budget_bytes."""
    def est(bp):
        b = 2 * (2 * bp) * w * cin * 4        # core input band (double buffered, f32 worst case)
        b += 2 * 8 * w * cin * 4              # halo band (double buffered)
        b += (bp + 4) * (wp + 2) * cin * 2    # pad1 scratch (bf16)
        b += (bp + 2) * (wp + 2) * cmid * 2   # pad2 scratch (bf16)
        b += (bp + 2) * wp * 9 * cin * 2      # conv1 im2col slab (bf16)
        b += (bp + 2) * wp * cmid * 4         # conv1 f32 result
        b += bp * wp * 9 * cmid * 2           # conv2 im2col slab (bf16)
        b += bp * wp * cout * 4               # conv2 f32 result
        b += 2 * bp * wp * cout * 4           # output block (double buffered)
        return b

    cands = [d for d in range(1, hp + 1)
             if hp % d == 0 and (d % 8 == 0 or d == hp)]
    fit = [d for d in cands if est(d) <= budget_bytes]
    if not fit:
        # TODO(synk): add W tiling if even the smallest allowed band overflows VMEM.
        return min(cands)
    multi = [d for d in fit if hp // d >= 2]  # prefer >=2 bands so the pipeline overlaps
    return max(multi) if multi else max(fit)


def down_forward_nhwc(params, x_nhwc, out_dtype=jnp.float32):
    """Down.forward, NHWC in -> NHWC out (native layout; no transposes)."""
    n, h, w, cin = x_nhwc.shape
    assert h % 2 == 0 and w % 2 == 0, "even H/W required (MaxPool2d(2) floor not handled)"
    hp, wp = h // 2, w // 2

    w1, s1 = _fold_conv_bn(params["conv1"])
    w2, s2 = _fold_conv_bn(params["conv2"])
    cmid, cout = w1.shape[-1], w2.shape[-1]

    bp = _pick_band_rows(hp, wp, w, cin, cmid, cout)
    nb = hp // bp

    # Pre-gather the 4-input-row (= 2 pooled-row) halos above/below each band.
    # Rows outside the image are zero (they become the conv zero padding).
    starts = 2 * bp * jnp.arange(nb)
    row_idx = jnp.concatenate(
        [starts[:, None] - 4 + jnp.arange(4)[None, :],
         starts[:, None] + 2 * bp + jnp.arange(4)[None, :]], axis=1)     # (nb, 8)
    valid = (row_idx >= 0) & (row_idx < h)
    x_halo = jnp.where(valid[None, :, :, None, None],
                       x_nhwc[:, jnp.clip(row_idx, 0, h - 1)],
                       0).astype(x_nhwc.dtype)                           # (n, nb, 8, w, cin)

    out = pl.pallas_call(
        _down_kernel,
        out_shape=jax.ShapeDtypeStruct((n, hp, wp, cout), out_dtype),
        grid=(n, nb),
        in_specs=[
            pl.BlockSpec((None, 2 * bp, w, cin), lambda b, j: (b, j, 0, 0)),   # core band
            pl.BlockSpec((None, None, 8, w, cin), lambda b, j: (b, j, 0, 0, 0)),  # halo rows
            pl.BlockSpec((9 * cin, cmid), lambda b, j: (0, 0)),                # constant weights
            pl.BlockSpec((1, cmid), lambda b, j: (0, 0)),
            pl.BlockSpec((9 * cmid, cout), lambda b, j: (0, 0)),
            pl.BlockSpec((1, cout), lambda b, j: (0, 0)),
        ],
        out_specs=pl.BlockSpec((None, bp, wp, cout), lambda b, j: (b, j, 0, 0)),
        scratch_shapes=[
            pltpu.VMEM((bp + 4, wp + 2, cin), jnp.bfloat16),   # padded pooled band
            pltpu.VMEM((bp + 2, wp + 2, cmid), jnp.bfloat16),  # padded hidden band
        ],
        compiler_params=pltpu.CompilerParams(
            dimension_semantics=("parallel", "parallel"),      # megacore: batch AND bands
            vmem_limit_bytes=32 * 1024 * 1024),
    )(x_nhwc, x_halo, w1, s1, w2, s2)
    return out


def down_forward(params, x_nchw):
    """PyTorch-parity entry point: NCHW in -> NCHW out (half resolution, out_channels).

    The transposes here are only for parity with the PyTorch module; a full
    network should call `down_forward_nhwc` and stay NHWC end to end.
    """
    x = jnp.transpose(x_nchw, (0, 2, 3, 1))
    out = down_forward_nhwc(params, x, out_dtype=jnp.float32)
    return jnp.transpose(out, (0, 3, 1, 2))


# ---------------------------------------------------------------------------
# Plain-JAX reference (f32) for a correctness smoke test
# ---------------------------------------------------------------------------
def down_reference(params, x_nchw):
    x = jnp.transpose(x_nchw, (0, 2, 3, 1))
    x = lax.reduce_window(x, -jnp.inf, lax.max,
                          window_dimensions=(1, 2, 2, 1),
                          window_strides=(1, 2, 2, 1), padding="VALID")

    def conv_bn_relu(y, p):
        y = lax.conv_general_dilated(
            y, p["w"], window_strides=(1, 1), padding="SAME",
            dimension_numbers=("NHWC", "HWIO", "NHWC"))
        y = y + p["bias"]
        scale = p["gamma"] / jnp.sqrt(p["var"] + EPS)
        y = (y - p["mean"]) * scale + p["beta"]
        return jnp.maximum(y, 0.0)

    x = conv_bn_relu(x, params["conv1"])
    x = conv_bn_relu(x, params["conv2"])
    return jnp.transpose(x, (0, 3, 1, 2))


# ---------------------------------------------------------------------------
# Deterministic parameter construction
# ---------------------------------------------------------------------------
class KeyGen:
    def __init__(self, key):
        self.key = key
        self.i = 0

    def __call__(self):
        self.i += 1
        return jax.random.fold_in(self.key, self.i)


def init_conv_bn(kg, cin, cout):
    return {
        "w": jax.random.normal(kg(), (3, 3, cin, cout), jnp.float32) / np.sqrt(9 * cin),
        "bias": 0.1 * jax.random.normal(kg(), (cout,), jnp.float32),
        "gamma": 1.0 + 0.1 * jax.random.normal(kg(), (cout,), jnp.float32),
        "beta": 0.1 * jax.random.normal(kg(), (cout,), jnp.float32),
        "mean": 0.1 * jax.random.normal(kg(), (cout,), jnp.float32),
        "var": jnp.abs(jax.random.normal(kg(), (cout,), jnp.float32)) + 1.0,
    }


def init_down(key, cin, cout):
    kg = KeyGen(key)
    return {"conv1": init_conv_bn(kg, cin, cout),
            "conv2": init_conv_bn(kg, cout, cout)}


# ---------------------------------------------------------------------------
if __name__ == "__main__":
    in_channels, out_channels = 4, 8
    params = init_down(jax.random.PRNGKey(0), in_channels, out_channels)

    fwd = jax.jit(down_forward)
    ref_fn = jax.jit(down_reference)

    # 32x32 exercises the multi-band path (2 row-bands with halo exchange);
    # 16x16 exercises the single-band path (halos are pure zero padding).
    for hw in (32, 16):
        x = jax.random.normal(jax.random.PRNGKey(0),
                              (2, in_channels, hw, hw), jnp.float32)
        out = jax.block_until_ready(fwd(params, x))
        assert out.shape == (2, out_channels, hw // 2, hw // 2), out.shape
        assert bool(jnp.all(jnp.isfinite(out)))

        ref = jax.block_until_ready(ref_fn(params, x))
        # Kernel feeds the MXU bf16 operands (f32 accumulation); reference is f32.
        np.testing.assert_allclose(np.asarray(out), np.asarray(ref),
                                   rtol=1e-1, atol=1e-1)

    print("KERNEL_OK")
</pallas_src>

<mosaic_0001>
module attributes {stable_mosaic.version = 11 : i64} {
  func.func @_down_kernel(%arg0: i32, %arg1: i32, %arg2: memref<1x16x32x4xf32, #tpu.memory_space<vmem>>, %arg3: memref<1x1x8x32x4xf32, #tpu.memory_space<vmem>>, %arg4: memref<36x8xbf16, #tpu.memory_space<vmem>>, %arg5: memref<1x8xf32, #tpu.memory_space<vmem>>, %arg6: memref<72x8xbf16, #tpu.memory_space<vmem>>, %arg7: memref<1x8xf32, #tpu.memory_space<vmem>>, %arg8: memref<1x8x16x8xf32, #tpu.memory_space<vmem>>, %arg9: memref<12x18x4xbf16, #tpu.memory_space<vmem>>, %arg10: memref<10x18x8xbf16, #tpu.memory_space<vmem>>) attributes {dimension_semantics = [#tpu.dimension_semantics<parallel>, #tpu.dimension_semantics<parallel>], iteration_bounds = array<i64: 2, 2>, scalar_prefetch = 0 : i64, scratch_operands = 2 : i64, tpu.core_type = #tpu.core_type<tc>, window_params = [{transform_indices = @transform_0, window_bounds = array<i64: 1, 16, 32, 4>}, {transform_indices = @transform_1, window_bounds = array<i64: 1, 1, 8, 32, 4>}, {pipeline_mode = #tpu.pipeline_mode<synchronous>, transform_indices = @transform_2, window_bounds = array<i64: 36, 8>}, {pipeline_mode = #tpu.pipeline_mode<synchronous>, transform_indices = @transform_3, window_bounds = array<i64: 1, 8>}, {pipeline_mode = #tpu.pipeline_mode<synchronous>, transform_indices = @transform_4, window_bounds = array<i64: 72, 8>}, {pipeline_mode = #tpu.pipeline_mode<synchronous>, transform_indices = @transform_5, window_bounds = array<i64: 1, 8>}, {transform_indices = @transform_6, window_bounds = array<i64: 1, 8, 16, 8>}]} {
    %cst = arith.constant 0.000000e+00 : bf16
    %0 = vector.broadcast %cst : bf16 to vector<12x1x4xbf16>
    %c0 = arith.constant 0 : index
    %c0_0 = arith.constant 0 : index
    %c0_1 = arith.constant 0 : index
    %1 = vector.load %arg9[%c0, %c0_0, %c0_1] : memref<12x18x4xbf16, #tpu.memory_space<vmem>>, vector<12x1x4xbf16>
    tpu.vector_store %arg9[%c0, %c0_0, %c0_1], %0 {strides = array<i32>} : memref<12x18x4xbf16, #tpu.memory_space<vmem>>, vector<12x1x4xbf16>,
    %cst_2 = arith.constant 0.000000e+00 : bf16
    %2 = vector.broadcast %cst_2 : bf16 to vector<12x1x4xbf16>
    %c0_3 = arith.constant 0 : index
    %c17 = arith.constant 17 : index
    %c0_4 = arith.constant 0 : index
    %3 = vector.load %arg9[%c0_3, %c17, %c0_4] : memref<12x18x4xbf16, #tpu.memory_space<vmem>>, vector<12x1x4xbf16>
    tpu.vector_store %arg9[%c0_3, %c17, %c0_4], %2 {strides = array<i32>} : memref<12x18x4xbf16, #tpu.memory_space<vmem>>, vector<12x1x4xbf16>,
    %cst_5 = arith.constant 0.000000e+00 : bf16
    %4 = vector.broadcast %cst_5 : bf16 to vector<10x1x8xbf16>
    %c0_6 = arith.constant 0 : index
    %c0_7 = arith.constant 0 : index
    %c0_8 = arith.constant 0 : index
    %5 = vector.load %arg10[%c0_6, %c0_7, %c0_8] : memref<10x18x8xbf16, #tpu.memory_space<vmem>>, vector<10x1x8xbf16>
    tpu.vector_store %arg10[%c0_6, %c0_7, %c0_8], %4 {strides = array<i32>} : memref<10x18x8xbf16, #tpu.memory_space<vmem>>, vector<10x1x8xbf16>,
    %cst_9 = arith.constant 0.000000e+00 : bf16
    %6 = vector.broadcast %cst_9 : bf16 to vector<10x1x8xbf16>
    %c0_10 = arith.constant 0 : index
    %c17_11 = arith.constant 17 : index
    %c0_12 = arith.constant 0 : index
    %7 = vector.load %arg10[%c0_10, %c17_11, %c0_12] : memref<10x18x8xbf16, #tpu.memory_space<vmem>>, vector<10x1x8xbf16>
    tpu.vector_store %arg10[%c0_10, %c17_11, %c0_12], %6 {strides = array<i32>} : memref<10x18x8xbf16, #tpu.memory_space<vmem>>, vector<10x1x8xbf16>,
    %c0_13 = arith.constant 0 : index
    %c0_14 = arith.constant 0 : index
    %c0_15 = arith.constant 0 : index
    %c0_16 = arith.constant 0 : index
    %8 = tpu.strided_load %arg2[%c0_13, %c0_14, %c0_15, %c0_16] {strides = array<i32: 1, 1, 2, 1>} : memref<1x16x32x4xf32, #tpu.memory_space<vmem>>, vector<1x16x16x4xf32>
    %9 = vector.shape_cast %8 : vector<1x16x16x4xf32> to vector<16x16x4xf32>
    %c0_17 = arith.constant 0 : index
    %c0_18 = arith.constant 0 : index
    %c1 = arith.constant 1 : index
    %c0_19 = arith.constant 0 : index
    %10 = tpu.strided_load %arg2[%c0_17, %c0_18, %c1, %c0_19] {strides = array<i32: 1, 1, 2, 1>} : memref<1x16x32x4xf32, #tpu.memory_space<vmem>>, vector<1x16x16x4xf32>
    %11 = vector.shape_cast %10 : vector<1x16x16x4xf32> to vector<16x16x4xf32>
    %12 = arith.maximumf %9, %11 : vector<16x16x4xf32>
    %13 = vector.shape_cast %12 : vector<16x16x4xf32> to vector<8x2x16x4xf32>
    %14 = vector.extract_strided_slice %13 {offsets = [0, 0, 0, 0], sizes = [8, 1, 16, 4], strides = [1, 1, 1, 1]} : vector<8x2x16x4xf32> to vector<8x1x16x4xf32>
    %15 = vector.shape_cast %14 : vector<8x1x16x4xf32> to vector<8x16x4xf32>
    %16 = vector.extract_strided_slice %13 {offsets = [0, 1, 0, 0], sizes = [8, 1, 16, 4], strides = [1, 1, 1, 1]} : vector<8x2x16x4xf32> to vector<8x1x16x4xf32>
    %17 = vector.shape_cast %16 : vector<8x1x16x4xf32> to vector<8x16x4xf32>
    %18 = arith.maximumf %15, %17 : vector<8x16x4xf32>
    %c0_20 = arith.constant 0 : index
    %c0_21 = arith.constant 0 : index
    %c0_22 = arith.constant 0 : index
    %c0_23 = arith.constant 0 : index
    %c0_24 = arith.constant 0 : index
    %19 = tpu.strided_load %arg3[%c0_20, %c0_21, %c0_22, %c0_23, %c0_24] {strides = array<i32: 1, 1, 1, 2, 1>} : memref<1x1x8x32x4xf32, #tpu.memory_space<vmem>>, vector<1x1x8x16x4xf32>
    %20 = vector.shape_cast %19 : vector<1x1x8x16x4xf32> to vector<8x16x4xf32>
    %c0_25 = arith.constant 0 : index
    %c0_26 = arith.constant 0 : index
    %c0_27 = arith.constant 0 : index
    %c1_28 = arith.constant 1 : index
    %c0_29 = arith.constant 0 : index
    %21 = tpu.strided_load %arg3[%c0_25, %c0_26, %c0_27, %c1_28, %c0_29] {strides = array<i32: 1, 1, 1, 2, 1>} : memref<1x1x8x32x4xf32, #tpu.memory_space<vmem>>, vector<1x1x8x16x4xf32>
    %22 = vector.shape_cast %21 : vector<1x1x8x16x4xf32> to vector<8x16x4xf32>
    %23 = arith.maximumf %20, %22 : vector<8x16x4xf32>
    %24 = vector.shape_cast %23 : vector<8x16x4xf32> to vector<4x2x16x4xf32>
    %25 = vector.extract_strided_slice %24 {offsets = [0, 0, 0, 0], sizes = [4, 1, 16, 4], strides = [1, 1, 1, 1]} : vector<4x2x16x4xf32> to vector<4x1x16x4xf32>
    %26 = vector.shape_cast %25 : vector<4x1x16x4xf32> to vector<4x16x4xf32>
    %27 = vector.extract_strided_slice %24 {offsets = [0, 1, 0, 0], sizes = [4, 1, 16, 4], strides = [1, 1, 1, 1]} : vector<4x2x16x4xf32> to vector<4x1x16x4xf32>
    %28 = vector.shape_cast %27 : vector<4x1x16x4xf32> to vector<4x16x4xf32>
    %29 = arith.maximumf %26, %28 : vector<4x16x4xf32>
    %30 = vector.extract_strided_slice %29 {offsets = [0, 0, 0], sizes = [2, 16, 4], strides = [1, 1, 1]} : vector<4x16x4xf32> to vector<2x16x4xf32>
    %31 = arith.truncf %30 : vector<2x16x4xf32> to vector<2x16x4xbf16>
    %c0_30 = arith.constant 0 : index
    %c1_31 = arith.constant 1 : index
    %c0_32 = arith.constant 0 : index
    %32 = vector.load %arg9[%c0_30, %c1_31, %c0_32] : memref<12x18x4xbf16, #tpu.memory_space<vmem>>, vector<2x16x4xbf16>
    tpu.vector_store %arg9[%c0_30, %c1_31, %c0_32], %31 {strides = array<i32>} : memref<12x18x4xbf16, #tpu.memory_space<vmem>>, vector<2x16x4xbf16>,
    %33 = arith.truncf %18 : vector<8x16x4xf32> to vector<8x16x4xbf16>
    %c2 = arith.constant 2 : index
    %c1_33 = arith.constant 1 : index
    %c0_34 = arith.constant 0 : index
    %34 = vector.load %arg9[%c2, %c1_33, %c0_34] : memref<12x18x4xbf16, #tpu.memory_space<vmem>>, vector<8x16x4xbf16>
    tpu.vector_store %arg9[%c2, %c1_33, %c0_34], %33 {strides = array<i32>} : memref<12x18x4xbf16, #tpu.memory_space<vmem>>, vector<8x16x4xbf16>,
    %35 = vector.extract_strided_slice %29 {offsets = [2, 0, 0], sizes = [2, 16, 4], strides = [1, 1, 1]} : vector<4x16x4xf32> to vector<2x16x4xf32>
    %36 = arith.truncf %35 : vector<2x16x4xf32> to vector<2x16x4xbf16>
    %c10 = arith.constant 10 : index
    %c1_35 = arith.constant 1 : index
    %c0_36 = arith.constant 0 : index
    %37 = vector.load %arg9[%c10, %c1_35, %c0_36] : memref<12x18x4xbf16, #tpu.memory_space<vmem>>, vector<2x16x4xbf16>
    tpu.vector_store %arg9[%c10, %c1_35, %c0_36], %36 {strides = array<i32>} : memref<12x18x4xbf16, #tpu.memory_space<vmem>>, vector<2x16x4xbf16>,
    %c0_37 = arith.constant 0 : index
    %c0_38 = arith.constant 0 : index
    %c0_39 = arith.constant 0 : index
    %38 = vector.load %arg9[%c0_37, %c0_38, %c0_39] : memref<12x18x4xbf16, #tpu.memory_space<vmem>>, vector<10x16x4xbf16>
    %39 = vector.shape_cast %38 : vector<10x16x4xbf16> to vector<160x4xbf16>
    %c0_40 = arith.constant 0 : index
    %c1_41 = arith.constant 1 : index
    %c0_42 = arith.constant 0 : index
    %40 = vector.load %arg9[%c0_40, %c1_41, %c0_42] : memref<12x18x4xbf16, #tpu.memory_space<vmem>>, vector<10x16x4xbf16>
    %41 = vector.shape_cast %40 : vector<10x16x4xbf16> to vector<160x4xbf16>
    %c0_43 = arith.constant 0 : index
    %c2_44 = arith.constant 2 : index
    %c0_45 = arith.constant 0 : index
    %42 = vector.load %arg9[%c0_43, %c2_44, %c0_45] : memref<12x18x4xbf16, #tpu.memory_space<vmem>>, vector<10x16x4xbf16>
    %43 = vector.shape_cast %42 : vector<10x16x4xbf16> to vector<160x4xbf16>
    %c1_46 = arith.constant 1 : index
    %c0_47 = arith.constant 0 : index
    %c0_48 = arith.constant 0 : index
    %44 = vector.load %arg9[%c1_46, %c0_47, %c0_48] : memref<12x18x4xbf16, #tpu.memory_space<vmem>>, vector<10x16x4xbf16>
    %45 = vector.shape_cast %44 : vector<10x16x4xbf16> to vector<160x4xbf16>
    %c1_49 = arith.constant 1 : index
    %c1_50 = arith.constant 1 : index
    %c0_51 = arith.constant 0 : index
    %46 = vector.load %arg9[%c1_49, %c1_50, %c0_51] : memref<12x18x4xbf16, #tpu.memory_space<vmem>>, vector<10x16x4xbf16>
    %47 = vector.shape_cast %46 : vector<10x16x4xbf16> to vector<160x4xbf16>
    %c1_52 = arith.constant 1 : index
    %c2_53 = arith.constant 2 : index
    %c0_54 = arith.constant 0 : index
    %48 = vector.load %arg9[%c1_52, %c2_53, %c0_54] : memref<12x18x4xbf16, #tpu.memory_space<vmem>>, vector<10x16x4xbf16>
    %49 = vector.shape_cast %48 : vector<10x16x4xbf16> to vector<160x4xbf16>
    %c2_55 = arith.constant 2 : index
    %c0_56 = arith.constant 0 : index
    %c0_57 = arith.constant 0 : index
    %50 = vector.load %arg9[%c2_55, %c0_56, %c0_57] : memref<12x18x4xbf16, #tpu.memory_space<vmem>>, vector<10x16x4xbf16>
    %51 = vector.shape_cast %50 : vector<10x16x4xbf16> to vector<160x4xbf16>
    %c2_58 = arith.constant 2 : index
    %c1_59 = arith.constant 1 : index
    %c0_60 = arith.constant 0 : index
    %52 = vector.load %arg9[%c2_58, %c1_59, %c0_60] : memref<12x18x4xbf16, #tpu.memory_space<vmem>>, vector<10x16x4xbf16>
    %53 = vector.shape_cast %52 : vector<10x16x4xbf16> to vector<160x4xbf16>
    %c2_61 = arith.constant 2 : index
    %c2_62 = arith.constant 2 : index
    %c0_63 = arith.constant 0 : index
    %54 = vector.load %arg9[%c2_61, %c2_62, %c0_63] : memref<12x18x4xbf16, #tpu.memory_space<vmem>>, vector<10x16x4xbf16>
    %55 = vector.shape_cast %54 : vector<10x16x4xbf16> to vector<160x4xbf16>
    %56 = tpu.concatenate %39, %41, %43, %45, %47, %49, %51, %53, %55 in 1 : vector<160x4xbf16>, vector<160x4xbf16>, vector<160x4xbf16>, vector<160x4xbf16>, vector<160x4xbf16>, vector<160x4xbf16>, vector<160x4xbf16>, vector<160x4xbf16>, vector<160x4xbf16> -> vector<160x36xbf16>
    %c0_64 = arith.constant 0 : index
    %c0_65 = arith.constant 0 : index
    %57 = vector.load %arg4[%c0_64, %c0_65] : memref<36x8xbf16, #tpu.memory_space<vmem>>, vector<36x8xbf16>
    %cst_66 = arith.constant dense<0.000000e+00> : vector<160x8xf32>
    %58 = tpu.matmul %56, %57, %cst_66 {dimension_numbers = #tpu.dot_dimension_numbers<[1], [0], [0], [1], [0, 0, 1, 1], [], []>} : vector<160x36xbf16>, vector<36x8xbf16>, vector<160x8xf32> -> vector<160x8xf32>
    %c0_67 = arith.constant 0 : index
    %c0_68 = arith.constant 0 : index
    %59 = vector.load %arg5[%c0_67, %c0_68] : memref<1x8xf32, #tpu.memory_space<vmem>>, vector<1x8xf32>
    %60 = vector.broadcast %59 : vector<1x8xf32> to vector<160x8xf32>
    %61 = arith.addf %58, %60 : vector<160x8xf32>
    %cst_69 = arith.constant 0.000000e+00 : f32
    %62 = vector.broadcast %cst_69 : f32 to vector<160x8xf32>
    %63 = arith.maximumf %61, %62 : vector<160x8xf32>
    %64 = vector.shape_cast %63 : vector<160x8xf32> to vector<10x16x8xf32>
    %65 = arith.truncf %64 : vector<10x16x8xf32> to vector<10x16x8xbf16>
    %c0_70 = arith.constant 0 : index
    %c1_71 = arith.constant 1 : index
    %c0_72 = arith.constant 0 : index
    %66 = vector.load %arg10[%c0_70, %c1_71, %c0_72] : memref<10x18x8xbf16, #tpu.memory_space<vmem>>, vector<10x16x8xbf16>
    tpu.vector_store %arg10[%c0_70, %c1_71, %c0_72], %65 {strides = array<i32>} : memref<10x18x8xbf16, #tpu.memory_space<vmem>>, vector<10x16x8xbf16>,
    %c0_i32 = arith.constant 0 : i32
    %67 = arith.cmpi eq, %arg1, %c0_i32 : i32
    %68 = arith.extui %67 : i1 to i32
    %c0_i32_73 = arith.constant 0 : i32
    %69 = arith.cmpi ne, %68, %c0_i32_73 : i32
    scf.if %69 {
      %cst_112 = arith.constant 0.000000e+00 : bf16
      %103 = vector.broadcast %cst_112 : bf16 to vector<1x18x8xbf16>
      %c0_113 = arith.constant 0 : index
      %c0_114 = arith.constant 0 : index
      %c0_115 = arith.constant 0 : index
      %104 = vector.load %arg10[%c0_113, %c0_114, %c0_115] : memref<10x18x8xbf16, #tpu.memory_space<vmem>>, vector<1x18x8xbf16>
      tpu.vector_store %arg10[%c0_113, %c0_114, %c0_115], %103 {strides = array<i32>} : memref<10x18x8xbf16, #tpu.memory_space<vmem>>, vector<1x18x8xbf16>,
    } else {
    }
    %c1_i32 = arith.constant 1 : i32
    %70 = arith.cmpi eq, %arg1, %c1_i32 : i32
    %71 = arith.extui %70 : i1 to i32
    %c0_i32_74 = arith.constant 0 : i32
    %72 = arith.cmpi ne, %71, %c0_i32_74 : i32
    scf.if %72 {
      %cst_112 = arith.constant 0.000000e+00 : bf16
      %103 = vector.broadcast %cst_112 : bf16 to vector<1x18x8xbf16>
      %c9 = arith.constant 9 : index
      %c0_113 = arith.constant 0 : index
      %c0_114 = arith.constant 0 : index
      %104 = vector.load %arg10[%c9, %c0_113, %c0_114] : memref<10x18x8xbf16, #tpu.memory_space<vmem>>, vector<1x18x8xbf16>
      tpu.vector_store %arg10[%c9, %c0_113, %c0_114], %103 {strides = array<i32>} : memref<10x18x8xbf16, #tpu.memory_space<vmem>>, vector<1x18x8xbf16>,
    } else {
    }
    %c0_75 = arith.constant 0 : index
    %c0_76 = arith.constant 0 : index
    %c0_77 = arith.constant 0 : index
    %73 = vector.load %arg10[%c0_75, %c0_76, %c0_77] : memref<10x18x8xbf16, #tpu.memory_space<vmem>>, vector<8x16x8xbf16>
    %74 = vector.shape_cast %73 : vector<8x16x8xbf16> to vector<128x8xbf16>
    %c0_78 = arith.constant 0 : index
    %c1_79 = arith.constant 1 : index
    %c0_80 = arith.constant 0 : index
    %75 = vector.load %arg10[%c0_78, %c1_79, %c0_80] : memref<10x18x8xbf16, #tpu.memory_space<vmem>>, vector<8x16x8xbf16>
    %76 = vector.shape_cast %75 : vector<8x16x8xbf16> to vector<128x8xbf16>
    %c0_81 = arith.constant 0 : index
    %c2_82 = arith.constant 2 : index
    %c0_83 = arith.constant 0 : index
    %77 = vector.load %arg10[%c0_81, %c2_82, %c0_83] : memref<10x18x8xbf16, #tpu.memory_space<vmem>>, vector<8x16x8xbf16>
    %78 = vector.shape_cast %77 : vector<8x16x8xbf16> to vector<128x8xbf16>
    %c1_84 = arith.constant 1 : index
    %c0_85 = arith.constant 0 : index
    %c0_86 = arith.constant 0 : index
    %79 = vector.load %arg10[%c1_84, %c0_85, %c0_86] : memref<10x18x8xbf16, #tpu.memory_space<vmem>>, vector<8x16x8xbf16>
    %80 = vector.shape_cast %79 : vector<8x16x8xbf16> to vector<128x8xbf16>
    %c1_87 = arith.constant 1 : index
    %c1_88 = arith.constant 1 : index
    %c0_89 = arith.constant 0 : index
    %81 = vector.load %arg10[%c1_87, %c1_88, %c0_89] : memref<10x18x8xbf16, #tpu.memory_space<vmem>>, vector<8x16x8xbf16>
    %82 = vector.shape_cast %81 : vector<8x16x8xbf16> to vector<128x8xbf16>
    %c1_90 = arith.constant 1 : index
    %c2_91 = arith.constant 2 : index
    %c0_92 = arith.constant 0 : index
    %83 = vector.load %arg10[%c1_90, %c2_91, %c0_92] : memref<10x18x8xbf16, #tpu.memory_space<vmem>>, vector<8x16x8xbf16>
    %84 = vector.shape_cast %83 : vector<8x16x8xbf16> to vector<128x8xbf16>
    %c2_93 = arith.constant 2 : index
    %c0_94 = arith.constant 0 : index
    %c0_95 = arith.constant 0 : index
    %85 = vector.load %arg10[%c2_93, %c0_94, %c0_95] : memref<10x18x8xbf16, #tpu.memory_space<vmem>>, vector<8x16x8xbf16>
    %86 = vector.shape_cast %85 : vector<8x16x8xbf16> to vector<128x8xbf16>
    %c2_96 = arith.constant 2 : index
    %c1_97 = arith.constant 1 : index
    %c0_98 = arith.constant 0 : index
    %87 = vector.load %arg10[%c2_96, %c1_97, %c0_98] : memref<10x18x8xbf16, #tpu.memory_space<vmem>>, vector<8x16x8xbf16>
    %88 = vector.shape_cast %87 : vector<8x16x8xbf16> to vector<128x8xbf16>
    %c2_99 = arith.constant 2 : index
    %c2_100 = arith.constant 2 : index
    %c0_101 = arith.constant 0 : index
    %89 = vector.load %arg10[%c2_99, %c2_100, %c0_101] : memref<10x18x8xbf16, #tpu.memory_space<vmem>>, vector<8x16x8xbf16>
    %90 = vector.shape_cast %89 : vector<8x16x8xbf16> to vector<128x8xbf16>
    %91 = tpu.concatenate %74, %76, %78, %80, %82, %84, %86, %88, %90 in 1 : vector<128x8xbf16>, vector<128x8xbf16>, vector<128x8xbf16>, vector<128x8xbf16>, vector<128x8xbf16>, vector<128x8xbf16>, vector<128x8xbf16>, vector<128x8xbf16>, vector<128x8xbf16> -> vector<128x72xbf16>
    %c0_102 = arith.constant 0 : index
    %c0_103 = arith.constant 0 : index
    %92 = vector.load %arg6[%c0_102, %c0_103] : memref<72x8xbf16, #tpu.memory_space<vmem>>, vector<72x8xbf16>
    %cst_104 = arith.constant dense<0.000000e+00> : vector<128x8xf32>
    %93 = tpu.matmul %91, %92, %cst_104 {dimension_numbers = #tpu.dot_dimension_numbers<[1], [0], [0], [1], [0, 0, 1, 1], [], []>} : vector<128x72xbf16>, vector<72x8xbf16>, vector<128x8xf32> -> vector<128x8xf32>
    %c0_105 = arith.constant 0 : index
    %c0_106 = arith.constant 0 : index
    %94 = vector.load %arg7[%c0_105, %c0_106] : memref<1x8xf32, #tpu.memory_space<vmem>>, vector<1x8xf32>
    %95 = vector.broadcast %94 : vector<1x8xf32> to vector<128x8xf32>
    %96 = arith.addf %93, %95 : vector<128x8xf32>
    %cst_107 = arith.constant 0.000000e+00 : f32
    %97 = vector.broadcast %cst_107 : f32 to vector<128x8xf32>
    %98 = arith.maximumf %96, %97 : vector<128x8xf32>
    %99 = vector.shape_cast %98 : vector<128x8xf32> to vector<8x16x8xf32>
    %c0_108 = arith.constant 0 : index
    %c0_109 = arith.constant 0 : index
    %c0_110 = arith.constant 0 : index
    %c0_111 = arith.constant 0 : index
    %100 = vector.load %arg8[%c0_108, %c0_109, %c0_110, %c0_111] : memref<1x8x16x8xf32, #tpu.memory_space<vmem>>, vector<1x8x16x8xf32>
    %101 = vector.shape_cast %100 : vector<1x8x16x8xf32> to vector<8x16x8xf32>
    %102 = vector.shape_cast %99 : vector<8x16x8xf32> to vector<1x8x16x8xf32>
    tpu.vector_store %arg8[%c0_108, %c0_109, %c0_110, %c0_111], %102 {strides = array<i32>} : memref<1x8x16x8xf32, #tpu.memory_space<vmem>>, vector<1x8x16x8xf32>,
    return
  }
  func.func @transform_0(%arg0: i32, %arg1: i32) -> (i32, i32, i32, i32) {
    %c0_i32 = arith.constant 0 : i32
    %c0_i32_0 = arith.constant 0 : i32
    %c0_i32_1 = arith.constant 0 : i32
    return %arg0, %arg1, %c0_i32, %c0_i32_0 : i32, i32, i32, i32
  }
  func.func @transform_1(%arg0: i32, %arg1: i32) -> (i32, i32, i32, i32, i32) {
    %c0_i32 = arith.constant 0 : i32
    %c0_i32_0 = arith.constant 0 : i32
    %c0_i32_1 = arith.constant 0 : i32
    %c0_i32_2 = arith.constant 0 : i32
    return %arg0, %arg1, %c0_i32, %c0_i32_0, %c0_i32_1 : i32, i32, i32, i32, i32
  }
  func.func @transform_2(%arg0: i32, %arg1: i32) -> (i32, i32) {
    %c0_i32 = arith.constant 0 : i32
    %c0_i32_0 = arith.constant 0 : i32
    %c0_i32_1 = arith.constant 0 : i32
    return %c0_i32, %c0_i32_0 : i32, i32
  }
  func.func @transform_3(%arg0: i32, %arg1: i32) -> (i32, i32) {
    %c0_i32 = arith.constant 0 : i32
    %c0_i32_0 = arith.constant 0 : i32
    %c0_i32_1 = arith.constant 0 : i32
    return %c0_i32, %c0_i32_0 : i32, i32
  }
  func.func @transform_4(%arg0: i32, %arg1: i32) -> (i32, i32) {
    %c0_i32 = arith.constant 0 : i32
    %c0_i32_0 = arith.constant 0 : i32
    %c0_i32_1 = arith.constant 0 : i32
    return %c0_i32, %c0_i32_0 : i32, i32
  }
  func.func @transform_5(%arg0: i32, %arg1: i32) -> (i32, i32) {
    %c0_i32 = arith.constant 0 : i32
    %c0_i32_0 = arith.constant 0 : i32
    %c0_i32_1 = arith.constant 0 : i32
    return %c0_i32, %c0_i32_0 : i32, i32
  }
  func.func @transform_6(%arg0: i32, %arg1: i32) -> (i32, i32, i32, i32) {
    %c0_i32 = arith.constant 0 : i32
    %c0_i32_0 = arith.constant 0 : i32
    %c0_i32_1 = arith.constant 0 : i32
    return %arg0, %arg1, %c0_i32, %c0_i32_0 : i32, i32, i32, i32
  }
}

</mosaic_0001>

<llo_original>
// kernel: down_forward.1
$region0: #{down_forward.1}
  #allocation0 [shape = 'u32[]', space=smem, size = 0x4, offset = 0x4, fixed_abs, tag = 'smem constant byte address 0x4 - core index']
  #allocation1 [shape = 'u32[144,128]{1,0:T(1,128)}', space=vmem, size = 0x12000, scoped, tag = 'internal scratch']
  #allocation2 [shape = 'bf16[12,18,4]{2,1,0:T(8,128)(2,1)}', space=vmem, size = 0x12000, scoped, tag = 'scratch operand']
  #allocation3 [shape = 'bf16[10,18,8]{2,1,0:T(8,128)(2,1)}', space=vmem, size = 0xf000, scoped, tag = 'scratch operand']
  %s0 = inlined_call_operand.vmem [shape: f32[2,32,32,4], index: 0, kind: input, shape index: {}]
  %s1 = inlined_call_operand.vmem [shape: f32[2,2,8,32,4], index: 1, kind: input, shape index: {}]
  %s2 = inlined_call_operand.vmem [shape: bf16[36,8], index: 2, kind: input, shape index: {}]
  %s3 = inlined_call_operand.vmem [shape: f32[1,8], index: 3, kind: input, shape index: {}]
  %s4 = inlined_call_operand.vmem [shape: bf16[72,8], index: 4, kind: input, shape index: {}]
  %s5 = inlined_call_operand.vmem [shape: f32[1,8], index: 5, kind: input, shape index: {}]
  %s6 = inlined_call_operand.vmem [shape: f32[2,16,16,8], index: 6, kind: output, shape index: {}]
  %s7 = sld [smem:[#allocation0]]
  $region65: #{down_forward.1} parent=0
    _
  %s9 = ssub.s32 1, %s7
  %s10 = scalar_select 0, %s9, %s7
  loop: start=0, step=1, limit=6
  $region2: #{down_forward.1} parent=0 // loop_pre_header
    _
  $region3: #{down_forward.1} parent=0 // loop_header
    %s12 = sphi 0, %s16
    %p13 = scmp.ge.s32.totalorder %s12, 6
    %s19 = sphi 0, %s31
    %s20 = sphi 0, %s27
    %s21 = sphi 0, %s19
    %s22 = sphi 0, %s20
    %s23 = sphi 0, %s21
    %s24 = sphi 0, %s22
    %s36 = sphi 0, %s38
    %s39 = sphi 0, %s36
    %s40 = sphi 0, %s39
    %s56 = sphi 0, %s40
    %s64 = sphi 0, %s66
    %s67 = sphi 0, %s64
    %s68 = sphi 0, %s67
    %s84 = sphi 0, %s68
    %s88 = sphi 0, %s88
    %s90 = sphi 0, %s88
    %s91 = sphi 0, %s90
    %s105 = sphi 0, %s91
    %s109 = sphi 0, %s109
    %s111 = sphi 0, %s109
    %s112 = sphi 0, %s111
    %s126 = sphi 0, %s112
    %s130 = sphi 0, %s130
    %s132 = sphi 0, %s130
    %s133 = sphi 0, %s132
    %s147 = sphi 0, %s133
    %s151 = sphi 0, %s151
    %s153 = sphi 0, %s151
    %s154 = sphi 0, %s153
    %s168 = sphi 0, %s154
    %s176 = sphi 0, %s178
    %s179 = sphi 0, %s176
    %s180 = sphi 0, %s179
    %s196 = sphi 0, %s180
  $region4: #{down_forward.1} parent=0 // loop_header_branch
    %15 = sbr.rel (%p13) target = $region8
  $region5: #{down_forward.1} parent=0 // loop_body
    %s17 = ssub.s32 %s12, 1
    %s18 = ssub.s32 %s12, 2
    %s25 = sadd.s32 1, %s20
    %p26 = scmp.ge.s32.totalorder %s25, 2
    %s27 = scalar_select %p26, 0, %s25
    %s28 = sadd.s32 1, %s19
    %s29 = scalar_select %p26, %s28, %s19
    %p30 = scmp.ge.s32.totalorder %s29, 2
    %s31 = scalar_select %p30, 0, %s29
    %s32 = ssub.s32 %s19, %s31
    %s33 = ssub.s32 %s20, %s27
    %s34 = sor.u32 %s32, %s33
    %p35 = scmp.eq.s32.totalorder %s34, 0
    %s37 = sadd.s32 %s36, 1
    %s38 = scalar_select %p35, %s36, %s37
    %p41 = pneg %p35
    %p42 = scmp.eq.s32.totalorder %s12, 3
    %p43 = por %p41, %p42
    %p44 = scmp.ne.s32.totalorder %s36, %s39
    %p45 = scmp.eq.s32.totalorder %s12, 0
    %p46 = por %p44, %p45
    %p47 = scmp.ne.s32.totalorder %s36, %s39
    %p48 = scmp.eq.s32.totalorder %s17, 3
    %p49 = por %p47, %p48
    %p50 = scmp.ne.s32.totalorder %s39, %s40
    %p51 = scmp.eq.s32.totalorder %s17, 0
    %p52 = por %p50, %p51
    %p53 = scmp.ne.s32.totalorder %s39, %s40
    %p54 = scmp.eq.s32.totalorder %s18, 3
    %p55 = por %p53, %p54
    %p57 = scmp.ne.s32.totalorder %s40, %s56
    %p58 = scmp.eq.s32.totalorder %s18, 0
    %p59 = por %p57, %p58
    %s60 = ssub.s32 %s19, %s31
    %s61 = ssub.s32 %s20, %s27
    %s62 = sor.u32 %s60, %s61
    %p63 = scmp.eq.s32.totalorder %s62, 0
    %s65 = sadd.s32 %s64, 1
    %s66 = scalar_select %p63, %s64, %s65
    %p69 = pneg %p63
    %p70 = scmp.eq.s32.totalorder %s12, 3
    %p71 = por %p69, %p70
    %p72 = scmp.ne.s32.totalorder %s64, %s67
    %p73 = scmp.eq.s32.totalorder %s12, 0
    %p74 = por %p72, %p73
    %p75 = scmp.ne.s32.totalorder %s64, %s67
    %p76 = scmp.eq.s32.totalorder %s17, 3
    %p77 = por %p75, %p76
    %p78 = scmp.ne.s32.totalorder %s67, %s68
    %p79 = scmp.eq.s32.totalorder %s17, 0
    %p80 = por %p78, %p79
    %p81 = scmp.ne.s32.totalorder %s67, %s68
    %p82 = scmp.eq.s32.totalorder %s18, 3
    %p83 = por %p81, %p82
    %p85 = scmp.ne.s32.totalorder %s68, %s84
    %p86 = scmp.eq.s32.totalorder %s18, 0
    %p87 = por %p85, %p86
    %s89 = sadd.s32 %s88, 1
    %p92 = scmp.eq.s32.totalorder %s12, 3
    %p93 = scmp.ne.s32.totalorder %s88, %s90
    %p94 = scmp.eq.s32.totalorder %s12, 0
    %p95 = por %p93, %p94
    %p96 = scmp.ne.s32.totalorder %s88, %s90
    %p97 = scmp.eq.s32.totalorder %s17, 3
    %p98 = por %p96, %p97
    %p99 = scmp.ne.s32.totalorder %s90, %s91
    %p100 = scmp.eq.s32.totalorder %s17, 0
    %p101 = por %p99, %p100
    %p102 = scmp.ne.s32.totalorder %s90, %s91
    %p103 = scmp.eq.s32.totalorder %s18, 3
    %p104 = por %p102, %p103
    %p106 = scmp.ne.s32.totalorder %s91, %s105
    %p107 = scmp.eq.s32.totalorder %s18, 0
    %p108 = por %p106, %p107
    %s110 = sadd.s32 %s109, 1
    %p113 = scmp.eq.s32.totalorder %s12, 3
    %p114 = scmp.ne.s32.totalorder %s109, %s111
    %p115 = scmp.eq.s32.totalorder %s12, 0
    %p116 = por %p114, %p115
    %p117 = scmp.ne.s32.totalorder %s109, %s111
    %p118 = scmp.eq.s32.totalorder %s17, 3
    %p119 = por %p117, %p118
    %p120 = scmp.ne.s32.totalorder %s111, %s112
    %p121 = scmp.eq.s32.totalorder %s17, 0
    %p122 = por %p120, %p121
    %p123 = scmp.ne.s32.totalorder %s111, %s112
    %p124 = scmp.eq.s32.totalorder %s18, 3
    %p125 = por %p123, %p124
    %p127 = scmp.ne.s32.totalorder %s112, %s126
    %p128 = scmp.eq.s32.totalorder %s18, 0
    %p129 = por %p127, %p128
    %s131 = sadd.s32 %s130, 1
    %p134 = scmp.eq.s32.totalorder %s12, 3
    %p135 = scmp.ne.s32.totalorder %s130, %s132
    %p136 = scmp.eq.s32.totalorder %s12, 0
    %p137 = por %p135, %p136
    %p138 = scmp.ne.s32.totalorder %s130, %s132
    %p139 = scmp.eq.s32.totalorder %s17, 3
    %p140 = por %p138, %p139
    %p141 = scmp.ne.s32.totalorder %s132, %s133
    %p142 = scmp.eq.s32.totalorder %s17, 0
    %p143 = por %p141, %p142
    %p144 = scmp.ne.s32.totalorder %s132, %s133
    %p145 = scmp.eq.s32.totalorder %s18, 3
    %p146 = por %p144, %p145
    %p148 = scmp.ne.s32.totalorder %s133, %s147
    %p149 = scmp.eq.s32.totalorder %s18, 0
    %p150 = por %p148, %p149
    %s152 = sadd.s32 %s151, 1
    %p155 = scmp.eq.s32.totalorder %s12, 3
    %p156 = scmp.ne.s32.totalorder %s151, %s153
    %p157 = scmp.eq.s32.totalorder %s12, 0
    %p158 = por %p156, %p157
    %p159 = scmp.ne.s32.totalorder %s151, %s153
    %p160 = scmp.eq.s32.totalorder %s17, 3
    %p161 = por %p159, %p160
    %p162 = scmp.ne.s32.totalorder %s153, %s154
    %p163 = scmp.eq.s32.totalorder %s17, 0
    %p164 = por %p162, %p163
    %p165 = scmp.ne.s32.totalorder %s153, %s154
    %p166 = scmp.eq.s32.totalorder %s18, 3
    %p167 = por %p165, %p166
    %p169 = scmp.ne.s32.totalorder %s154, %s168
    %p170 = scmp.eq.s32.totalorder %s18, 0
    %p171 = por %p169, %p170
    %s172 = ssub.s32 %s19, %s31
    %s173 = ssub.s32 %s20, %s27
    %s174 = sor.u32 %s172, %s173
    %p175 = scmp.eq.s32.totalorder %s174, 0
    %s177 = sadd.s32 %s176, 1
    %s178 = scalar_select %p175, %s176, %s177
    %p181 = pneg %p175
    %p182 = scmp.eq.s32.totalorder %s12, 3
    %p183 = por %p181, %p182
    %p184 = scmp.ne.s32.totalorder %s176, %s179
    %p185 = scmp.eq.s32.totalorder %s12, 0
    %p186 = por %p184, %p185
    %p187 = scmp.ne.s32.totalorder %s176, %s179
    %p188 = scmp.eq.s32.totalorder %s17, 3
    %p189 = por %p187, %p188
    %p190 = scmp.ne.s32.totalorder %s179, %s180
    %p191 = scmp.eq.s32.totalorder %s17, 0
    %p192 = por %p190, %p191
    %p193 = scmp.ne.s32.totalorder %s179, %s180
    %p194 = scmp.eq.s32.totalorder %s18, 3
    %p195 = por %p193, %p194
    %p197 = scmp.ne.s32.totalorder %s180, %s196
    %p198 = scmp.eq.s32.totalorder %s18, 0
    %p199 = por %p197, %p198
    %p200 = scmp.le.s32.totalorder 1, %s12
    %p201 = scmp.lt.s32.totalorder %s12, 5
    %p202 = pnand %p200, %p201
    %p203 = pneg %p202
    // Predicated region
    $region9: #{down_forward.1} parent=5 // pred_check
      _
    $region10: #{down_forward.1} parent=5 // pred_check_branch
      %205 = sbr.rel (%p202) target = $region12
    $region11: #{down_forward.1} parent=5 // pred_region
      %s206 = ssub.s32 %s12, 1
      // Predicated region
      $region13: #{down_forward.1} parent=11 // pred_check
        %p207 = pneg %p101
      $region14: #{down_forward.1} parent=11 // pred_check_branch
        %209 = sbr.rel (%p207) target = $region16
      $region15: #{down_forward.1} parent=11 // pred_region
        _
      $region16: #{down_forward.1} parent=11 // pred_fallthru
        _
      // Predicated region
      $region17: #{down_forward.1} parent=11 // pred_check
        %p210 = pneg %p122
      $region18: #{down_forward.1} parent=11 // pred_check_branch
        %212 = sbr.rel (%p210) target = $region20
      $region19: #{down_forward.1} parent=11 // pred_region
        _
      $region20: #{down_forward.1} parent=11 // pred_fallthru
        _
      // Predicated region
      $region21: #{down_forward.1} parent=11 // pred_check
        %p213 = pneg %p143
      $region22: #{down_forward.1} parent=11 // pred_check_branch
        %215 = sbr.rel (%p213) target = $region24
      $region23: #{down_forward.1} parent=11 // pred_region
        _
      $region24: #{down_forward.1} parent=11 // pred_fallthru
        _
      // Predicated region
      $region25: #{down_forward.1} parent=11 // pred_check
        %p216 = pneg %p164
      $region26: #{down_forward.1} parent=11 // pred_check_branch
        %218 = sbr.rel (%p216) target = $region28
      $region27: #{down_forward.1} parent=11 // pred_region
        _
      $region28: #{down_forward.1} parent=11 // pred_fallthru
        _
    $region12: #{down_forward.1} parent=5 // pred_fallthru
      _
    %p219 = scmp.lt.s32.totalorder %s12, 4
    // Predicated region
    $region29: #{down_forward.1} parent=5 // pred_check
      %p220 = pneg %p219
    $region30: #{down_forward.1} parent=5 // pred_check_branch
      %222 = sbr.rel (%p220) target = $region32
    $region31: #{down_forward.1} parent=5 // pred_region
      // Predicated region
      $region33: #{down_forward.1} parent=31 // pred_check
        %p223 = pneg %p46
      $region34: #{down_forward.1} parent=31 // pred_check_branch
        %225 = sbr.rel (%p223) target = $region36
      $region35: #{down_forward.1} parent=31 // pred_region
        %s226 = smul.u32 16, %s20
        %p227 = scmp.lt.s32.totalorder %s19, 1
        %s228 = scalar_select %p227, %s19, 1
        %p229 = scmp.lt.s32.totalorder %s226, 31
        %s230 = scalar_select %p229, %s226, 31
        %s231 = smul.addr %s230, 4
        %s232 = smul.addr %s228, 128
        %s233 = sadd.s32 %s231, %s232
        %s234 = smul.addr %s233, 8
        %s235 = scalar_lea.vmem %s0, %s234
        %s236 = smul.u32 16, %s20
      $region36: #{down_forward.1} parent=31 // pred_fallthru
        _
      // Predicated region
      $region37: #{down_forward.1} parent=31 // pred_check
        %p237 = pneg %p74
      $region38: #{down_forward.1} parent=31 // pred_check_branch
        %239 = sbr.rel (%p237) target = $region40
      $region39: #{down_forward.1} parent=31 // pred_region
        %p240 = scmp.lt.s32.totalorder %s19, 1
        %s241 = scalar_select %p240, %s19, 1
        %p242 = scmp.lt.s32.totalorder %s20, 1
        %s243 = scalar_select %p242, %s20, 1
        %s244 = smul.addr %s243, 32
        %s245 = smul.addr %s241, 64
        %s246 = sadd.s32 %s244, %s245
        %s247 = smul.addr %s246, 8
        %s248 = scalar_lea.vmem %s1, %s247
      $region40: #{down_forward.1} parent=31 // pred_fallthru
        _
    $region32: #{down_forward.1} parent=5 // pred_fallthru
      _
    %p249 = scmp.le.s32.totalorder 1, %s12
    %p250 = scmp.lt.s32.totalorder %s12, 5
    %p251 = pnand %p249, %p250
    %p252 = pneg %p251
    // Predicated region
    $region41: #{down_forward.1} parent=5 // pred_check
      _
    $region42: #{down_forward.1} parent=5 // pred_check_branch
      %254 = sbr.rel (%p251) target = $region44
    $region43: #{down_forward.1} parent=5 // pred_region
      %s255 = ssub.s32 %s12, 1
      %s256 = smul.u32 16, %s22
      %p257 = scmp.lt.s32.totalorder %s21, 1
      %s258 = scalar_select %p257, %s21, 1
      %p259 = scmp.lt.s32.totalorder %s256, 31
      %s260 = scalar_select %p259, %s256, 31
      %s261 = smul.addr %s260, 4
      %s262 = smul.addr %s258, 128
      %s263 = sadd.s32 %s261, %s262
      %s264 = smul.addr %s263, 8
      %s265 = scalar_lea.vmem %s0, %s264
      %p266 = pneg %p52
      %p267 = pneg %p49
      %p268 = scmp.lt.s32.totalorder %s21, 1
      %s269 = scalar_select %p268, %s21, 1
      %p270 = scmp.lt.s32.totalorder %s22, 1
      %s271 = scalar_select %p270, %s22, 1
      %s272 = smul.addr %s271, 32
      %s273 = smul.addr %s269, 64
      %s274 = sadd.s32 %s272, %s273
      %s275 = smul.addr %s274, 8
      %s276 = scalar_lea.vmem %s1, %s275
      %p277 = pneg %p80
      %p278 = pneg %p77
      %p279 = pneg %p101
      %p280 = pneg %p98
      %p281 = pneg %p122
      %p282 = pneg %p119
      %p283 = pneg %p143
      %p284 = pneg %p140
      %p285 = pneg %p164
      %p286 = pneg %p161
      %p287 = pneg %p192
      %p288 = pneg %p189
      %s289 = smul.u32 8, %s22
      %p290 = scmp.lt.s32.totalorder %s21, 1
      %s291 = scalar_select %p290, %s21, 1
      %p292 = scmp.lt.s32.totalorder %s289, 15
      %s293 = scalar_select %p292, %s289, 15
      %s294 = smul.addr %s293, 2
      %s295 = smul.addr %s291, 32
      %s296 = sadd.s32 %s294, %s295
      %s297 = smul.addr %s296, 8
      %s298 = scalar_lea.vmem %s6, %s297
      %s299 = smul.u32 16, %s22
      %p300 = scmp.lt.s32.totalorder %s21, 1
      %s301 = scalar_select %p300, %s21, 1
      %p302 = scmp.lt.s32.totalorder %s299, 31
      %s303 = scalar_select %p302, %s299, 31
      %s304 = smul.addr %s303, 4
      %s305 = smul.addr %s301, 128
      %s306 = sadd.s32 %s304, %s305
      %s307 = smul.addr %s306, 8
      %s308 = scalar_lea.vmem %s0, %s307
      %s309 = smul.u32 16, %s22
      %p310 = scmp.lt.s32.totalorder %s21, 1
      %s311 = scalar_select %p310, %s21, 1
      %p312 = scmp.lt.s32.totalorder %s22, 1
      %s313 = scalar_select %p312, %s22, 1
      %s314 = smul.addr %s313, 32
      %s315 = smul.addr %s311, 64
      %s316 = sadd.s32 %s314, %s315
      %s317 = smul.addr %s316, 8
      %s318 = scalar_lea.vmem %s1, %s317
      %s319 = smul.u32 8, %s22
      %p320 = scmp.lt.s32.totalorder %s21, 1
      %s321 = scalar_select %p320, %s21, 1
      %p322 = scmp.lt.s32.totalorder %s319, 15
      %s323 = scalar_select %p322, %s319, 15
      %s324 = smul.addr %s323, 2
      %s325 = smul.addr %s321, 32
      %s326 = sadd.s32 %s324, %s325
      %s327 = smul.addr %s326, 8
      %s328 = scalar_lea.vmem %s6, %s327
      %s329 = smul.u32 8, %s22
      %vm331 = vcmask 24576
      %vm332 = vsmask.f32 256
      %vm333 = vmand %vm331, %vm332
      %v334 = vld [vmem:[#allocation2] sm:$0x1]
      %v335 = vsel %vm333, 0, %v334
      %336 = vst [vmem:[#allocation2] sm:$0x1] %v335
      %v337 = vld [vmem:[#allocation2 + $0xc] sm:$0x1]
      %v338 = vsel %vm333, 0, %v337
      %339 = vst [vmem:[#allocation2 + $0xc] sm:$0x1] %v338
      %v340 = vld [vmem:[#allocation2 + $0x18] sm:$0x1]
      %v341 = vsel %vm333, 0, %v340
      %342 = vst [vmem:[#allocation2 + $0x18] sm:$0x1] %v341
      %v343 = vld [vmem:[#allocation2 + $0x24] sm:$0x1]
      %v344 = vsel %vm333, 0, %v343
      %345 = vst [vmem:[#allocation2 + $0x24] sm:$0x1] %v344
      %v346 = vld [vmem:[#allocation2 + $0x30] sm:$0x1]
      %v347 = vsel %vm333, 0, %v346
      %348 = vst [vmem:[#allocation2 + $0x30] sm:$0x1] %v347
      %v349 = vld [vmem:[#allocation2 + $0x3c] sm:$0x1]
      %v350 = vsel %vm333, 0, %v349
      %351 = vst [vmem:[#allocation2 + $0x3c] sm:$0x1] %v350
      %v352 = vld [vmem:[#allocation2 + $0x48] sm:$0x1]
      %v353 = vsel %vm333, 0, %v352
      %354 = vst [vmem:[#allocation2 + $0x48] sm:$0x1] %v353
      %v355 = vld [vmem:[#allocation2 + $0x54] sm:$0x1]
      %v356 = vsel %vm333, 0, %v355
      %357 = vst [vmem:[#allocation2 + $0x54] sm:$0x1] %v356
      %v358 = vld [vmem:[#allocation2 + $0x60] sm:$0x1]
      %v359 = vsel %vm333, 0, %v358
      %360 = vst [vmem:[#allocation2 + $0x60] sm:$0x1] %v359
      %v361 = vld [vmem:[#allocation2 + $0x6c] sm:$0x1]
      %v362 = vsel %vm333, 0, %v361
      %363 = vst [vmem:[#allocation2 + $0x6c] sm:$0x1] %v362
      %v364 = vld [vmem:[#allocation2 + $0x78] sm:$0x1]
      %v365 = vsel %vm333, 0, %v364
      %366 = vst [vmem:[#allocation2 + $0x78] sm:$0x1] %v365
      %v367 = vld [vmem:[#allocation2 + $0x84] sm:$0x1]
      %v368 = vsel %vm333, 0, %v367
      %369 = vst [vmem:[#allocation2 + $0x84] sm:$0x1] %v368
      %vm370 = vsmask.f32 7938
      %vm371 = vmand %vm331, %vm370
      %v372 = vld [vmem:[#allocation2 + $0x8] sm:$0x1]
      %v373 = vsel %vm371, 0, %v372
      %374 = vst [vmem:[#allocation2 + $0x8] sm:$0x1] %v373
      %v375 = vld [vmem:[#allocation2 + $0x14] sm:$0x1]
      %v376 = vsel %vm371, 0, %v375
      %377 = vst [vmem:[#allocation2 + $0x14] sm:$0x1] %v376
      %v378 = vld [vmem:[#allocation2 + $0x20] sm:$0x1]
      %v379 = vsel %vm371, 0, %v378
      %380 = vst [vmem:[#allocation2 + $0x20] sm:$0x1] %v379
      %v381 = vld [vmem:[#allocation2 + $0x2c] sm:$0x1]
      %v382 = vsel %vm371, 0, %v381
      %383 = vst [vmem:[#allocation2 + $0x2c] sm:$0x1] %v382
      %v384 = vld [vmem:[#allocation2 + $0x38] sm:$0x1]
      %v385 = vsel %vm371, 0, %v384
      %386 = vst [vmem:[#allocation2 + $0x38] sm:$0x1] %v385
      %v387 = vld [vmem:[#allocation2 + $0x44] sm:$0x1]
      %v388 = vsel %vm371, 0, %v387
      %389 = vst [vmem:[#allocation2 + $0x44] sm:$0x1] %v388
      %v390 = vld [vmem:[#allocation2 + $0x50] sm:$0x1]
      %v391 = vsel %vm371, 0, %v390
      %392 = vst [vmem:[#allocation2 + $0x50] sm:$0x1] %v391
      %v393 = vld [vmem:[#allocation2 + $0x5c] sm:$0x1]
      %v394 = vsel %vm371, 0, %v393
      %395 = vst [vmem:[#allocation2 + $0x5c] sm:$0x1] %v394
      %v396 = vld [vmem:[#allocation2 + $0x68] sm:$0x1]
      %v397 = vsel %vm371, 0, %v396
      %398 = vst [vmem:[#allocation2 + $0x68] sm:$0x1] %v397
      %v399 = vld [vmem:[#allocation2 + $0x74] sm:$0x1]
      %v400 = vsel %vm371, 0, %v399
      %401 = vst [vmem:[#allocation2 + $0x74] sm:$0x1] %v400
      %v402 = vld [vmem:[#allocation2 + $0x80] sm:$0x1]
      %v403 = vsel %vm371, 0, %v402
      %404 = vst [vmem:[#allocation2 + $0x80] sm:$0x1] %v403
      %v405 = vld [vmem:[#allocation2 + $0x8c] sm:$0x1]
      %v406 = vsel %vm371, 0, %v405
      %407 = vst [vmem:[#allocation2 + $0x8c] sm:$0x1] %v406
      %vm408 = vcmask 57344
      %vm409 = vmand %vm408, %vm332
      %v410 = vld [vmem:[#allocation3] sm:$0x1]
      %v411 = vsel %vm409, 0, %v410
      %412 = vst [vmem:[#allocation3] sm:$0x1] %v411
      %v413 = vld [vmem:[#allocation3 + $0xc] sm:$0x1]
      %v414 = vsel %vm409, 0, %v413
      %415 = vst [vmem:[#allocation3 + $0xc] sm:$0x1] %v414
      %v416 = vld [vmem:[#allocation3 + $0x18] sm:$0x1]
      %v417 = vsel %vm409, 0, %v416
      %418 = vst [vmem:[#allocation3 + $0x18] sm:$0x1] %v417
      %v419 = vld [vmem:[#allocation3 + $0x24] sm:$0x1]
      %v420 = vsel %vm409, 0, %v419
      %421 = vst [vmem:[#allocation3 + $0x24] sm:$0x1] %v420
      %v422 = vld [vmem:[#allocation3 + $0x30] sm:$0x1]
      %v423 = vsel %vm409, 0, %v422
      %424 = vst [vmem:[#allocation3 + $0x30] sm:$0x1] %v423
      %v425 = vld [vmem:[#allocation3 + $0x3c] sm:$0x1]
      %v426 = vsel %vm409, 0, %v425
      %427 = vst [vmem:[#allocation3 + $0x3c] sm:$0x1] %v426
      %v428 = vld [vmem:[#allocation3 + $0x48] sm:$0x1]
      %v429 = vsel %vm409, 0, %v428
      %430 = vst [vmem:[#allocation3 + $0x48] sm:$0x1] %v429
      %v431 = vld [vmem:[#allocation3 + $0x54] sm:$0x1]
      %v432 = vsel %vm409, 0, %v431
      %433 = vst [vmem:[#allocation3 + $0x54] sm:$0x1] %v432
      %v434 = vld [vmem:[#allocation3 + $0x60] sm:$0x1]
      %v435 = vsel %vm409, 0, %v434
      %436 = vst [vmem:[#allocation3 + $0x60] sm:$0x1] %v435
      %v437 = vld [vmem:[#allocation3 + $0x6c] sm:$0x1]
      %v438 = vsel %vm409, 0, %v437
      %439 = vst [vmem:[#allocation3 + $0x6c] sm:$0x1] %v438
      %vm440 = vmand %vm408, %vm370
      %v441 = vld [vmem:[#allocation3 + $0x8] sm:$0x1]
      %v442 = vsel %vm440, 0, %v441
      %443 = vst [vmem:[#allocation3 + $0x8] sm:$0x1] %v442
      %v444 = vld [vmem:[#allocation3 + $0x14] sm:$0x1]
      %v445 = vsel %vm440, 0, %v444
      %446 = vst [vmem:[#allocation3 + $0x14] sm:$0x1] %v445
      %v447 = vld [vmem:[#allocation3 + $0x20] sm:$0x1]
      %v448 = vsel %vm440, 0, %v447
      %449 = vst [vmem:[#allocation3 + $0x20] sm:$0x1] %v448
      %v450 = vld [vmem:[#allocation3 + $0x2c] sm:$0x1]
      %v451 = vsel %vm440, 0, %v450
      %452 = vst [vmem:[#allocation3 + $0x2c] sm:$0x1] %v451
      %v453 = vld [vmem:[#allocation3 + $0x38] sm:$0x1]
      %v454 = vsel %vm440, 0, %v453
      %455 = vst [vmem:[#allocation3 + $0x38] sm:$0x1] %v454
      %v456 = vld [vmem:[#allocation3 + $0x44] sm:$0x1]
      %v457 = vsel %vm440, 0, %v456
      %458 = vst [vmem:[#allocation3 + $0x44] sm:$0x1] %v457
      %v459 = vld [vmem:[#allocation3 + $0x50] sm:$0x1]
      %v460 = vsel %vm440, 0, %v459
      %461 = vst [vmem:[#allocation3 + $0x50] sm:$0x1] %v460
      %v462 = vld [vmem:[#allocation3 + $0x5c] sm:$0x1]
      %v463 = vsel %vm440, 0, %v462
      %464 = vst [vmem:[#allocation3 + $0x5c] sm:$0x1] %v463
      %v465 = vld [vmem:[#allocation3 + $0x68] sm:$0x1]
      %v466 = vsel %vm440, 0, %v465
      %467 = vst [vmem:[#allocation3 + $0x68] sm:$0x1] %v466
      %v468 = vld [vmem:[#allocation3 + $0x74] sm:$0x1]
      %v469 = vsel %vm440, 0, %v468
      %470 = vst [vmem:[#allocation3 + $0x74] sm:$0x1] %v469
      %v471 = vld [vmem:[%s308] ss:$2 sm:$0xff]
      %s472 = scalar_lea.vmem %s308, 16
      %v473 = vld [vmem:[%s472] ss:$2 sm:$0xff]
      %s474 = scalar_lea.vmem %s308, 32
      %v475 = vld [vmem:[%s474] ss:$2 sm:$0xff]
      %s476 = scalar_lea.vmem %s308, 48
      %v477 = vld [vmem:[%s476] ss:$2 sm:$0xff]
      %s478 = scalar_lea.vmem %s308, 64
      %v479 = vld [vmem:[%s478] ss:$2 sm:$0xff]
      %s480 = scalar_lea.vmem %s308, 80
      %v481 = vld [vmem:[%s480] ss:$2 sm:$0xff]
      %s482 = scalar_lea.vmem %s308, 96
      %v483 = vld [vmem:[%s482] ss:$2 sm:$0xff]
      %s484 = scalar_lea.vmem %s308, 112
      %v485 = vld [vmem:[%s484] ss:$2 sm:$0xff]
      %s486 = scalar_lea.vmem %s308, 128
      %v487 = vld [vmem:[%s486] ss:$2 sm:$0xff]
      %s488 = scalar_lea.vmem %s308, 144
      %v489 = vld [vmem:[%s488] ss:$2 sm:$0xff]
      %s490 = scalar_lea.vmem %s308, 160
      %v491 = vld [vmem:[%s490] ss:$2 sm:$0xff]
      %s492 = scalar_lea.vmem %s308, 176
      %v493 = vld [vmem:[%s492] ss:$2 sm:$0xff]
      %s494 = scalar_lea.vmem %s308, 192
      %v495 = vld [vmem:[%s494] ss:$2 sm:$0xff]
      %s496 = scalar_lea.vmem %s308, 208
      %v497 = vld [vmem:[%s496] ss:$2 sm:$0xff]
      %s498 = scalar_lea.vmem %s308, 224
      %v499 = vld [vmem:[%s498] ss:$2 sm:$0xff]
      %s500 = scalar_lea.vmem %s308, 240
      %v501 = vld [vmem:[%s500] ss:$2 sm:$0xff]
      %s502 = scalar_lea.vmem %s308, 256
      %v503 = vld [vmem:[%s502] ss:$2 sm:$0xff]
      %s504 = scalar_lea.vmem %s308, 272
      %v505 = vld [vmem:[%s504] ss:$2 sm:$0xff]
      %s506 = scalar_lea.vmem %s308, 288
      %v507 = vld [vmem:[%s506] ss:$2 sm:$0xff]
      %s508 = scalar_lea.vmem %s308, 304
      %v509 = vld [vmem:[%s508] ss:$2 sm:$0xff]
      %s510 = scalar_lea.vmem %s308, 320
      %v511 = vld [vmem:[%s510] ss:$2 sm:$0xff]
      %s512 = scalar_lea.vmem %s308, 336
      %v513 = vld [vmem:[%s512] ss:$2 sm:$0xff]
      %s514 = scalar_lea.vmem %s308, 352
      %v515 = vld [vmem:[%s514] ss:$2 sm:$0xff]
      %s516 = scalar_lea.vmem %s308, 368
      %v517 = vld [vmem:[%s516] ss:$2 sm:$0xff]
      %s518 = scalar_lea.vmem %s308, 384
      %v519 = vld [vmem:[%s518] ss:$2 sm:$0xff]
      %s520 = scalar_lea.vmem %s308, 400
      %v521 = vld [vmem:[%s520] ss:$2 sm:$0xff]
      %s522 = scalar_lea.vmem %s308, 416
      %v523 = vld [vmem:[%s522] ss:$2 sm:$0xff]
      %s524 = scalar_lea.vmem %s308, 432
      %v525 = vld [vmem:[%s524] ss:$2 sm:$0xff]
      %s526 = scalar_lea.vmem %s308, 448
      %v527 = vld [vmem:[%s526] ss:$2 sm:$0xff]
      %s528 = scalar_lea.vmem %s308, 464
      %v529 = vld [vmem:[%s528] ss:$2 sm:$0xff]
      %s530 = scalar_lea.vmem %s308, 480
      %v531 = vld [vmem:[%s530] ss:$2 sm:$0xff]
      %s532 = scalar_lea.vmem %s308, 496
      %v533 = vld [vmem:[%s532] ss:$2 sm:$0xff]
      %s534 = scalar_lea.vmem %s308, 1
      %v535 = vld [vmem:[%s534] ss:$2 sm:$0xff]
      %s536 = scalar_lea.vmem %s308, 17
      %v537 = vld [vmem:[%s536] ss:$2 sm:$0xff]
      %s538 = scalar_lea.vmem %s308, 33
      %v539 = vld [vmem:[%s538] ss:$2 sm:$0xff]
      %s540 = scalar_lea.vmem %s308, 49
      %v541 = vld [vmem:[%s540] ss:$2 sm:$0xff]
      %s542 = scalar_lea.vmem %s308, 65
      %v543 = vld [vmem:[%s542] ss:$2 sm:$0xff]
      %s544 = scalar_lea.vmem %s308, 81
      %v545 = vld [vmem:[%s544] ss:$2 sm:$0xff]
      %s546 = scalar_lea.vmem %s308, 97
      %v547 = vld [vmem:[%s546] ss:$2 sm:$0xff]
      %s548 = scalar_lea.vmem %s308, 113
      %v549 = vld [vmem:[%s548] ss:$2 sm:$0xff]
      %s550 = scalar_lea.vmem %s308, 129
      %v551 = vld [vmem:[%s550] ss:$2 sm:$0xff]
      %s552 = scalar_lea.vmem %s308, 145
      %v553 = vld [vmem:[%s552] ss:$2 sm:$0xff]
      %s554 = scalar_lea.vmem %s308, 161
      %v555 = vld [vmem:[%s554] ss:$2 sm:$0xff]
      %s556 = scalar_lea.vmem %s308, 177
      %v557 = vld [vmem:[%s556] ss:$2 sm:$0xff]
      %s558 = scalar_lea.vmem %s308, 193
      %v559 = vld [vmem:[%s558] ss:$2 sm:$0xff]
      %s560 = scalar_lea.vmem %s308, 209
      %v561 = vld [vmem:[%s560] ss:$2 sm:$0xff]
      %s562 = scalar_lea.vmem %s308, 225
      %v563 = vld [vmem:[%s562] ss:$2 sm:$0xff]
      %s564 = scalar_lea.vmem %s308, 241
      %v565 = vld [vmem:[%s564] ss:$2 sm:$0xff]
      %s566 = scalar_lea.vmem %s308, 257
      %v567 = vld [vmem:[%s566] ss:$2 sm:$0xff]
      %s568 = scalar_lea.vmem %s308, 273
      %v569 = vld [vmem:[%s568] ss:$2 sm:$0xff]
      %s570 = scalar_lea.vmem %s308, 289
      %v571 = vld [vmem:[%s570] ss:$2 sm:$0xff]
      %s572 = scalar_lea.vmem %s308, 305
      %v573 = vld [vmem:[%s572] ss:$2 sm:$0xff]
      %s574 = scalar_lea.vmem %s308, 321
      %v575 = vld [vmem:[%s574] ss:$2 sm:$0xff]
      %s576 = scalar_lea.vmem %s308, 337
      %v577 = vld [vmem:[%s576] ss:$2 sm:$0xff]
      %s578 = scalar_lea.vmem %s308, 353
      %v579 = vld [vmem:[%s578] ss:$2 sm:$0xff]
      %s580 = scalar_lea.vmem %s308, 369
      %v581 = vld [vmem:[%s580] ss:$2 sm:$0xff]
      %s582 = scalar_lea.vmem %s308, 385
      %v583 = vld [vmem:[%s582] ss:$2 sm:$0xff]
      %s584 = scalar_lea.vmem %s308, 401
      %v585 = vld [vmem:[%s584] ss:$2 sm:$0xff]
      %s586 = scalar_lea.vmem %s308, 417
      %v587 = vld [vmem:[%s586] ss:$2 sm:$0xff]
      %s588 = scalar_lea.vmem %s308, 433
      %v589 = vld [vmem:[%s588] ss:$2 sm:$0xff]
      %s590 = scalar_lea.vmem %s308, 449
      %v591 = vld [vmem:[%s590] ss:$2 sm:$0xff]
      %s592 = scalar_lea.vmem %s308, 465
      %v593 = vld [vmem:[%s592] ss:$2 sm:$0xff]
      %s594 = scalar_lea.vmem %s308, 481
      %v595 = vld [vmem:[%s594] ss:$2 sm:$0xff]
      %s596 = scalar_lea.vmem %s308, 497
      %v597 = vld [vmem:[%s596] ss:$2 sm:$0xff]
      %v598 = vmax.f32 %v471, %v535
      %v599 = vmax.f32 %v473, %v537
      %v600 = vmax.f32 %v475, %v539
      %v601 = vmax.f32 %v477, %v541
      %v602 = vmax.f32 %v479, %v543
      %v603 = vmax.f32 %v481, %v545
      %v604 = vmax.f32 %v483, %v547
      %v605 = vmax.f32 %v485, %v549
      %v606 = vmax.f32 %v487, %v551
      %v607 = vmax.f32 %v489, %v553
      %v608 = vmax.f32 %v491, %v555
      %v609 = vmax.f32 %v493, %v557
      %v610 = vmax.f32 %v495, %v559
      %v611 = vmax.f32 %v497, %v561
      %v612 = vmax.f32 %v499, %v563
      %v613 = vmax.f32 %v501, %v565
      %v614 = vmax.f32 %v503, %v567
      %v615 = vmax.f32 %v505, %v569
      %v616 = vmax.f32 %v507, %v571
      %v617 = vmax.f32 %v509, %v573
      %v618 = vmax.f32 %v511, %v575
      %v619 = vmax.f32 %v513, %v577
      %v620 = vmax.f32 %v515, %v579
      %v621 = vmax.f32 %v517, %v581
      %v622 = vmax.f32 %v519, %v583
      %v623 = vmax.f32 %v521, %v585
      %v624 = vmax.f32 %v523, %v587
      %v625 = vmax.f32 %v525, %v589
      %v626 = vmax.f32 %v527, %v591
      %v627 = vmax.f32 %v529, %v593
      %v628 = vmax.f32 %v531, %v595
      %v629 = vmax.f32 %v533, %v597
      %v630 = vmax.f32 %v598, %v600
      %v631 = vmax.f32 %v599, %v601
      %v632 = vmax.f32 %v602, %v604
      %v633 = vmax.f32 %v603, %v605
      %v634 = vmax.f32 %v606, %v608
      %v635 = vmax.f32 %v607, %v609
      %v636 = vmax.f32 %v610, %v612
      %v637 = vmax.f32 %v611, %v613
      %v638 = vmax.f32 %v614, %v616
      %v639 = vmax.f32 %v615, %v617
      %v640 = vmax.f32 %v618, %v620
      %v641 = vmax.f32 %v619, %v621
      %v642 = vmax.f32 %v622, %v624
      %v643 = vmax.f32 %v623, %v625
      %v644 = vmax.f32 %v626, %v628
      %v645 = vmax.f32 %v627, %v629
      %v646 = vld [vmem:[%s318] ss:$2 sm:$0xff]
      %s647 = scalar_lea.vmem %s318, 16
      %v648 = vld [vmem:[%s647] ss:$2 sm:$0xff]
      %s649 = scalar_lea.vmem %s318, 32
      %v650 = vld [vmem:[%s649] ss:$2 sm:$0xff]
      %s651 = scalar_lea.vmem %s318, 48
      %v652 = vld [vmem:[%s651] ss:$2 sm:$0xff]
      %s653 = scalar_lea.vmem %s318, 64
      %v654 = vld [vmem:[%s653] ss:$2 sm:$0xff]
      %s655 = scalar_lea.vmem %s318, 80
      %v656 = vld [vmem:[%s655] ss:$2 sm:$0xff]
      %s657 = scalar_lea.vmem %s318, 96
      %v658 = vld [vmem:[%s657] ss:$2 sm:$0xff]
      %s659 = scalar_lea.vmem %s318, 112
      %v660 = vld [vmem:[%s659] ss:$2 sm:$0xff]
      %s661 = scalar_lea.vmem %s318, 128
      %v662 = vld [vmem:[%s661] ss:$2 sm:$0xff]
      %s663 = scalar_lea.vmem %s318, 144
      %v664 = vld [vmem:[%s663] ss:$2 sm:$0xff]
      %s665 = scalar_lea.vmem %s318, 160
      %v666 = vld [vmem:[%s665] ss:$2 sm:$0xff]
      %s667 = scalar_lea.vmem %s318, 176
      %v668 = vld [vmem:[%s667] ss:$2 sm:$0xff]
      %s669 = scalar_lea.vmem %s318, 192
      %v670 = vld [vmem:[%s669] ss:$2 sm:$0xff]
      %s671 = scalar_lea.vmem %s318, 208
      %v672 = vld [vmem:[%s671] ss:$2 sm:$0xff]
      %s673 = scalar_lea.vmem %s318, 224
      %v674 = vld [vmem:[%s673] ss:$2 sm:$0xff]
      %s675 = scalar_lea.vmem %s318, 240
      %v676 = vld [vmem:[%s675] ss:$2 sm:$0xff]
      %s677 = scalar_lea.vmem %s318, 1
      %v678 = vld [vmem:[%s677] ss:$2 sm:$0xff]
      %s679 = scalar_lea.vmem %s318, 17
      %v680 = vld [vmem:[%s679] ss:$2 sm:$0xff]
      %s681 = scalar_lea.vmem %s318, 33
      %v682 = vld [vmem:[%s681] ss:$2 sm:$0xff]
      %s683 = scalar_lea.vmem %s318, 49
      %v684 = vld [vmem:[%s683] ss:$2 sm:$0xff]
      %s685 = scalar_lea.vmem %s318, 65
      %v686 = vld [vmem:[%s685] ss:$2 sm:$0xff]
      %s687 = scalar_lea.vmem %s318, 81
      %v688 = vld [vmem:[%s687] ss:$2 sm:$0xff]
      %s689 = scalar_lea.vmem %s318, 97
      %v690 = vld [vmem:[%s689] ss:$2 sm:$0xff]
      %s691 = scalar_lea.vmem %s318, 113
      %v692 = vld [vmem:[%s691] ss:$2 sm:$0xff]
      %s693 = scalar_lea.vmem %s318, 129
      %v694 = vld [vmem:[%s693] ss:$2 sm:$0xff]
      %s695 = scalar_lea.vmem %s318, 145
      %v696 = vld [vmem:[%s695] ss:$2 sm:$0xff]
      %s697 = scalar_lea.vmem %s318, 161
      %v698 = vld [vmem:[%s697] ss:$2 sm:$0xff]
      %s699 = scalar_lea.vmem %s318, 177
      %v700 = vld [vmem:[%s699] ss:$2 sm:$0xff]
      %s701 = scalar_lea.vmem %s318, 193
      %v702 = vld [vmem:[%s701] ss:$2 sm:$0xff]
      %s703 = scalar_lea.vmem %s318, 209
      %v704 = vld [vmem:[%s703] ss:$2 sm:$0xff]
      %s705 = scalar_lea.vmem %s318, 225
      %v706 = vld [vmem:[%s705] ss:$2 sm:$0xff]
      %s707 = scalar_lea.vmem %s318, 241
      %v708 = vld [vmem:[%s707] ss:$2 sm:$0xff]
      %v709 = vmax.f32 %v646, %v678
      %v710 = vmax.f32 %v648, %v680
      %v711 = vmax.f32 %v650, %v682
      %v712 = vmax.f32 %v652, %v684
      %v713 = vmax.f32 %v654, %v686
      %v714 = vmax.f32 %v656, %v688
      %v715 = vmax.f32 %v658, %v690
      %v716 = vmax.f32 %v660, %v692
      %v717 = vmax.f32 %v662, %v694
      %v718 = vmax.f32 %v664, %v696
      %v719 = vmax.f32 %v666, %v698
      %v720 = vmax.f32 %v668, %v700
      %v721 = vmax.f32 %v670, %v702
      %v722 = vmax.f32 %v672, %v704
      %v723 = vmax.f32 %v674, %v706
      %v724 = vmax.f32 %v676, %v708
      %v725 = vmax.f32 %v709, %v711
      %v726 = vmax.f32 %v710, %v712
      %v727 = vmax.f32 %v713, %v715
      %v728 = vmax.f32 %v714, %v716
      %v729 = vmax.f32 %v717, %v719
      %v730 = vmax.f32 %v718, %v720
      %v731 = vmax.f32 %v721, %v723
      %v732 = vmax.f32 %v722, %v724
      %v733 = vpack.c.bf16 %v726, %v725
      %v734 = vpack.c.bf16 %v728, %v727
      %v737 = vunpack.c.l.b16 %v733
      %v738 = vunpack.c.h.b16 %v733
      %v739 = vunpack.c.l.b16 %v734
      %v740 = vunpack.c.h.b16 %v734
      %v741 = vpack.c.b16 %v737, %v737
      %v742 = vpack.c.b16 %v738, %v738
      %v743 = vpack.c.b16 %v739, %v739
      %v744 = vpack.c.b16 %v740, %v740
      %vm745 = vsmask.f32 4368
      %vm746 = vmor %vm332, %vm745
      %v748 = vshrl.u32 %v741, 16
      %v750 = vrot.slane %v748, 7
      %v751 = vshll.u32 %v741, 16
      %v753 = vor.u32 %v750, %v751
      %v754 = vrot.slane %v750, 4
      %v756 = vshrl.u32 %v742, 16
      %v758 = vrot.slane %v756, 7
      %v759 = vshll.u32 %v742, 16
      %v761 = vor.u32 %v758, %v759
      %v762 = vsel %vm746, %v754, %v761
      %v763 = vrot.slane %v758, 4
      %v765 = vshrl.u32 %v743, 16
      %v767 = vrot.slane %v765, 7
      %v768 = vshll.u32 %v743, 16
      %v770 = vor.u32 %v767, %v768
      %v771 = vrot.slane %v767, 4
      %v773 = vshrl.u32 %v744, 16
      %v775 = vrot.slane %v773, 7
      %v776 = vshll.u32 %v744, 16
      %v778 = vor.u32 %v775, %v776
      %v779 = vsel %vm746, %v771, %v778
      %v780 = vrot.slane %v775, 4
      %vm787 = vcmask 27648
      %vm788 = vmand %vm787, %vm370
      %v789 = vld [vmem:[#allocation2] sm:$0xf]
      %v790 = vsel %vm788, %v753, %v789
      %791 = vst [vmem:[#allocation2] sm:$0xf] %v790
      %vm792 = vcmask 27648
      %793 = vst.msk [vmem:[#allocation2 + $0x4] sm:$0xf] %vm792, %v762
      %v794 = vld [vmem:[#allocation2 + $0x8] sm:$0x1]
      %v795 = vsel %vm333, %v763, %v794
      %796 = vst [vmem:[#allocation2 + $0x8] sm:$0x1] %v795
      %v797 = vld [vmem:[#allocation2 + $0xc] sm:$0xf]
      %v798 = vsel %vm788, %v770, %v797
      %799 = vst [vmem:[#allocation2 + $0xc] sm:$0xf] %v798
      %800 = vst.msk [vmem:[#allocation2 + $0x10] sm:$0xf] %vm792, %v779
      %v801 = vld [vmem:[#allocation2 + $0x14] sm:$0x1]
      %v802 = vsel %vm333, %v780, %v801
      %803 = vst [vmem:[#allocation2 + $0x14] sm:$0x1] %v802
      %v804 = vpack.c.bf16 %v631, %v630
      %v805 = vpack.c.bf16 %v633, %v632
      %v806 = vpack.c.bf16 %v635, %v634
      %v807 = vpack.c.bf16 %v637, %v636
      %v808 = vpack.c.bf16 %v639, %v638
      %v809 = vpack.c.bf16 %v641, %v640
      %v810 = vpack.c.bf16 %v643, %v642
      %v811 = vpack.c.bf16 %v645, %v644
      %v820 = vunpack.c.l.b16 %v804
      %v821 = vunpack.c.h.b16 %v804
      %v822 = vunpack.c.l.b16 %v805
      %v823 = vunpack.c.h.b16 %v805
      %v824 = vunpack.c.l.b16 %v806
      %v825 = vunpack.c.h.b16 %v806
      %v826 = vunpack.c.l.b16 %v807
      %v827 = vunpack.c.h.b16 %v807
      %v828 = vunpack.c.l.b16 %v808
      %v829 = vunpack.c.h.b16 %v808
      %v830 = vunpack.c.l.b16 %v809
      %v831 = vunpack.c.h.b16 %v809
      %v832 = vunpack.c.l.b16 %v810
      %v833 = vunpack.c.h.b16 %v810
      %v834 = vunpack.c.l.b16 %v811
      %v835 = vunpack.c.h.b16 %v811
      %v836 = vpack.c.b16 %v820, %v820
      %v837 = vpack.c.b16 %v821, %v821
      %v838 = vpack.c.b16 %v822, %v822
      %v839 = vpack.c.b16 %v823, %v823
      %v840 = vpack.c.b16 %v824, %v824
      %v841 = vpack.c.b16 %v825, %v825
      %v842 = vpack.c.b16 %v826, %v826
      %v843 = vpack.c.b16 %v827, %v827
      %v844 = vpack.c.b16 %v828, %v828
      %v845 = vpack.c.b16 %v829, %v829
      %v846 = vpack.c.b16 %v830, %v830
      %v847 = vpack.c.b16 %v831, %v831
      %v848 = vpack.c.b16 %v832, %v832
      %v849 = vpack.c.b16 %v833, %v833
      %v850 = vpack.c.b16 %v834, %v834
      %v851 = vpack.c.b16 %v835, %v835
      %v853 = vshrl.u32 %v836, 16
      %v855 = vrot.slane %v853, 7
      %v856 = vshll.u32 %v836, 16
      %v858 = vor.u32 %v855, %v856
      %v859 = vrot.slane %v855, 4
      %v861 = vshrl.u32 %v837, 16
      %v863 = vrot.slane %v861, 7
      %v864 = vshll.u32 %v837, 16
      %v866 = vor.u32 %v863, %v864
      %v867 = vsel %vm746, %v859, %v866
      %v868 = vrot.slane %v863, 4
      %v870 = vshrl.u32 %v838, 16
      %v872 = vrot.slane %v870, 7
      %v873 = vshll.u32 %v838, 16
      %v875 = vor.u32 %v872, %v873
      %v876 = vrot.slane %v872, 4
      %v878 = vshrl.u32 %v839, 16
      %v880 = vrot.slane %v878, 7
      %v881 = vshll.u32 %v839, 16
      %v883 = vor.u32 %v880, %v881
      %v884 = vsel %vm746, %v876, %v883
      %v885 = vrot.slane %v880, 4
      %v887 = vshrl.u32 %v840, 16
      %v889 = vrot.slane %v887, 7
      %v890 = vshll.u32 %v840, 16
      %v892 = vor.u32 %v889, %v890
      %v893 = vrot.slane %v889, 4
      %v895 = vshrl.u32 %v841, 16
      %v897 = vrot.slane %v895, 7
      %v898 = vshll.u32 %v841, 16
      %v900 = vor.u32 %v897, %v898
      %v901 = vsel %vm746, %v893, %v900
      %v902 = vrot.slane %v897, 4
      %v904 = vshrl.u32 %v842, 16
      %v906 = vrot.slane %v904, 7
      %v907 = vshll.u32 %v842, 16
      %v909 = vor.u32 %v906, %v907
      %v910 = vrot.slane %v906, 4
      %v912 = vshrl.u32 %v843, 16
      %v914 = vrot.slane %v912, 7
      %v915 = vshll.u32 %v843, 16
      %v917 = vor.u32 %v914, %v915
      %v918 = vsel %vm746, %v910, %v917
      %v919 = vrot.slane %v914, 4
      %v921 = vshrl.u32 %v844, 16
      %v923 = vrot.slane %v921, 7
      %v924 = vshll.u32 %v844, 16
      %v926 = vor.u32 %v923, %v924
      %v927 = vrot.slane %v923, 4
      %v929 = vshrl.u32 %v845, 16
      %v931 = vrot.slane %v929, 7
      %v932 = vshll.u32 %v845, 16
      %v934 = vor.u32 %v931, %v932
      %v935 = vsel %vm746, %v927, %v934
      %v936 = vrot.slane %v931, 4
      %v938 = vshrl.u32 %v846, 16
      %v940 = vrot.slane %v938, 7
      %v941 = vshll.u32 %v846, 16
      %v943 = vor.u32 %v940, %v941
      %v944 = vrot.slane %v940, 4
      %v946 = vshrl.u32 %v847, 16
      %v948 = vrot.slane %v946, 7
      %v949 = vshll.u32 %v847, 16
      %v951 = vor.u32 %v948, %v949
      %v952 = vsel %vm746, %v944, %v951
      %v953 = vrot.slane %v948, 4
      %v955 = vshrl.u32 %v848, 16
      %v957 = vrot.slane %v955, 7
      %v958 = vshll.u32 %v848, 16
      %v960 = vor.u32 %v957, %v958
      %v961 = vrot.slane %v957, 4
      %v963 = vshrl.u32 %v849, 16
      %v965 = vrot.slane %v963, 7
      %v966 = vshll.u32 %v849, 16
      %v968 = vor.u32 %v965, %v966
      %v969 = vsel %vm746, %v961, %v968
      %v970 = vrot.slane %v965, 4
      %v972 = vshrl.u32 %v850, 16
      %v974 = vrot.slane %v972, 7
      %v975 = vshll.u32 %v850, 16
      %v977 = vor.u32 %v974, %v975
      %v978 = vrot.slane %v974, 4
      %v980 = vshrl.u32 %v851, 16
      %v982 = vrot.slane %v980, 7
      %v983 = vshll.u32 %v851, 16
      %v985 = vor.u32 %v982, %v983
      %v986 = vsel %vm746, %v978, %v985
      %v987 = vrot.slane %v982, 4
      %s1012 = scalar_lea.vmem [#allocation2], 24
      %v1013 = vld [vmem:[%s1012] sm:$0xf]
      %v1014 = vsel %vm788, %v858, %v1013
      %1015 = vst [vmem:[%s1012] sm:$0xf] %v1014
      %1016 = vst.msk [vmem:[%s1012 + $0x4] sm:$0xf] %vm792, %v867
      %v1017 = vld [vmem:[%s1012 + $0x8] sm:$0x1]
      %v1018 = vsel %vm333, %v868, %v1017
      %1019 = vst [vmem:[%s1012 + $0x8] sm:$0x1] %v1018
      %v1020 = vld [vmem:[%s1012 + $0xc] sm:$0xf]
      %v1021 = vsel %vm788, %v875, %v1020
      %1022 = vst [vmem:[%s1012 + $0xc] sm:$0xf] %v1021
      %1023 = vst.msk [vmem:[%s1012 + $0x10] sm:$0xf] %vm792, %v884
      %v1024 = vld [vmem:[%s1012 + $0x14] sm:$0x1]
      %v1025 = vsel %vm333, %v885, %v1024
      %1026 = vst [vmem:[%s1012 + $0x14] sm:$0x1] %v1025
      %v1027 = vld [vmem:[%s1012 + $0x18] sm:$0xf]
      %v1028 = vsel %vm788, %v892, %v1027
      %1029 = vst [vmem:[%s1012 + $0x18] sm:$0xf] %v1028
      %1030 = vst.msk [vmem:[%s1012 + $0x1c] sm:$0xf] %vm792, %v901
      %v1031 = vld [vmem:[%s1012 + $0x20] sm:$0x1]
      %v1032 = vsel %vm333, %v902, %v1031
      %1033 = vst [vmem:[%s1012 + $0x20] sm:$0x1] %v1032
      %v1034 = vld [vmem:[%s1012 + $0x24] sm:$0xf]
      %v1035 = vsel %vm788, %v909, %v1034
      %1036 = vst [vmem:[%s1012 + $0x24] sm:$0xf] %v1035
      %1037 = vst.msk [vmem:[%s1012 + $0x28] sm:$0xf] %vm792, %v918
      %v1038 = vld [vmem:[%s1012 + $0x2c] sm:$0x1]
      %v1039 = vsel %vm333, %v919, %v1038
      %1040 = vst [vmem:[%s1012 + $0x2c] sm:$0x1] %v1039
      %v1041 = vld [vmem:[%s1012 + $0x30] sm:$0xf]
      %v1042 = vsel %vm788, %v926, %v1041
      %1043 = vst [vmem:[%s1012 + $0x30] sm:$0xf] %v1042
      %1044 = vst.msk [vmem:[%s1012 + $0x34] sm:$0xf] %vm792, %v935
      %v1045 = vld [vmem:[%s1012 + $0x38] sm:$0x1]
      %v1046 = vsel %vm333, %v936, %v1045
      %1047 = vst [vmem:[%s1012 + $0x38] sm:$0x1] %v1046
      %v1048 = vld [vmem:[%s1012 + $0x3c] sm:$0xf]
      %v1049 = vsel %vm788, %v943, %v1048
      %1050 = vst [vmem:[%s1012 + $0x3c] sm:$0xf] %v1049
      %1051 = vst.msk [vmem:[%s1012 + $0x40] sm:$0xf] %vm792, %v952
      %v1052 = vld [vmem:[%s1012 + $0x44] sm:$0x1]
      %v1053 = vsel %vm333, %v953, %v1052
      %1054 = vst [vmem:[%s1012 + $0x44] sm:$0x1] %v1053
      %v1055 = vld [vmem:[%s1012 + $0x48] sm:$0xf]
      %v1056 = vsel %vm788, %v960, %v1055
      %1057 = vst [vmem:[%s1012 + $0x48] sm:$0xf] %v1056
      %1058 = vst.msk [vmem:[%s1012 + $0x4c] sm:$0xf] %vm792, %v969
      %v1059 = vld [vmem:[%s1012 + $0x50] sm:$0x1]
      %v1060 = vsel %vm333, %v970, %v1059
      %1061 = vst [vmem:[%s1012 + $0x50] sm:$0x1] %v1060
      %v1062 = vld [vmem:[%s1012 + $0x54] sm:$0xf]
      %v1063 = vsel %vm788, %v977, %v1062
      %1064 = vst [vmem:[%s1012 + $0x54] sm:$0xf] %v1063
      %1065 = vst.msk [vmem:[%s1012 + $0x58] sm:$0xf] %vm792, %v986
      %v1066 = vld [vmem:[%s1012 + $0x5c] sm:$0x1]
      %v1067 = vsel %vm333, %v987, %v1066
      %1068 = vst [vmem:[%s1012 + $0x5c] sm:$0x1] %v1067
      %v1069 = vpack.c.bf16 %v730, %v729
      %v1070 = vpack.c.bf16 %v732, %v731
      %v1073 = vunpack.c.l.b16 %v1069
      %v1074 = vunpack.c.h.b16 %v1069
      %v1075 = vunpack.c.l.b16 %v1070
      %v1076 = vunpack.c.h.b16 %v1070
      %v1077 = vpack.c.b16 %v1073, %v1073
      %v1078 = vpack.c.b16 %v1074, %v1074
      %v1079 = vpack.c.b16 %v1075, %v1075
      %v1080 = vpack.c.b16 %v1076, %v1076
      %v1082 = vshrl.u32 %v1077, 16
      %v1084 = vrot.slane %v1082, 7
      %v1085 = vshll.u32 %v1077, 16
      %v1087 = vor.u32 %v1084, %v1085
      %v1088 = vrot.slane %v1084, 4
      %v1090 = vshrl.u32 %v1078, 16
      %v1092 = vrot.slane %v1090, 7
      %v1093 = vshll.u32 %v1078, 16
      %v1095 = vor.u32 %v1092, %v1093
      %v1096 = vsel %vm746, %v1088, %v1095
      %v1097 = vrot.slane %v1092, 4
      %v1099 = vshrl.u32 %v1079, 16
      %v1101 = vrot.slane %v1099, 7
      %v1102 = vshll.u32 %v1079, 16
      %v1104 = vor.u32 %v1101, %v1102
      %v1105 = vrot.slane %v1101, 4
      %v1107 = vshrl.u32 %v1080, 16
      %v1109 = vrot.slane %v1107, 7
      %v1110 = vshll.u32 %v1080, 16
      %v1112 = vor.u32 %v1109, %v1110
      %v1113 = vsel %vm746, %v1105, %v1112
      %v1114 = vrot.slane %v1109, 4
      %s1121 = scalar_lea.vmem [#allocation2], 120
      %v1122 = vld [vmem:[%s1121] sm:$0xf]
      %v1123 = vsel %vm788, %v1087, %v1122
      %1124 = vst [vmem:[%s1121] sm:$0xf] %v1123
      %1125 = vst.msk [vmem:[%s1121 + $0x4] sm:$0xf] %vm792, %v1096
      %v1126 = vld [vmem:[%s1121 + $0x8] sm:$0x1]
      %v1127 = vsel %vm333, %v1097, %v1126
      %1128 = vst [vmem:[%s1121 + $0x8] sm:$0x1] %v1127
      %v1129 = vld [vmem:[%s1121 + $0xc] sm:$0xf]
      %v1130 = vsel %vm788, %v1104, %v1129
      %1131 = vst [vmem:[%s1121 + $0xc] sm:$0xf] %v1130
      %1132 = vst.msk [vmem:[%s1121 + $0x10] sm:$0xf] %vm792, %v1113
      %v1133 = vld [vmem:[%s1121 + $0x14] sm:$0x1]
      %v1134 = vsel %vm333, %v1114, %v1133
      %1135 = vst [vmem:[%s1121 + $0x14] sm:$0x1] %v1134
      %v1136 = vld [vmem:[#allocation2] sm:$0xf]
      %v1137 = vld [vmem:[#allocation2 + $0x4] sm:$0xf]
      %v1138 = vld [vmem:[#allocation2 + $0xc] sm:$0xf]
      %v1139 = vld [vmem:[#allocation2 + $0x10] sm:$0xf]
      %v1140 = vld [vmem:[#allocation2 + $0x18] sm:$0xf]
      %v1141 = vld [vmem:[#allocation2 + $0x1c] sm:$0xf]
      %v1142 = vld [vmem:[#allocation2 + $0x24] sm:$0xf]
      %v1143 = vld [vmem:[#allocation2 + $0x28] sm:$0xf]
      %v1144 = vld [vmem:[#allocation2 + $0x30] sm:$0xf]
      %v1145 = vld [vmem:[#allocation2 + $0x34] sm:$0xf]
      %v1146 = vld [vmem:[#allocation2 + $0x3c] sm:$0xf]
      %v1147 = vld [vmem:[#allocation2 + $0x40] sm:$0xf]
      %v1148 = vld [vmem:[#allocation2 + $0x48] sm:$0xf]
      %v1149 = vld [vmem:[#allocation2 + $0x4c] sm:$0xf]
      %v1150 = vld [vmem:[#allocation2 + $0x54] sm:$0xf]
      %v1151 = vld [vmem:[#allocation2 + $0x58] sm:$0xf]
      %v1152 = vld [vmem:[#allocation2 + $0x60] sm:$0xf]
      %v1153 = vld [vmem:[#allocation2 + $0x64] sm:$0xf]
      %v1154 = vld [vmem:[#allocation2 + $0x6c] sm:$0xf]
      %v1155 = vld [vmem:[#allocation2 + $0x70] sm:$0xf]
      %v1156 = vld [vmem:[#allocation2 + $0x8] sm:$0x1]
      %v1157 = vld [vmem:[#allocation2 + $0x14] sm:$0x1]
      %v1158 = vld [vmem:[#allocation2 + $0x20] sm:$0x1]
      %v1159 = vld [vmem:[#allocation2 + $0x2c] sm:$0x1]
      %v1160 = vld [vmem:[#allocation2 + $0x38] sm:$0x1]
      %v1161 = vld [vmem:[#allocation2 + $0x44] sm:$0x1]
      %v1162 = vld [vmem:[#allocation2 + $0x50] sm:$0x1]
      %v1163 = vld [vmem:[#allocation2 + $0x5c] sm:$0x1]
      %v1164 = vld [vmem:[#allocation2 + $0x68] sm:$0x1]
      %v1165 = vld [vmem:[#allocation2 + $0x74] sm:$0x1]
      %vm1166 = vsmask.f32 3328
      %vm1167 = vsmask.f32 7440
      %vm1168 = vmor %vm1166, %vm1167
      %v1170 = vshrl.u32 %v1136, 16
      %v1172 = vrot.slane %v1170, 4
      %v1173 = vshll.u32 %v1136, 16
      %v1175 = vrot.slane %v1173, 5
      %v1176 = vor.u32 %v1172, %v1175
      %v1177 = vrot.slane %v1176, 4
      %v1179 = vshll.u32 %v1137, 16
      %v1181 = vrot.slane %v1179, 5
      %v1182 = vsel %vm1168, %v1177, %v1181
      %v1183 = vshrl.u32 %v1137, 16
      %v1185 = vrot.slane %v1183, 4
      %v1186 = vor.u32 %v1185, %v1181
      %v1187 = vrot.slane %v1186, 4
      %v1189 = vshll.u32 %v1156, 16
      %v1191 = vrot.slane %v1189, 5
      %v1192 = vsel %vm1168, %v1187, %v1191
      %v1194 = vshrl.u32 %v1138, 16
      %v1196 = vrot.slane %v1194, 4
      %v1197 = vshll.u32 %v1138, 16
      %v1199 = vrot.slane %v1197, 5
      %v1200 = vor.u32 %v1196, %v1199
      %v1201 = vrot.slane %v1200, 4
      %v1203 = vshll.u32 %v1139, 16
      %v1205 = vrot.slane %v1203, 5
      %v1206 = vsel %vm1168, %v1201, %v1205
      %v1207 = vshrl.u32 %v1139, 16
      %v1209 = vrot.slane %v1207, 4
      %v1210 = vor.u32 %v1209, %v1205
      %v1211 = vrot.slane %v1210, 4
      %v1213 = vshll.u32 %v1157, 16
      %v1215 = vrot.slane %v1213, 5
      %v1216 = vsel %vm1168, %v1211, %v1215
      %v1218 = vshrl.u32 %v1140, 16
      %v1220 = vrot.slane %v1218, 4
      %v1221 = vshll.u32 %v1140, 16
      %v1223 = vrot.slane %v1221, 5
      %v1224 = vor.u32 %v1220, %v1223
      %v1225 = vrot.slane %v1224, 4
      %v1227 = vshll.u32 %v1141, 16
      %v1229 = vrot.slane %v1227, 5
      %v1230 = vsel %vm1168, %v1225, %v1229
      %v1231 = vshrl.u32 %v1141, 16
      %v1233 = vrot.slane %v1231, 4
      %v1234 = vor.u32 %v1233, %v1229
      %v1235 = vrot.slane %v1234, 4
      %v1237 = vshll.u32 %v1158, 16
      %v1239 = vrot.slane %v1237, 5
      %v1240 = vsel %vm1168, %v1235, %v1239
      %v1242 = vshrl.u32 %v1142, 16
      %v1244 = vrot.slane %v1242, 4
      %v1245 = vshll.u32 %v1142, 16
      %v1247 = vrot.slane %v1245, 5
      %v1248 = vor.u32 %v1244, %v1247
      %v1249 = vrot.slane %v1248, 4
      %v1251 = vshll.u32 %v1143, 16
      %v1253 = vrot.slane %v1251, 5
      %v1254 = vsel %vm1168, %v1249, %v1253
      %v1255 = vshrl.u32 %v1143, 16
      %v1257 = vrot.slane %v1255, 4
      %v1258 = vor.u32 %v1257, %v1253
      %v1259 = vrot.slane %v1258, 4
      %v1261 = vshll.u32 %v1159, 16
      %v1263 = vrot.slane %v1261, 5
      %v1264 = vsel %vm1168, %v1259, %v1263
      %v1266 = vshrl.u32 %v1144, 16
      %v1268 = vrot.slane %v1266, 4
      %v1269 = vshll.u32 %v1144, 16
      %v1271 = vrot.slane %v1269, 5
      %v1272 = vor.u32 %v1268, %v1271
      %v1273 = vrot.slane %v1272, 4
      %v1275 = vshll.u32 %v1145, 16
      %v1277 = vrot.slane %v1275, 5
      %v1278 = vsel %vm1168, %v1273, %v1277
      %v1279 = vshrl.u32 %v1145, 16
      %v1281 = vrot.slane %v1279, 4
      %v1282 = vor.u32 %v1281, %v1277
      %v1283 = vrot.slane %v1282, 4
      %v1285 = vshll.u32 %v1160, 16
      %v1287 = vrot.slane %v1285, 5
      %v1288 = vsel %vm1168, %v1283, %v1287
      %v1290 = vshrl.u32 %v1146, 16
      %v1292 = vrot.slane %v1290, 4
      %v1293 = vshll.u32 %v1146, 16
      %v1295 = vrot.slane %v1293, 5
      %v1296 = vor.u32 %v1292, %v1295
      %v1297 = vrot.slane %v1296, 4
      %v1299 = vshll.u32 %v1147, 16
      %v1301 = vrot.slane %v1299, 5
      %v1302 = vsel %vm1168, %v1297, %v1301
      %v1303 = vshrl.u32 %v1147, 16
      %v1305 = vrot.slane %v1303, 4
      %v1306 = vor.u32 %v1305, %v1301
      %v1307 = vrot.slane %v1306, 4
      %v1309 = vshll.u32 %v1161, 16
      %v1311 = vrot.slane %v1309, 5
      %v1312 = vsel %vm1168, %v1307, %v1311
      %v1314 = vshrl.u32 %v1148, 16
      %v1316 = vrot.slane %v1314, 4
      %v1317 = vshll.u32 %v1148, 16
      %v1319 = vrot.slane %v1317, 5
      %v1320 = vor.u32 %v1316, %v1319
      %v1321 = vrot.slane %v1320, 4
      %v1323 = vshll.u32 %v1149, 16
      %v1325 = vrot.slane %v1323, 5
      %v1326 = vsel %vm1168, %v1321, %v1325
      %v1327 = vshrl.u32 %v1149, 16
      %v1329 = vrot.slane %v1327, 4
      %v1330 = vor.u32 %v1329, %v1325
      %v1331 = vrot.slane %v1330, 4
      %v1333 = vshll.u32 %v1162, 16
      %v1335 = vrot.slane %v1333, 5
      %v1336 = vsel %vm1168, %v1331, %v1335
      %v1338 = vshrl.u32 %v1150, 16
      %v1340 = vrot.slane %v1338, 4
      %v1341 = vshll.u32 %v1150, 16
      %v1343 = vrot.slane %v1341, 5
      %v1344 = vor.u32 %v1340, %v1343
      %v1345 = vrot.slane %v1344, 4
      %v1347 = vshll.u32 %v1151, 16
      %v1349 = vrot.slane %v1347, 5
      %v1350 = vsel %vm1168, %v1345, %v1349
      %v1351 = vshrl.u32 %v1151, 16
      %v1353 = vrot.slane %v1351, 4
      %v1354 = vor.u32 %v1353, %v1349
      %v1355 = vrot.slane %v1354, 4
      %v1357 = vshll.u32 %v1163, 16
      %v1359 = vrot.slane %v1357, 5
      %v1360 = vsel %vm1168, %v1355, %v1359
      %v1362 = vshrl.u32 %v1152, 16
      %v1364 = vrot.slane %v1362, 4
      %v1365 = vshll.u32 %v1152, 16
      %v1367 = vrot.slane %v1365, 5
      %v1368 = vor.u32 %v1364, %v1367
      %v1369 = vrot.slane %v1368, 4
      %v1371 = vshll.u32 %v1153, 16
      %v1373 = vrot.slane %v1371, 5
      %v1374 = vsel %vm1168, %v1369, %v1373
      %v1375 = vshrl.u32 %v1153, 16
      %v1377 = vrot.slane %v1375, 4
      %v1378 = vor.u32 %v1377, %v1373
      %v1379 = vrot.slane %v1378, 4
      %v1381 = vshll.u32 %v1164, 16
      %v1383 = vrot.slane %v1381, 5
      %v1384 = vsel %vm1168, %v1379, %v1383
      %v1386 = vshrl.u32 %v1154, 16
      %v1388 = vrot.slane %v1386, 4
      %v1389 = vshll.u32 %v1154, 16
      %v1391 = vrot.slane %v1389, 5
      %v1392 = vor.u32 %v1388, %v1391
      %v1393 = vrot.slane %v1392, 4
      %v1395 = vshll.u32 %v1155, 16
      %v1397 = vrot.slane %v1395, 5
      %v1398 = vsel %vm1168, %v1393, %v1397
      %v1399 = vshrl.u32 %v1155, 16
      %v1401 = vrot.slane %v1399, 4
      %v1402 = vor.u32 %v1401, %v1397
      %v1403 = vrot.slane %v1402, 4
      %v1405 = vshll.u32 %v1165, 16
      %v1407 = vrot.slane %v1405, 5
      %v1408 = vsel %vm1168, %v1403, %v1407
      %v1409 = vld [vmem:[#allocation2] sm:$0xe]
      %v1410 = vld [vmem:[#allocation2 + $0xc] sm:$0xe]
      %v1411 = vld [vmem:[#allocation2 + $0x18] sm:$0xe]
      %v1412 = vld [vmem:[#allocation2 + $0x24] sm:$0xe]
      %v1413 = vld [vmem:[#allocation2 + $0x30] sm:$0xe]
      %v1414 = vld [vmem:[#allocation2 + $0x3c] sm:$0xe]
      %v1415 = vld [vmem:[#allocation2 + $0x48] sm:$0xe]
      %v1416 = vld [vmem:[#allocation2 + $0x54] sm:$0xe]
      %v1417 = vld [vmem:[#allocation2 + $0x60] sm:$0xe]
      %v1418 = vld [vmem:[#allocation2 + $0x6c] sm:$0xe]
      %vm1449 = vcmask 1042432
      %vm1450 = vcmask 1046532
      %vm1451 = vmor %vm1449, %vm1450
      %v1452 = vrot.slane %v1409, 5
      %v1453 = vrot.slane %v1452, 4
      %v1454 = vrot.slane %v1137, 5
      %v1455 = vsel %vm1451, %v1453, %v1454
      %v1456 = vrot.slane %v1454, 4
      %v1457 = vrot.slane %v1156, 5
      %v1458 = vsel %vm1451, %v1456, %v1457
      %v1459 = vrot.slane %v1410, 5
      %v1460 = vrot.slane %v1459, 4
      %v1461 = vrot.slane %v1139, 5
      %v1462 = vsel %vm1451, %v1460, %v1461
      %v1463 = vrot.slane %v1461, 4
      %v1464 = vrot.slane %v1157, 5
      %v1465 = vsel %vm1451, %v1463, %v1464
      %v1466 = vrot.slane %v1411, 5
      %v1467 = vrot.slane %v1466, 4
      %v1468 = vrot.slane %v1141, 5
      %v1469 = vsel %vm1451, %v1467, %v1468
      %v1470 = vrot.slane %v1468, 4
      %v1471 = vrot.slane %v1158, 5
      %v1472 = vsel %vm1451, %v1470, %v1471
      %v1473 = vrot.slane %v1412, 5
      %v1474 = vrot.slane %v1473, 4
      %v1475 = vrot.slane %v1143, 5
      %v1476 = vsel %vm1451, %v1474, %v1475
      %v1477 = vrot.slane %v1475, 4
      %v1478 = vrot.slane %v1159, 5
      %v1479 = vsel %vm1451, %v1477, %v1478
      %v1480 = vrot.slane %v1413, 5
      %v1481 = vrot.slane %v1480, 4
      %v1482 = vrot.slane %v1145, 5
      %v1483 = vsel %vm1451, %v1481, %v1482
      %v1484 = vrot.slane %v1482, 4
      %v1485 = vrot.slane %v1160, 5
      %v1486 = vsel %vm1451, %v1484, %v1485
      %v1487 = vrot.slane %v1414, 5
      %v1488 = vrot.slane %v1487, 4
      %v1489 = vrot.slane %v1147, 5
      %v1490 = vsel %vm1451, %v1488, %v1489
      %v1491 = vrot.slane %v1489, 4
      %v1492 = vrot.slane %v1161, 5
      %v1493 = vsel %vm1451, %v1491, %v1492
      %v1494 = vrot.slane %v1415, 5
      %v1495 = vrot.slane %v1494, 4
      %v1496 = vrot.slane %v1149, 5
      %v1497 = vsel %vm1451, %v1495, %v1496
      %v1498 = vrot.slane %v1496, 4
      %v1499 = vrot.slane %v1162, 5
      %v1500 = vsel %vm1451, %v1498, %v1499
      %v1501 = vrot.slane %v1416, 5
      %v1502 = vrot.slane %v1501, 4
      %v1503 = vrot.slane %v1151, 5
      %v1504 = vsel %vm1451, %v1502, %v1503
      %v1505 = vrot.slane %v1503, 4
      %v1506 = vrot.slane %v1163, 5
      %v1507 = vsel %vm1451, %v1505, %v1506
      %v1508 = vrot.slane %v1417, 5
      %v1509 = vrot.slane %v1508, 4
      %v1510 = vrot.slane %v1153, 5
      %v1511 = vsel %vm1451, %v1509, %v1510
      %v1512 = vrot.slane %v1510, 4
      %v1513 = vrot.slane %v1164, 5
      %v1514 = vsel %vm1451, %v1512, %v1513
      %v1515 = vrot.slane %v1418, 5
      %v1516 = vrot.slane %v1515, 4
      %v1517 = vrot.slane %v1155, 5
      %v1518 = vsel %vm1451, %v1516, %v1517
      %v1519 = vrot.slane %v1517, 4
      %v1520 = vrot.slane %v1165, 5
      %v1521 = vsel %vm1451, %v1519, %v1520
      %s1522 = scalar_lea.vmem [#allocation2], 12
      %v1523 = vld [vmem:[%s1522] sm:$0xf]
      %v1524 = vld [vmem:[%s1522 + $0x4] sm:$0xf]
      %v1525 = vld [vmem:[%s1522 + $0xc] sm:$0xf]
      %v1526 = vld [vmem:[%s1522 + $0x10] sm:$0xf]
      %v1527 = vld [vmem:[%s1522 + $0x18] sm:$0xf]
      %v1528 = vld [vmem:[%s1522 + $0x1c] sm:$0xf]
      %v1529 = vld [vmem:[%s1522 + $0x24] sm:$0xf]
      %v1530 = vld [vmem:[%s1522 + $0x28] sm:$0xf]
      %v1531 = vld [vmem:[%s1522 + $0x30] sm:$0xf]
      %v1532 = vld [vmem:[%s1522 + $0x34] sm:$0xf]
      %v1533 = vld [vmem:[%s1522 + $0x3c] sm:$0xf]
      %v1534 = vld [vmem:[%s1522 + $0x40] sm:$0xf]
      %v1535 = vld [vmem:[%s1522 + $0x48] sm:$0xf]
      %v1536 = vld [vmem:[%s1522 + $0x4c] sm:$0xf]
      %v1537 = vld [vmem:[%s1522 + $0x54] sm:$0xf]
      %v1538 = vld [vmem:[%s1522 + $0x58] sm:$0xf]
      %v1539 = vld [vmem:[%s1522 + $0x60] sm:$0xf]
      %v1540 = vld [vmem:[%s1522 + $0x64] sm:$0xf]
      %v1541 = vld [vmem:[%s1522 + $0x6c] sm:$0xf]
      %v1542 = vld [vmem:[%s1522 + $0x70] sm:$0xf]
      %v1543 = vld [vmem:[%s1522 + $0x8] sm:$0x1]
      %v1544 = vld [vmem:[%s1522 + $0x14] sm:$0x1]
      %v1545 = vld [vmem:[%s1522 + $0x20] sm:$0x1]
      %v1546 = vld [vmem:[%s1522 + $0x2c] sm:$0x1]
      %v1547 = vld [vmem:[%s1522 + $0x38] sm:$0x1]
      %v1548 = vld [vmem:[%s1522 + $0x44] sm:$0x1]
      %v1549 = vld [vmem:[%s1522 + $0x50] sm:$0x1]
      %v1550 = vld [vmem:[%s1522 + $0x5c] sm:$0x1]
      %v1551 = vld [vmem:[%s1522 + $0x68] sm:$0x1]
      %v1552 = vld [vmem:[%s1522 + $0x74] sm:$0x1]
      %v1554 = vshrl.u32 %v1523, 16
      %v1556 = vrot.slane %v1554, 4
      %v1557 = vshll.u32 %v1523, 16
      %v1559 = vrot.slane %v1557, 5
      %v1560 = vor.u32 %v1556, %v1559
      %v1561 = vrot.slane %v1560, 4
      %v1563 = vshll.u32 %v1524, 16
      %v1565 = vrot.slane %v1563, 5
      %v1566 = vsel %vm1168, %v1561, %v1565
      %v1567 = vshrl.u32 %v1524, 16
      %v1569 = vrot.slane %v1567, 4
      %v1570 = vor.u32 %v1569, %v1565
      %v1571 = vrot.slane %v1570, 4
      %v1573 = vshll.u32 %v1543, 16
      %v1575 = vrot.slane %v1573, 5
      %v1576 = vsel %vm1168, %v1571, %v1575
      %v1578 = vshrl.u32 %v1525, 16
      %v1580 = vrot.slane %v1578, 4
      %v1581 = vshll.u32 %v1525, 16
      %v1583 = vrot.slane %v1581, 5
      %v1584 = vor.u32 %v1580, %v1583
      %v1585 = vrot.slane %v1584, 4
      %v1587 = vshll.u32 %v1526, 16
      %v1589 = vrot.slane %v1587, 5
      %v1590 = vsel %vm1168, %v1585, %v1589
      %v1591 = vshrl.u32 %v1526, 16
      %v1593 = vrot.slane %v1591, 4
      %v1594 = vor.u32 %v1593, %v1589
      %v1595 = vrot.slane %v1594, 4
      %v1597 = vshll.u32 %v1544, 16
      %v1599 = vrot.slane %v1597, 5
      %v1600 = vsel %vm1168, %v1595, %v1599
      %v1602 = vshrl.u32 %v1527, 16
      %v1604 = vrot.slane %v1602, 4
      %v1605 = vshll.u32 %v1527, 16
      %v1607 = vrot.slane %v1605, 5
      %v1608 = vor.u32 %v1604, %v1607
      %v1609 = vrot.slane %v1608, 4
      %v1611 = vshll.u32 %v1528, 16
      %v1613 = vrot.slane %v1611, 5
      %v1614 = vsel %vm1168, %v1609, %v1613
      %v1615 = vshrl.u32 %v1528, 16
      %v1617 = vrot.slane %v1615, 4
      %v1618 = vor.u32 %v1617, %v1613
      %v1619 = vrot.slane %v1618, 4
      %v1621 = vshll.u32 %v1545, 16
      %v1623 = vrot.slane %v1621, 5
      %v1624 = vsel %vm1168, %v1619, %v1623
      %v1626 = vshrl.u32 %v1529, 16
      %v1628 = vrot.slane %v1626, 4
      %v1629 = vshll.u32 %v1529, 16
      %v1631 = vrot.slane %v1629, 5
      %v1632 = vor.u32 %v1628, %v1631
      %v1633 = vrot.slane %v1632, 4
      %v1635 = vshll.u32 %v1530, 16
      %v1637 = vrot.slane %v1635, 5
      %v1638 = vsel %vm1168, %v1633, %v1637
      %v1639 = vshrl.u32 %v1530, 16
      %v1641 = vrot.slane %v1639, 4
      %v1642 = vor.u32 %v1641, %v1637
      %v1643 = vrot.slane %v1642, 4
      %v1645 = vshll.u32 %v1546, 16
      %v1647 = vrot.slane %v1645, 5
      %v1648 = vsel %vm1168, %v1643, %v1647
      %v1650 = vshrl.u32 %v1531, 16
      %v1652 = vrot.slane %v1650, 4
      %v1653 = vshll.u32 %v1531, 16
      %v1655 = vrot.slane %v1653, 5
      %v1656 = vor.u32 %v1652, %v1655
      %v1657 = vrot.slane %v1656, 4
      %v1659 = vshll.u32 %v1532, 16
      %v1661 = vrot.slane %v1659, 5
      %v1662 = vsel %vm1168, %v1657, %v1661
      %v1663 = vshrl.u32 %v1532, 16
      %v1665 = vrot.slane %v1663, 4
      %v1666 = vor.u32 %v1665, %v1661
      %v1667 = vrot.slane %v1666, 4
      %v1669 = vshll.u32 %v1547, 16
      %v1671 = vrot.slane %v1669, 5
      %v1672 = vsel %vm1168, %v1667, %v1671
      %v1674 = vshrl.u32 %v1533, 16
      %v1676 = vrot.slane %v1674, 4
      %v1677 = vshll.u32 %v1533, 16
      %v1679 = vrot.slane %v1677, 5
      %v1680 = vor.u32 %v1676, %v1679
      %v1681 = vrot.slane %v1680, 4
      %v1683 = vshll.u32 %v1534, 16
      %v1685 = vrot.slane %v1683, 5
      %v1686 = vsel %vm1168, %v1681, %v1685
      %v1687 = vshrl.u32 %v1534, 16
      %v1689 = vrot.slane %v1687, 4
      %v1690 = vor.u32 %v1689, %v1685
      %v1691 = vrot.slane %v1690, 4
      %v1693 = vshll.u32 %v1548, 16
      %v1695 = vrot.slane %v1693, 5
      %v1696 = vsel %vm1168, %v1691, %v1695
      %v1698 = vshrl.u32 %v1535, 16
      %v1700 = vrot.slane %v1698, 4
      %v1701 = vshll.u32 %v1535, 16
      %v1703 = vrot.slane %v1701, 5
      %v1704 = vor.u32 %v1700, %v1703
      %v1705 = vrot.slane %v1704, 4
      %v1707 = vshll.u32 %v1536, 16
      %v1709 = vrot.slane %v1707, 5
      %v1710 = vsel %vm1168, %v1705, %v1709
      %v1711 = vshrl.u32 %v1536, 16
      %v1713 = vrot.slane %v1711, 4
      %v1714 = vor.u32 %v1713, %v1709
      %v1715 = vrot.slane %v1714, 4
      %v1717 = vshll.u32 %v1549, 16
      %v1719 = vrot.slane %v1717, 5
      %v1720 = vsel %vm1168, %v1715, %v1719
      %v1722 = vshrl.u32 %v1537, 16
      %v1724 = vrot.slane %v1722, 4
      %v1725 = vshll.u32 %v1537, 16
      %v1727 = vrot.slane %v1725, 5
      %v1728 = vor.u32 %v1724, %v1727
      %v1729 = vrot.slane %v1728, 4
      %v1731 = vshll.u32 %v1538, 16
      %v1733 = vrot.slane %v1731, 5
      %v1734 = vsel %vm1168, %v1729, %v1733
      %v1735 = vshrl.u32 %v1538, 16
      %v1737 = vrot.slane %v1735, 4
      %v1738 = vor.u32 %v1737, %v1733
      %v1739 = vrot.slane %v1738, 4
      %v1741 = vshll.u32 %v1550, 16
      %v1743 = vrot.slane %v1741, 5
      %v1744 = vsel %vm1168, %v1739, %v1743
      %v1746 = vshrl.u32 %v1539, 16
      %v1748 = vrot.slane %v1746, 4
      %v1749 = vshll.u32 %v1539, 16
      %v1751 = vrot.slane %v1749, 5
      %v1752 = vor.u32 %v1748, %v1751
      %v1753 = vrot.slane %v1752, 4
      %v1755 = vshll.u32 %v1540, 16
      %v1757 = vrot.slane %v1755, 5
      %v1758 = vsel %vm1168, %v1753, %v1757
      %v1759 = vshrl.u32 %v1540, 16
      %v1761 = vrot.slane %v1759, 4
      %v1762 = vor.u32 %v1761, %v1757
      %v1763 = vrot.slane %v1762, 4
      %v1765 = vshll.u32 %v1551, 16
      %v1767 = vrot.slane %v1765, 5
      %v1768 = vsel %vm1168, %v1763, %v1767
      %v1770 = vshrl.u32 %v1541, 16
      %v1772 = vrot.slane %v1770, 4
      %v1773 = vshll.u32 %v1541, 16
      %v1775 = vrot.slane %v1773, 5
      %v1776 = vor.u32 %v1772, %v1775
      %v1777 = vrot.slane %v1776, 4
      %v1779 = vshll.u32 %v1542, 16
      %v1781 = vrot.slane %v1779, 5
      %v1782 = vsel %vm1168, %v1777, %v1781
      %v1783 = vshrl.u32 %v1542, 16
      %v1785 = vrot.slane %v1783, 4
      %v1786 = vor.u32 %v1785, %v1781
      %v1787 = vrot.slane %v1786, 4
      %v1789 = vshll.u32 %v1552, 16
      %v1791 = vrot.slane %v1789, 5
      %v1792 = vsel %vm1168, %v1787, %v1791
      %v1793 = vld [vmem:[%s1522] sm:$0xe]
      %v1794 = vld [vmem:[%s1522 + $0xc] sm:$0xe]
      %v1795 = vld [vmem:[%s1522 + $0x18] sm:$0xe]
      %v1796 = vld [vmem:[%s1522 + $0x24] sm:$0xe]
      %v1797 = vld [vmem:[%s1522 + $0x30] sm:$0xe]
      %v1798 = vld [vmem:[%s1522 + $0x3c] sm:$0xe]
      %v1799 = vld [vmem:[%s1522 + $0x48] sm:$0xe]
      %v1800 = vld [vmem:[%s1522 + $0x54] sm:$0xe]
      %v1801 = vld [vmem:[%s1522 + $0x60] sm:$0xe]
      %v1802 = vld [vmem:[%s1522 + $0x6c] sm:$0xe]
      %v1833 = vrot.slane %v1793, 5
      %v1834 = vrot.slane %v1833, 4
      %v1835 = vrot.slane %v1524, 5
      %v1836 = vsel %vm1451, %v1834, %v1835
      %v1837 = vrot.slane %v1835, 4
      %v1838 = vrot.slane %v1543, 5
      %v1839 = vsel %vm1451, %v1837, %v1838
      %v1840 = vrot.slane %v1794, 5
      %v1841 = vrot.slane %v1840, 4
      %v1842 = vrot.slane %v1526, 5
      %v1843 = vsel %vm1451, %v1841, %v1842
      %v1844 = vrot.slane %v1842, 4
      %v1845 = vrot.slane %v1544, 5
      %v1846 = vsel %vm1451, %v1844, %v1845
      %v1847 = vrot.slane %v1795, 5
      %v1848 = vrot.slane %v1847, 4
      %v1849 = vrot.slane %v1528, 5
      %v1850 = vsel %vm1451, %v1848, %v1849
      %v1851 = vrot.slane %v1849, 4
      %v1852 = vrot.slane %v1545, 5
      %v1853 = vsel %vm1451, %v1851, %v1852
      %v1854 = vrot.slane %v1796, 5
      %v1855 = vrot.slane %v1854, 4
      %v1856 = vrot.slane %v1530, 5
      %v1857 = vsel %vm1451, %v1855, %v1856
      %v1858 = vrot.slane %v1856, 4
      %v1859 = vrot.slane %v1546, 5
      %v1860 = vsel %vm1451, %v1858, %v1859
      %v1861 = vrot.slane %v1797, 5
      %v1862 = vrot.slane %v1861, 4
      %v1863 = vrot.slane %v1532, 5
      %v1864 = vsel %vm1451, %v1862, %v1863
      %v1865 = vrot.slane %v1863, 4
      %v1866 = vrot.slane %v1547, 5
      %v1867 = vsel %vm1451, %v1865, %v1866
      %v1868 = vrot.slane %v1798, 5
      %v1869 = vrot.slane %v1868, 4
      %v1870 = vrot.slane %v1534, 5
      %v1871 = vsel %vm1451, %v1869, %v1870
      %v1872 = vrot.slane %v1870, 4
      %v1873 = vrot.slane %v1548, 5
      %v1874 = vsel %vm1451, %v1872, %v1873
      %v1875 = vrot.slane %v1799, 5
      %v1876 = vrot.slane %v1875, 4
      %v1877 = vrot.slane %v1536, 5
      %v1878 = vsel %vm1451, %v1876, %v1877
      %v1879 = vrot.slane %v1877, 4
      %v1880 = vrot.slane %v1549, 5
      %v1881 = vsel %vm1451, %v1879, %v1880
      %v1882 = vrot.slane %v1800, 5
      %v1883 = vrot.slane %v1882, 4
      %v1884 = vrot.slane %v1538, 5
      %v1885 = vsel %vm1451, %v1883, %v1884
      %v1886 = vrot.slane %v1884, 4
      %v1887 = vrot.slane %v1550, 5
      %v1888 = vsel %vm1451, %v1886, %v1887
      %v1889 = vrot.slane %v1801, 5
      %v1890 = vrot.slane %v1889, 4
      %v1891 = vrot.slane %v1540, 5
      %v1892 = vsel %vm1451, %v1890, %v1891
      %v1893 = vrot.slane %v1891, 4
      %v1894 = vrot.slane %v1551, 5
      %v1895 = vsel %vm1451, %v1893, %v1894
      %v1896 = vrot.slane %v1802, 5
      %v1897 = vrot.slane %v1896, 4
      %v1898 = vrot.slane %v1542, 5
      %v1899 = vsel %vm1451, %v1897, %v1898
      %v1900 = vrot.slane %v1898, 4
      %v1901 = vrot.slane %v1552, 5
      %v1902 = vsel %vm1451, %v1900, %v1901
      %v1903 = vld [vmem:[%s1012] sm:$0xf]
      %v1904 = vld [vmem:[%s1012 + $0x4] sm:$0xf]
      %v1905 = vld [vmem:[%s1012 + $0xc] sm:$0xf]
      %v1906 = vld [vmem:[%s1012 + $0x10] sm:$0xf]
      %v1907 = vld [vmem:[%s1012 + $0x18] sm:$0xf]
      %v1908 = vld [vmem:[%s1012 + $0x1c] sm:$0xf]
      %v1909 = vld [vmem:[%s1012 + $0x24] sm:$0xf]
      %v1910 = vld [vmem:[%s1012 + $0x28] sm:$0xf]
      %v1911 = vld [vmem:[%s1012 + $0x30] sm:$0xf]
      %v1912 = vld [vmem:[%s1012 + $0x34] sm:$0xf]
      %v1913 = vld [vmem:[%s1012 + $0x3c] sm:$0xf]
      %v1914 = vld [vmem:[%s1012 + $0x40] sm:$0xf]
      %v1915 = vld [vmem:[%s1012 + $0x48] sm:$0xf]
      %v1916 = vld [vmem:[%s1012 + $0x4c] sm:$0xf]
      %v1917 = vld [vmem:[%s1012 + $0x54] sm:$0xf]
      %v1918 = vld [vmem:[%s1012 + $0x58] sm:$0xf]
      %v1919 = vld [vmem:[%s1012 + $0x60] sm:$0xf]
      %v1920 = vld [vmem:[%s1012 + $0x64] sm:$0xf]
      %v1921 = vld [vmem:[%s1012 + $0x6c] sm:$0xf]
      %v1922 = vld [vmem:[%s1012 + $0x70] sm:$0xf]
      %v1923 = vld [vmem:[%s1012 + $0x8] sm:$0x1]
      %v1924 = vld [vmem:[%s1012 + $0x14] sm:$0x1]
      %v1925 = vld [vmem:[%s1012 + $0x20] sm:$0x1]
      %v1926 = vld [vmem:[%s1012 + $0x2c] sm:$0x1]
      %v1927 = vld [vmem:[%s1012 + $0x38] sm:$0x1]
      %v1928 = vld [vmem:[%s1012 + $0x44] sm:$0x1]
      %v1929 = vld [vmem:[%s1012 + $0x50] sm:$0x1]
      %v1930 = vld [vmem:[%s1012 + $0x5c] sm:$0x1]
      %v1931 = vld [vmem:[%s1012 + $0x68] sm:$0x1]
      %v1932 = vld [vmem:[%s1012 + $0x74] sm:$0x1]
      %v1934 = vshrl.u32 %v1903, 16
      %v1936 = vrot.slane %v1934, 4
      %v1937 = vshll.u32 %v1903, 16
      %v1939 = vrot.slane %v1937, 5
      %v1940 = vor.u32 %v1936, %v1939
      %v1941 = vrot.slane %v1940, 4
      %v1943 = vshll.u32 %v1904, 16
      %v1945 = vrot.slane %v1943, 5
      %v1946 = vsel %vm1168, %v1941, %v1945
      %v1947 = vshrl.u32 %v1904, 16
      %v1949 = vrot.slane %v1947, 4
      %v1950 = vor.u32 %v1949, %v1945
      %v1951 = vrot.slane %v1950, 4
      %v1953 = vshll.u32 %v1923, 16
      %v1955 = vrot.slane %v1953, 5
      %v1956 = vsel %vm1168, %v1951, %v1955
      %v1958 = vshrl.u32 %v1905, 16
      %v1960 = vrot.slane %v1958, 4
      %v1961 = vshll.u32 %v1905, 16
      %v1963 = vrot.slane %v1961, 5
      %v1964 = vor.u32 %v1960, %v1963
      %v1965 = vrot.slane %v1964, 4
      %v1967 = vshll.u32 %v1906, 16
      %v1969 = vrot.slane %v1967, 5
      %v1970 = vsel %vm1168, %v1965, %v1969
      %v1971 = vshrl.u32 %v1906, 16
      %v1973 = vrot.slane %v1971, 4
      %v1974 = vor.u32 %v1973, %v1969
      %v1975 = vrot.slane %v1974, 4
      %v1977 = vshll.u32 %v1924, 16
      %v1979 = vrot.slane %v1977, 5
      %v1980 = vsel %vm1168, %v1975, %v1979
      %v1982 = vshrl.u32 %v1907, 16
      %v1984 = vrot.slane %v1982, 4
      %v1985 = vshll.u32 %v1907, 16
      %v1987 = vrot.slane %v1985, 5
      %v1988 = vor.u32 %v1984, %v1987
      %v1989 = vrot.slane %v1988, 4
      %v1991 = vshll.u32 %v1908, 16
      %v1993 = vrot.slane %v1991, 5
      %v1994 = vsel %vm1168, %v1989, %v1993
      %v1995 = vshrl.u32 %v1908, 16
      %v1997 = vrot.slane %v1995, 4
      %v1998 = vor.u32 %v1997, %v1993
      %v1999 = vrot.slane %v1998, 4
      %v2001 = vshll.u32 %v1925, 16
      %v2003 = vrot.slane %v2001, 5
      %v2004 = vsel %vm1168, %v1999, %v2003
      %v2006 = vshrl.u32 %v1909, 16
      %v2008 = vrot.slane %v2006, 4
      %v2009 = vshll.u32 %v1909, 16
      %v2011 = vrot.slane %v2009, 5
      %v2012 = vor.u32 %v2008, %v2011
      %v2013 = vrot.slane %v2012, 4
      %v2015 = vshll.u32 %v1910, 16
      %v2017 = vrot.slane %v2015, 5
      %v2018 = vsel %vm1168, %v2013, %v2017
      %v2019 = vshrl.u32 %v1910, 16
      %v2021 = vrot.slane %v2019, 4
      %v2022 = vor.u32 %v2021, %v2017
      %v2023 = vrot.slane %v2022, 4
      %v2025 = vshll.u32 %v1926, 16
      %v2027 = vrot.slane %v2025, 5
      %v2028 = vsel %vm1168, %v2023, %v2027
      %v2030 = vshrl.u32 %v1911, 16
      %v2032 = vrot.slane %v2030, 4
      %v2033 = vshll.u32 %v1911, 16
      %v2035 = vrot.slane %v2033, 5
      %v2036 = vor.u32 %v2032, %v2035
      %v2037 = vrot.slane %v2036, 4
      %v2039 = vshll.u32 %v1912, 16
      %v2041 = vrot.slane %v2039, 5
      %v2042 = vsel %vm1168, %v2037, %v2041
      %v2043 = vshrl.u32 %v1912, 16
      %v2045 = vrot.slane %v2043, 4
      %v2046 = vor.u32 %v2045, %v2041
      %v2047 = vrot.slane %v2046, 4
      %v2049 = vshll.u32 %v1927, 16
      %v2051 = vrot.slane %v2049, 5
      %v2052 = vsel %vm1168, %v2047, %v2051
      %v2054 = vshrl.u32 %v1913, 16
      %v2056 = vrot.slane %v2054, 4
      %v2057 = vshll.u32 %v1913, 16
      %v2059 = vrot.slane %v2057, 5
      %v2060 = vor.u32 %v2056, %v2059
      %v2061 = vrot.slane %v2060, 4
      %v2063 = vshll.u32 %v1914, 16
      %v2065 = vrot.slane %v2063, 5
      %v2066 = vsel %vm1168, %v2061, %v2065
      %v2067 = vshrl.u32 %v1914, 16
      %v2069 = vrot.slane %v2067, 4
      %v2070 = vor.u32 %v2069, %v2065
      %v2071 = vrot.slane %v2070, 4
      %v2073 = vshll.u32 %v1928, 16
      %v2075 = vrot.slane %v2073, 5
      %v2076 = vsel %vm1168, %v2071, %v2075
      %v2078 = vshrl.u32 %v1915, 16
      %v2080 = vrot.slane %v2078, 4
      %v2081 = vshll.u32 %v1915, 16
      %v2083 = vrot.slane %v2081, 5
      %v2084 = vor.u32 %v2080, %v2083
      %v2085 = vrot.slane %v2084, 4
      %v2087 = vshll.u32 %v1916, 16
      %v2089 = vrot.slane %v2087, 5
      %v2090 = vsel %vm1168, %v2085, %v2089
      %v2091 = vshrl.u32 %v1916, 16
      %v2093 = vrot.slane %v2091, 4
      %v2094 = vor.u32 %v2093, %v2089
      %v2095 = vrot.slane %v2094, 4
      %v2097 = vshll.u32 %v1929, 16
      %v2099 = vrot.slane %v2097, 5
      %v2100 = vsel %vm1168, %v2095, %v2099
      %v2102 = vshrl.u32 %v1917, 16
      %v2104 = vrot.slane %v2102, 4
      %v2105 = vshll.u32 %v1917, 16
      %v2107 = vrot.slane %v2105, 5
      %v2108 = vor.u32 %v2104, %v2107
      %v2109 = vrot.slane %v2108, 4
      %v2111 = vshll.u32 %v1918, 16
      %v2113 = vrot.slane %v2111, 5
      %v2114 = vsel %vm1168, %v2109, %v2113
      %v2115 = vshrl.u32 %v1918, 16
      %v2117 = vrot.slane %v2115, 4
      %v2118 = vor.u32 %v2117, %v2113
      %v2119 = vrot.slane %v2118, 4
      %v2121 = vshll.u32 %v1930, 16
      %v2123 = vrot.slane %v2121, 5
      %v2124 = vsel %vm1168, %v2119, %v2123
      %v2126 = vshrl.u32 %v1919, 16
      %v2128 = vrot.slane %v2126, 4
      %v2129 = vshll.u32 %v1919, 16
      %v2131 = vrot.slane %v2129, 5
      %v2132 = vor.u32 %v2128, %v2131
      %v2133 = vrot.slane %v2132, 4
      %v2135 = vshll.u32 %v1920, 16
      %v2137 = vrot.slane %v2135, 5
      %v2138 = vsel %vm1168, %v2133, %v2137
      %v2139 = vshrl.u32 %v1920, 16
      %v2141 = vrot.slane %v2139, 4
      %v2142 = vor.u32 %v2141, %v2137
      %v2143 = vrot.slane %v2142, 4
      %v2145 = vshll.u32 %v1931, 16
      %v2147 = vrot.slane %v2145, 5
      %v2148 = vsel %vm1168, %v2143, %v2147
      %v2150 = vshrl.u32 %v1921, 16
      %v2152 = vrot.slane %v2150, 4
      %v2153 = vshll.u32 %v1921, 16
      %v2155 = vrot.slane %v2153, 5
      %v2156 = vor.u32 %v2152, %v2155
      %v2157 = vrot.slane %v2156, 4
      %v2159 = vshll.u32 %v1922, 16
      %v2161 = vrot.slane %v2159, 5
      %v2162 = vsel %vm1168, %v2157, %v2161
      %v2163 = vshrl.u32 %v1922, 16
      %v2165 = vrot.slane %v2163, 4
      %v2166 = vor.u32 %v2165, %v2161
      %v2167 = vrot.slane %v2166, 4
      %v2169 = vshll.u32 %v1932, 16
      %v2171 = vrot.slane %v2169, 5
      %v2172 = vsel %vm1168, %v2167, %v2171
      %v2173 = vld [vmem:[%s1012] sm:$0xe]
      %v2174 = vld [vmem:[%s1012 + $0xc] sm:$0xe]
      %v2175 = vld [vmem:[%s1012 + $0x18] sm:$0xe]
      %v2176 = vld [vmem:[%s1012 + $0x24] sm:$0xe]
      %v2177 = vld [vmem:[%s1012 + $0x30] sm:$0xe]
      %v2178 = vld [vmem:[%s1012 + $0x3c] sm:$0xe]
      %v2179 = vld [vmem:[%s1012 + $0x48] sm:$0xe]
      %v2180 = vld [vmem:[%s1012 + $0x54] sm:$0xe]
      %v2181 = vld [vmem:[%s1012 + $0x60] sm:$0xe]
      %v2182 = vld [vmem:[%s1012 + $0x6c] sm:$0xe]
      %v2213 = vrot.slane %v2173, 5
      %v2214 = vrot.slane %v2213, 4
      %v2215 = vrot.slane %v1904, 5
      %v2216 = vsel %vm1451, %v2214, %v2215
      %v2217 = vrot.slane %v2215, 4
      %v2218 = vrot.slane %v1923, 5
      %v2219 = vsel %vm1451, %v2217, %v2218
      %v2220 = vrot.slane %v2174, 5
      %v2221 = vrot.slane %v2220, 4
      %v2222 = vrot.slane %v1906, 5
      %v2223 = vsel %vm1451, %v2221, %v2222
      %v2224 = vrot.slane %v2222, 4
      %v2225 = vrot.slane %v1924, 5
      %v2226 = vsel %vm1451, %v2224, %v2225
      %v2227 = vrot.slane %v2175, 5
      %v2228 = vrot.slane %v2227, 4
      %v2229 = vrot.slane %v1908, 5
      %v2230 = vsel %vm1451, %v2228, %v2229
      %v2231 = vrot.slane %v2229, 4
      %v2232 = vrot.slane %v1925, 5
      %v2233 = vsel %vm1451, %v2231, %v2232
      %v2234 = vrot.slane %v2176, 5
      %v2235 = vrot.slane %v2234, 4
      %v2236 = vrot.slane %v1910, 5
      %v2237 = vsel %vm1451, %v2235, %v2236
      %v2238 = vrot.slane %v2236, 4
      %v2239 = vrot.slane %v1926, 5
      %v2240 = vsel %vm1451, %v2238, %v2239
      %v2241 = vrot.slane %v2177, 5
      %v2242 = vrot.slane %v2241, 4
      %v2243 = vrot.slane %v1912, 5
      %v2244 = vsel %vm1451, %v2242, %v2243
      %v2245 = vrot.slane %v2243, 4
      %v2246 = vrot.slane %v1927, 5
      %v2247 = vsel %vm1451, %v2245, %v2246
      %v2248 = vrot.slane %v2178, 5
      %v2249 = vrot.slane %v2248, 4
      %v2250 = vrot.slane %v1914, 5
      %v2251 = vsel %vm1451, %v2249, %v2250
      %v2252 = vrot.slane %v2250, 4
      %v2253 = vrot.slane %v1928, 5
      %v2254 = vsel %vm1451, %v2252, %v2253
      %v2255 = vrot.slane %v2179, 5
      %v2256 = vrot.slane %v2255, 4
      %v2257 = vrot.slane %v1916, 5
      %v2258 = vsel %vm1451, %v2256, %v2257
      %v2259 = vrot.slane %v2257, 4
      %v2260 = vrot.slane %v1929, 5
      %v2261 = vsel %vm1451, %v2259, %v2260
      %v2262 = vrot.slane %v2180, 5
      %v2263 = vrot.slane %v2262, 4
      %v2264 = vrot.slane %v1918, 5
      %v2265 = vsel %vm1451, %v2263, %v2264
      %v2266 = vrot.slane %v2264, 4
      %v2267 = vrot.slane %v1930, 5
      %v2268 = vsel %vm1451, %v2266, %v2267
      %v2269 = vrot.slane %v2181, 5
      %v2270 = vrot.slane %v2269, 4
      %v2271 = vrot.slane %v1920, 5
      %v2272 = vsel %vm1451, %v2270, %v2271
      %v2273 = vrot.slane %v2271, 4
      %v2274 = vrot.slane %v1931, 5
      %v2275 = vsel %vm1451, %v2273, %v2274
      %v2276 = vrot.slane %v2182, 5
      %v2277 = vrot.slane %v2276, 4
      %v2278 = vrot.slane %v1922, 5
      %v2279 = vsel %vm1451, %v2277, %v2278
      %v2280 = vrot.slane %v2278, 4
      %v2281 = vrot.slane %v1932, 5
      %v2282 = vsel %vm1451, %v2280, %v2281
      %v2293 = vunpack.c.l.b16 %v1136
      %v2294 = vunpack.c.l.b16 %v1137
      %v2295 = vunpack.c.l.b16 %v1138
      %v2296 = vunpack.c.l.b16 %v1139
      %v2297 = vunpack.c.l.b16 %v1140
      %v2298 = vunpack.c.l.b16 %v1141
      %v2299 = vunpack.c.l.b16 %v1142
      %v2300 = vunpack.c.l.b16 %v1143
      %v2301 = vunpack.c.l.b16 %v1144
      %v2302 = vunpack.c.l.b16 %v1145
      %v2303 = vunpack.c.l.b16 %v1146
      %v2304 = vunpack.c.l.b16 %v1147
      %v2305 = vunpack.c.l.b16 %v1148
      %v2306 = vunpack.c.l.b16 %v1149
      %v2307 = vunpack.c.l.b16 %v1150
      %v2308 = vunpack.c.l.b16 %v1151
      %v2309 = vunpack.c.l.b16 %v1152
      %v2310 = vunpack.c.l.b16 %v1153
      %v2311 = vunpack.c.l.b16 %v1154
      %v2312 = vunpack.c.l.b16 %v1155
      %v2313 = vpack.c.b16 %v2294, %v2293
      %v2314 = vpack.c.b16 %v2296, %v2295
      %v2315 = vpack.c.b16 %v2298, %v2297
      %v2316 = vpack.c.b16 %v2300, %v2299
      %v2317 = vpack.c.b16 %v2302, %v2301
      %v2318 = vpack.c.b16 %v2304, %v2303
      %v2319 = vpack.c.b16 %v2306, %v2305
      %v2320 = vpack.c.b16 %v2308, %v2307
      %v2321 = vpack.c.b16 %v2310, %v2309
      %v2322 = vpack.c.b16 %v2312, %v2311
      %v2323 = vunpack.c.l.b16 %v1182
      %v2324 = vunpack.c.l.b16 %v1192
      %v2325 = vunpack.c.l.b16 %v1206
      %v2326 = vunpack.c.l.b16 %v1216
      %v2327 = vunpack.c.l.b16 %v1230
      %v2328 = vunpack.c.l.b16 %v1240
      %v2329 = vunpack.c.l.b16 %v1254
      %v2330 = vunpack.c.l.b16 %v1264
      %v2331 = vunpack.c.l.b16 %v1278
      %v2332 = vunpack.c.l.b16 %v1288
      %v2333 = vunpack.c.l.b16 %v1302
      %v2334 = vunpack.c.l.b16 %v1312
      %v2335 = vunpack.c.l.b16 %v1326
      %v2336 = vunpack.c.l.b16 %v1336
      %v2337 = vunpack.c.l.b16 %v1350
      %v2338 = vunpack.c.l.b16 %v1360
      %v2339 = vunpack.c.l.b16 %v1374
      %v2340 = vunpack.c.l.b16 %v1384
      %v2341 = vunpack.c.l.b16 %v1398
      %v2342 = vunpack.c.l.b16 %v1408
      %v2343 = vpack.c.b16 %v2324, %v2323
      %v2344 = vpack.c.b16 %v2326, %v2325
      %v2345 = vpack.c.b16 %v2328, %v2327
      %v2346 = vpack.c.b16 %v2330, %v2329
      %v2347 = vpack.c.b16 %v2332, %v2331
      %v2348 = vpack.c.b16 %v2334, %v2333
      %v2349 = vpack.c.b16 %v2336, %v2335
      %v2350 = vpack.c.b16 %v2338, %v2337
      %v2351 = vpack.c.b16 %v2340, %v2339
      %v2352 = vpack.c.b16 %v2342, %v2341
      %2353 = vrot.lane.b32.xlu0 %v2343, 4
      %v2354 = vpop.permute.xlu0 %2353
      %2355 = vrot.lane.b32.xlu0 %v2344, 4
      %v2356 = vpop.permute.xlu0 %2355
      %2357 = vrot.lane.b32.xlu0 %v2345, 4
      %v2358 = vpop.permute.xlu0 %2357
      %2359 = vrot.lane.b32.xlu0 %v2346, 4
      %v2360 = vpop.permute.xlu0 %2359
      %2361 = vrot.lane.b32.xlu0 %v2347, 4
      %v2362 = vpop.permute.xlu0 %2361
      %2363 = vrot.lane.b32.xlu0 %v2348, 4
      %v2364 = vpop.permute.xlu0 %2363
      %2365 = vrot.lane.b32.xlu0 %v2349, 4
      %v2366 = vpop.permute.xlu0 %2365
      %2367 = vrot.lane.b32.xlu0 %v2350, 4
      %v2368 = vpop.permute.xlu0 %2367
      %2369 = vrot.lane.b32.xlu0 %v2351, 4
      %v2370 = vpop.permute.xlu0 %2369
      %2371 = vrot.lane.b32.xlu0 %v2352, 4
      %v2372 = vpop.permute.xlu0 %2371
      %v2373 = vunpack.c.l.b16 %v1455
      %v2374 = vunpack.c.l.b16 %v1458
      %v2375 = vunpack.c.l.b16 %v1462
      %v2376 = vunpack.c.l.b16 %v1465
      %v2377 = vunpack.c.l.b16 %v1469
      %v2378 = vunpack.c.l.b16 %v1472
      %v2379 = vunpack.c.l.b16 %v1476
      %v2380 = vunpack.c.l.b16 %v1479
      %v2381 = vunpack.c.l.b16 %v1483
      %v2382 = vunpack.c.l.b16 %v1486
      %v2383 = vunpack.c.l.b16 %v1490
      %v2384 = vunpack.c.l.b16 %v1493
      %v2385 = vunpack.c.l.b16 %v1497
      %v2386 = vunpack.c.l.b16 %v1500
      %v2387 = vunpack.c.l.b16 %v1504
      %v2388 = vunpack.c.l.b16 %v1507
      %v2389 = vunpack.c.l.b16 %v1511
      %v2390 = vunpack.c.l.b16 %v1514
      %v2391 = vunpack.c.l.b16 %v1518
      %v2392 = vunpack.c.l.b16 %v1521
      %v2393 = vpack.c.b16 %v2374, %v2373
      %v2394 = vpack.c.b16 %v2376, %v2375
      %v2395 = vpack.c.b16 %v2378, %v2377
      %v2396 = vpack.c.b16 %v2380, %v2379
      %v2397 = vpack.c.b16 %v2382, %v2381
      %v2398 = vpack.c.b16 %v2384, %v2383
      %v2399 = vpack.c.b16 %v2386, %v2385
      %v2400 = vpack.c.b16 %v2388, %v2387
      %v2401 = vpack.c.b16 %v2390, %v2389
      %v2402 = vpack.c.b16 %v2392, %v2391
      %2403 = vrot.lane.b32.xlu0 %v2393, 8
      %v2404 = vpop.permute.xlu0 %2403
      %2405 = vrot.lane.b32.xlu0 %v2394, 8
      %v2406 = vpop.permute.xlu0 %2405
      %2407 = vrot.lane.b32.xlu0 %v2395, 8
      %v2408 = vpop.permute.xlu0 %2407
      %2409 = vrot.lane.b32.xlu0 %v2396, 8
      %v2410 = vpop.permute.xlu0 %2409
      %2411 = vrot.lane.b32.xlu0 %v2397, 8
      %v2412 = vpop.permute.xlu0 %2411
      %2413 = vrot.lane.b32.xlu0 %v2398, 8
      %v2414 = vpop.permute.xlu0 %2413
      %2415 = vrot.lane.b32.xlu0 %v2399, 8
      %v2416 = vpop.permute.xlu0 %2415
      %2417 = vrot.lane.b32.xlu0 %v2400, 8
      %v2418 = vpop.permute.xlu0 %2417
      %2419 = vrot.lane.b32.xlu0 %v2401, 8
      %v2420 = vpop.permute.xlu0 %2419
      %2421 = vrot.lane.b32.xlu0 %v2402, 8
      %v2422 = vpop.permute.xlu0 %2421
      %v2433 = vunpack.c.l.b16 %v1523
      %v2434 = vunpack.c.l.b16 %v1524
      %v2435 = vunpack.c.l.b16 %v1525
      %v2436 = vunpack.c.l.b16 %v1526
      %v2437 = vunpack.c.l.b16 %v1527
      %v2438 = vunpack.c.l.b16 %v1528
      %v2439 = vunpack.c.l.b16 %v1529
      %v2440 = vunpack.c.l.b16 %v1530
      %v2441 = vunpack.c.l.b16 %v1531
      %v2442 = vunpack.c.l.b16 %v1532
      %v2443 = vunpack.c.l.b16 %v1533
      %v2444 = vunpack.c.l.b16 %v1534
      %v2445 = vunpack.c.l.b16 %v1535
      %v2446 = vunpack.c.l.b16 %v1536
      %v2447 = vunpack.c.l.b16 %v1537
      %v2448 = vunpack.c.l.b16 %v1538
      %v2449 = vunpack.c.l.b16 %v1539
      %v2450 = vunpack.c.l.b16 %v1540
      %v2451 = vunpack.c.l.b16 %v1541
      %v2452 = vunpack.c.l.b16 %v1542
      %v2453 = vpack.c.b16 %v2434, %v2433
      %v2454 = vpack.c.b16 %v2436, %v2435
      %v2455 = vpack.c.b16 %v2438, %v2437
      %v2456 = vpack.c.b16 %v2440, %v2439
      %v2457 = vpack.c.b16 %v2442, %v2441
      %v2458 = vpack.c.b16 %v2444, %v2443
      %v2459 = vpack.c.b16 %v2446, %v2445
      %v2460 = vpack.c.b16 %v2448, %v2447
      %v2461 = vpack.c.b16 %v2450, %v2449
      %v2462 = vpack.c.b16 %v2452, %v2451
      %2463 = vrot.lane.b32.xlu0 %v2453, 12
      %v2464 = vpop.permute.xlu0 %2463
      %2465 = vrot.lane.b32.xlu0 %v2454, 12
      %v2466 = vpop.permute.xlu0 %2465
      %2467 = vrot.lane.b32.xlu0 %v2455, 12
      %v2468 = vpop.permute.xlu0 %2467
      %2469 = vrot.lane.b32.xlu0 %v2456, 12
      %v2470 = vpop.permute.xlu0 %2469
      %2471 = vrot.lane.b32.xlu0 %v2457, 12
      %v2472 = vpop.permute.xlu0 %2471
      %2473 = vrot.lane.b32.xlu0 %v2458, 12
      %v2474 = vpop.permute.xlu0 %2473
      %2475 = vrot.lane.b32.xlu0 %v2459, 12
      %v2476 = vpop.permute.xlu0 %2475
      %2477 = vrot.lane.b32.xlu0 %v2460, 12
      %v2478 = vpop.permute.xlu0 %2477
      %2479 = vrot.lane.b32.xlu0 %v2461, 12
      %v2480 = vpop.permute.xlu0 %2479
      %2481 = vrot.lane.b32.xlu0 %v2462, 12
      %v2482 = vpop.permute.xlu0 %2481
      %v2483 = vunpack.c.l.b16 %v1566
      %v2484 = vunpack.c.l.b16 %v1576
      %v2485 = vunpack.c.l.b16 %v1590
      %v2486 = vunpack.c.l.b16 %v1600
      %v2487 = vunpack.c.l.b16 %v1614
      %v2488 = vunpack.c.l.b16 %v1624
      %v2489 = vunpack.c.l.b16 %v1638
      %v2490 = vunpack.c.l.b16 %v1648
      %v2491 = vunpack.c.l.b16 %v1662
      %v2492 = vunpack.c.l.b16 %v1672
      %v2493 = vunpack.c.l.b16 %v1686
      %v2494 = vunpack.c.l.b16 %v1696
      %v2495 = vunpack.c.l.b16 %v1710
      %v2496 = vunpack.c.l.b16 %v1720
      %v2497 = vunpack.c.l.b16 %v1734
      %v2498 = vunpack.c.l.b16 %v1744
      %v2499 = vunpack.c.l.b16 %v1758
      %v2500 = vunpack.c.l.b16 %v1768
      %v2501 = vunpack.c.l.b16 %v1782
      %v2502 = vunpack.c.l.b16 %v1792
      %v2503 = vpack.c.b16 %v2484, %v2483
      %v2504 = vpack.c.b16 %v2486, %v2485
      %v2505 = vpack.c.b16 %v2488, %v2487
      %v2506 = vpack.c.b16 %v2490, %v2489
      %v2507 = vpack.c.b16 %v2492, %v2491
      %v2508 = vpack.c.b16 %v2494, %v2493
      %v2509 = vpack.c.b16 %v2496, %v2495
      %v2510 = vpack.c.b16 %v2498, %v2497
      %v2511 = vpack.c.b16 %v2500, %v2499
      %v2512 = vpack.c.b16 %v2502, %v2501
      %2513 = vrot.lane.b32.xlu0 %v2503, 16
      %v2514 = vpop.permute.xlu0 %2513
      %2515 = vrot.lane.b32.xlu0 %v2504, 16
      %v2516 = vpop.permute.xlu0 %2515
      %2517 = vrot.lane.b32.xlu0 %v2505, 16
      %v2518 = vpop.permute.xlu0 %2517
      %2519 = vrot.lane.b32.xlu0 %v2506, 16
      %v2520 = vpop.permute.xlu0 %2519
      %2521 = vrot.lane.b32.xlu0 %v2507, 16
      %v2522 = vpop.permute.xlu0 %2521
      %2523 = vrot.lane.b32.xlu0 %v2508, 16
      %v2524 = vpop.permute.xlu0 %2523
      %2525 = vrot.lane.b32.xlu0 %v2509, 16
      %v2526 = vpop.permute.xlu0 %2525
      %2527 = vrot.lane.b32.xlu0 %v2510, 16
      %v2528 = vpop.permute.xlu0 %2527
      %2529 = vrot.lane.b32.xlu0 %v2511, 16
      %v2530 = vpop.permute.xlu0 %2529
      %2531 = vrot.lane.b32.xlu0 %v2512, 16
      %v2532 = vpop.permute.xlu0 %2531
      %v2533 = vunpack.c.l.b16 %v1836
      %v2534 = vunpack.c.l.b16 %v1839
      %v2535 = vunpack.c.l.b16 %v1843
      %v2536 = vunpack.c.l.b16 %v1846
      %v2537 = vunpack.c.l.b16 %v1850
      %v2538 = vunpack.c.l.b16 %v1853
      %v2539 = vunpack.c.l.b16 %v1857
      %v2540 = vunpack.c.l.b16 %v1860
      %v2541 = vunpack.c.l.b16 %v1864
      %v2542 = vunpack.c.l.b16 %v1867
      %v2543 = vunpack.c.l.b16 %v1871
      %v2544 = vunpack.c.l.b16 %v1874
      %v2545 = vunpack.c.l.b16 %v1878
      %v2546 = vunpack.c.l.b16 %v1881
      %v2547 = vunpack.c.l.b16 %v1885
      %v2548 = vunpack.c.l.b16 %v1888
      %v2549 = vunpack.c.l.b16 %v1892
      %v2550 = vunpack.c.l.b16 %v1895
      %v2551 = vunpack.c.l.b16 %v1899
      %v2552 = vunpack.c.l.b16 %v1902
      %v2553 = vpack.c.b16 %v2534, %v2533
      %v2554 = vpack.c.b16 %v2536, %v2535
      %v2555 = vpack.c.b16 %v2538, %v2537
      %v2556 = vpack.c.b16 %v2540, %v2539
      %v2557 = vpack.c.b16 %v2542, %v2541
      %v2558 = vpack.c.b16 %v2544, %v2543
      %v2559 = vpack.c.b16 %v2546, %v2545
      %v2560 = vpack.c.b16 %v2548, %v2547
      %v2561 = vpack.c.b16 %v2550, %v2549
      %v2562 = vpack.c.b16 %v2552, %v2551
      %2563 = vrot.lane.b32.xlu0 %v2553, 20
      %v2564 = vpop.permute.xlu0 %2563
      %2565 = vrot.lane.b32.xlu0 %v2554, 20
      %v2566 = vpop.permute.xlu0 %2565
      %2567 = vrot.lane.b32.xlu0 %v2555, 20
      %v2568 = vpop.permute.xlu0 %2567
      %2569 = vrot.lane.b32.xlu0 %v2556, 20
      %v2570 = vpop.permute.xlu0 %2569
      %2571 = vrot.lane.b32.xlu0 %v2557, 20
      %v2572 = vpop.permute.xlu0 %2571
      %2573 = vrot.lane.b32.xlu0 %v2558, 20
      %v2574 = vpop.permute.xlu0 %2573
      %2575 = vrot.lane.b32.xlu0 %v2559, 20
      %v2576 = vpop.permute.xlu0 %2575
      %2577 = vrot.lane.b32.xlu0 %v2560, 20
      %v2578 = vpop.permute.xlu0 %2577
      %2579 = vrot.lane.b32.xlu0 %v2561, 20
      %v2580 = vpop.permute.xlu0 %2579
      %2581 = vrot.lane.b32.xlu0 %v2562, 20
      %v2582 = vpop.permute.xlu0 %2581
      %v2593 = vunpack.c.l.b16 %v1903
      %v2594 = vunpack.c.l.b16 %v1904
      %v2595 = vunpack.c.l.b16 %v1905
      %v2596 = vunpack.c.l.b16 %v1906
      %v2597 = vunpack.c.l.b16 %v1907
      %v2598 = vunpack.c.l.b16 %v1908
      %v2599 = vunpack.c.l.b16 %v1909
      %v2600 = vunpack.c.l.b16 %v1910
      %v2601 = vunpack.c.l.b16 %v1911
      %v2602 = vunpack.c.l.b16 %v1912
      %v2603 = vunpack.c.l.b16 %v1913
      %v2604 = vunpack.c.l.b16 %v1914
      %v2605 = vunpack.c.l.b16 %v1915
      %v2606 = vunpack.c.l.b16 %v1916
      %v2607 = vunpack.c.l.b16 %v1917
      %v2608 = vunpack.c.l.b16 %v1918
      %v2609 = vunpack.c.l.b16 %v1919
      %v2610 = vunpack.c.l.b16 %v1920
      %v2611 = vunpack.c.l.b16 %v1921
      %v2612 = vunpack.c.l.b16 %v1922
      %v2613 = vpack.c.b16 %v2594, %v2593
      %v2614 = vpack.c.b16 %v2596, %v2595
      %v2615 = vpack.c.b16 %v2598, %v2597
      %v2616 = vpack.c.b16 %v2600, %v2599
      %v2617 = vpack.c.b16 %v2602, %v2601
      %v2618 = vpack.c.b16 %v2604, %v2603
      %v2619 = vpack.c.b16 %v2606, %v2605
      %v2620 = vpack.c.b16 %v2608, %v2607
      %v2621 = vpack.c.b16 %v2610, %v2609
      %v2622 = vpack.c.b16 %v2612, %v2611
      %2623 = vrot.lane.b32.xlu0 %v2613, 24
      %v2624 = vpop.permute.xlu0 %2623
      %2625 = vrot.lane.b32.xlu0 %v2614, 24
      %v2626 = vpop.permute.xlu0 %2625
      %2627 = vrot.lane.b32.xlu0 %v2615, 24
      %v2628 = vpop.permute.xlu0 %2627
      %2629 = vrot.lane.b32.xlu0 %v2616, 24
      %v2630 = vpop.permute.xlu0 %2629
      %2631 = vrot.lane.b32.xlu0 %v2617, 24
      %v2632 = vpop.permute.xlu0 %2631
      %2633 = vrot.lane.b32.xlu0 %v2618, 24
      %v2634 = vpop.permute.xlu0 %2633
      %2635 = vrot.lane.b32.xlu0 %v2619, 24
      %v2636 = vpop.permute.xlu0 %2635
      %2637 = vrot.lane.b32.xlu0 %v2620, 24
      %v2638 = vpop.permute.xlu0 %2637
      %2639 = vrot.lane.b32.xlu0 %v2621, 24
      %v2640 = vpop.permute.xlu0 %2639
      %2641 = vrot.lane.b32.xlu0 %v2622, 24
      %v2642 = vpop.permute.xlu0 %2641
      %v2643 = vunpack.c.l.b16 %v1946
      %v2644 = vunpack.c.l.b16 %v1956
      %v2645 = vunpack.c.l.b16 %v1970
      %v2646 = vunpack.c.l.b16 %v1980
      %v2647 = vunpack.c.l.b16 %v1994
      %v2648 = vunpack.c.l.b16 %v2004
      %v2649 = vunpack.c.l.b16 %v2018
      %v2650 = vunpack.c.l.b16 %v2028
      %v2651 = vunpack.c.l.b16 %v2042
      %v2652 = vunpack.c.l.b16 %v2052
      %v2653 = vunpack.c.l.b16 %v2066
      %v2654 = vunpack.c.l.b16 %v2076
      %v2655 = vunpack.c.l.b16 %v2090
      %v2656 = vunpack.c.l.b16 %v2100
      %v2657 = vunpack.c.l.b16 %v2114
      %v2658 = vunpack.c.l.b16 %v2124
      %v2659 = vunpack.c.l.b16 %v2138
      %v2660 = vunpack.c.l.b16 %v2148
      %v2661 = vunpack.c.l.b16 %v2162
      %v2662 = vunpack.c.l.b16 %v2172
      %v2663 = vpack.c.b16 %v2644, %v2643
      %v2664 = vpack.c.b16 %v2646, %v2645
      %v2665 = vpack.c.b16 %v2648, %v2647
      %v2666 = vpack.c.b16 %v2650, %v2649
      %v2667 = vpack.c.b16 %v2652, %v2651
      %v2668 = vpack.c.b16 %v2654, %v2653
      %v2669 = vpack.c.b16 %v2656, %v2655
      %v2670 = vpack.c.b16 %v2658, %v2657
      %v2671 = vpack.c.b16 %v2660, %v2659
      %v2672 = vpack.c.b16 %v2662, %v2661
      %2673 = vrot.lane.b32.xlu0 %v2663, 28
      %v2674 = vpop.permute.xlu0 %2673
      %2675 = vrot.lane.b32.xlu0 %v2664, 28
      %v2676 = vpop.permute.xlu0 %2675
      %2677 = vrot.lane.b32.xlu0 %v2665, 28
      %v2678 = vpop.permute.xlu0 %2677
      %2679 = vrot.lane.b32.xlu0 %v2666, 28
      %v2680 = vpop.permute.xlu0 %2679
      %2681 = vrot.lane.b32.xlu0 %v2667, 28
      %v2682 = vpop.permute.xlu0 %2681
      %2683 = vrot.lane.b32.xlu0 %v2668, 28
      %v2684 = vpop.permute.xlu0 %2683
      %2685 = vrot.lane.b32.xlu0 %v2669, 28
      %v2686 = vpop.permute.xlu0 %2685
      %2687 = vrot.lane.b32.xlu0 %v2670, 28
      %v2688 = vpop.permute.xlu0 %2687
      %2689 = vrot.lane.b32.xlu0 %v2671, 28
      %v2690 = vpop.permute.xlu0 %2689
      %2691 = vrot.lane.b32.xlu0 %v2672, 28
      %v2692 = vpop.permute.xlu0 %2691
      %v2693 = vunpack.c.l.b16 %v2216
      %v2694 = vunpack.c.l.b16 %v2219
      %v2695 = vunpack.c.l.b16 %v2223
      %v2696 = vunpack.c.l.b16 %v2226
      %v2697 = vunpack.c.l.b16 %v2230
      %v2698 = vunpack.c.l.b16 %v2233
      %v2699 = vunpack.c.l.b16 %v2237
      %v2700 = vunpack.c.l.b16 %v2240
      %v2701 = vunpack.c.l.b16 %v2244
      %v2702 = vunpack.c.l.b16 %v2247
      %v2703 = vunpack.c.l.b16 %v2251
      %v2704 = vunpack.c.l.b16 %v2254
      %v2705 = vunpack.c.l.b16 %v2258
      %v2706 = vunpack.c.l.b16 %v2261
      %v2707 = vunpack.c.l.b16 %v2265
      %v2708 = vunpack.c.l.b16 %v2268
      %v2709 = vunpack.c.l.b16 %v2272
      %v2710 = vunpack.c.l.b16 %v2275
      %v2711 = vunpack.c.l.b16 %v2279
      %v2712 = vunpack.c.l.b16 %v2282
      %v2713 = vpack.c.b16 %v2694, %v2693
      %v2714 = vpack.c.b16 %v2696, %v2695
      %v2715 = vpack.c.b16 %v2698, %v2697
      %v2716 = vpack.c.b16 %v2700, %v2699
      %v2717 = vpack.c.b16 %v2702, %v2701
      %v2718 = vpack.c.b16 %v2704, %v2703
      %v2719 = vpack.c.b16 %v2706, %v2705
      %v2720 = vpack.c.b16 %v2708, %v2707
      %v2721 = vpack.c.b16 %v2710, %v2709
      %v2722 = vpack.c.b16 %v2712, %v2711
      %2723 = vrot.lane.b32.xlu0 %v2713, 32
      %v2724 = vpop.permute.xlu0 %2723
      %2725 = vrot.lane.b32.xlu0 %v2714, 32
      %v2726 = vpop.permute.xlu0 %2725
      %2727 = vrot.lane.b32.xlu0 %v2715, 32
      %v2728 = vpop.permute.xlu0 %2727
      %2729 = vrot.lane.b32.xlu0 %v2716, 32
      %v2730 = vpop.permute.xlu0 %2729
      %2731 = vrot.lane.b32.xlu0 %v2717, 32
      %v2732 = vpop.permute.xlu0 %2731
      %2733 = vrot.lane.b32.xlu0 %v2718, 32
      %v2734 = vpop.permute.xlu0 %2733
      %2735 = vrot.lane.b32.xlu0 %v2719, 32
      %v2736 = vpop.permute.xlu0 %2735
      %2737 = vrot.lane.b32.xlu0 %v2720, 32
      %v2738 = vpop.permute.xlu0 %2737
      %2739 = vrot.lane.b32.xlu0 %v2721, 32
      %v2740 = vpop.permute.xlu0 %2739
      %2741 = vrot.lane.b32.xlu0 %v2722, 32
      %v2742 = vpop.permute.xlu0 %2741
      %vm2743 = vcmask 31744
      %v2746 = vsel %vm2743, %v2313, %v2354
      %v2749 = vsel %vm2743, %v2314, %v2356
      %v2752 = vsel %vm2743, %v2315, %v2358
      %v2755 = vsel %vm2743, %v2316, %v2360
      %v2758 = vsel %vm2743, %v2317, %v2362
      %v2761 = vsel %vm2743, %v2318, %v2364
      %v2764 = vsel %vm2743, %v2319, %v2366
      %v2767 = vsel %vm2743, %v2320, %v2368
      %v2770 = vsel %vm2743, %v2321, %v2370
      %v2773 = vsel %vm2743, %v2322, %v2372
      %vm2774 = vcmask 64512
      %v2776 = vsel %vm2774, %v2746, %v2404
      %v2778 = vsel %vm2774, %v2749, %v2406
      %v2780 = vsel %vm2774, %v2752, %v2408
      %v2782 = vsel %vm2774, %v2755, %v2410
      %v2784 = vsel %vm2774, %v2758, %v2412
      %v2786 = vsel %vm2774, %v2761, %v2414
      %v2788 = vsel %vm2774, %v2764, %v2416
      %v2790 = vsel %vm2774, %v2767, %v2418
      %v2792 = vsel %vm2774, %v2770, %v2420
      %v2794 = vsel %vm2774, %v2773, %v2422
      %vm2795 = vcmask 97280
      %v2797 = vsel %vm2795, %v2776, %v2464
      %v2799 = vsel %vm2795, %v2778, %v2466
      %v2801 = vsel %vm2795, %v2780, %v2468
      %v2803 = vsel %vm2795, %v2782, %v2470
      %v2805 = vsel %vm2795, %v2784, %v2472
      %v2807 = vsel %vm2795, %v2786, %v2474
      %v2809 = vsel %vm2795, %v2788, %v2476
      %v2811 = vsel %vm2795, %v2790, %v2478
      %v2813 = vsel %vm2795, %v2792, %v2480
      %v2815 = vsel %vm2795, %v2794, %v2482
      %vm2816 = vcmask 130048
      %v2818 = vsel %vm2816, %v2797, %v2514
      %v2820 = vsel %vm2816, %v2799, %v2516
      %v2822 = vsel %vm2816, %v2801, %v2518
      %v2824 = vsel %vm2816, %v2803, %v2520
      %v2826 = vsel %vm2816, %v2805, %v2522
      %v2828 = vsel %vm2816, %v2807, %v2524
      %v2830 = vsel %vm2816, %v2809, %v2526
      %v2832 = vsel %vm2816, %v2811, %v2528
      %v2834 = vsel %vm2816, %v2813, %v2530
      %v2836 = vsel %vm2816, %v2815, %v2532
      %vm2837 = vcmask 162816
      %v2839 = vsel %vm2837, %v2818, %v2564
      %v2841 = vsel %vm2837, %v2820, %v2566
      %v2843 = vsel %vm2837, %v2822, %v2568
      %v2845 = vsel %vm2837, %v2824, %v2570
      %v2847 = vsel %vm2837, %v2826, %v2572
      %v2849 = vsel %vm2837, %v2828, %v2574
      %v2851 = vsel %vm2837, %v2830, %v2576
      %v2853 = vsel %vm2837, %v2832, %v2578
      %v2855 = vsel %vm2837, %v2834, %v2580
      %v2857 = vsel %vm2837, %v2836, %v2582
      %vm2858 = vcmask 195584
      %v2860 = vsel %vm2858, %v2839, %v2624
      %v2862 = vsel %vm2858, %v2841, %v2626
      %v2864 = vsel %vm2858, %v2843, %v2628
      %v2866 = vsel %vm2858, %v2845, %v2630
      %v2868 = vsel %vm2858, %v2847, %v2632
      %v2870 = vsel %vm2858, %v2849, %v2634
      %v2872 = vsel %vm2858, %v2851, %v2636
      %v2874 = vsel %vm2858, %v2853, %v2638
      %v2876 = vsel %vm2858, %v2855, %v2640
      %v2878 = vsel %vm2858, %v2857, %v2642
      %vm2879 = vcmask 228352
      %v2881 = vsel %vm2879, %v2860, %v2674
      %v2883 = vsel %vm2879, %v2862, %v2676
      %v2885 = vsel %vm2879, %v2864, %v2678
      %v2887 = vsel %vm2879, %v2866, %v2680
      %v2889 = vsel %vm2879, %v2868, %v2682
      %v2891 = vsel %vm2879, %v2870, %v2684
      %v2893 = vsel %vm2879, %v2872, %v2686
      %v2895 = vsel %vm2879, %v2874, %v2688
      %v2897 = vsel %vm2879, %v2876, %v2690
      %v2899 = vsel %vm2879, %v2878, %v2692
      %vm2900 = vcmask 261120
      %v2902 = vsel %vm2900, %v2881, %v2724
      %v2904 = vsel %vm2900, %v2883, %v2726
      %v2906 = vsel %vm2900, %v2885, %v2728
      %v2908 = vsel %vm2900, %v2887, %v2730
      %v2910 = vsel %vm2900, %v2889, %v2732
      %v2912 = vsel %vm2900, %v2891, %v2734
      %v2914 = vsel %vm2900, %v2893, %v2736
      %v2916 = vsel %vm2900, %v2895, %v2738
      %v2918 = vsel %vm2900, %v2897, %v2740
      %v2920 = vsel %vm2900, %v2899, %v2742
      %v2921 = vld [vmem:[%s2] sm:$0xf]
      %v2922 = vld [vmem:[%s2 + $0x4] sm:$0xf]
      %v2923 = vld [vmem:[%s2 + $0x8] sm:$0xf]
      %v2924 = vld [vmem:[%s2 + $0xc] sm:$0xf]
      %v2925 = vld [vmem:[%s2 + $0x10] sm:$0x3]
      %v2926 = vld [vmem:[%s3] sm:$0x1]
      %v2928 = vlaneseq
      %v2929 = vshrl.u32 %v2928, 7
      %v2930 = vsub.s32 0, %v2929
      %v2931 = vrot.slane %v2926, %v2930
      %v2938 = vunpack.c.l.b16 %v2921
      %v2939 = vunpack.c.l.b16 %v2922
      %v2940 = vunpack.c.l.b16 %v2923
      %v2941 = vunpack.c.l.b16 %v2924
      %v2942 = vunpack.c.l.b16 %v2925
      %v2943 = vpack.c.b16 %v2939, %v2938
      %v2944 = vpack.c.b16 %v2941, %v2940
      %v2945 = vpack.c.b16 %v2942, %v2942
      %vm2948 = vcmask 293888
      %v2949 = vsel %vm2948, %v2902, 0
      %v2951 = vsel %vm2948, %v2904, 0
      %v2953 = vsel %vm2948, %v2906, 0
      %v2955 = vsel %vm2948, %v2908, 0
      %v2957 = vsel %vm2948, %v2910, 0
      %v2959 = vsel %vm2948, %v2912, 0
      %v2961 = vsel %vm2948, %v2914, 0
      %v2963 = vsel %vm2948, %v2916, 0
      %v2965 = vsel %vm2948, %v2918, 0
      %v2967 = vsel %vm2948, %v2920, 0
      %vm2969 = vcmask 1041408
      %v2971 = vsel %vm2969, %v2945, 0
      %2973 = vmatprep.subr.bf16.mxu0 0
      %2974 = vmatpush1.bf16.msra.mxu0 %v2943
      %2975 = vmatprep.subr.bf16.mxu0 0
      %2976 = vmatpush1.bf16.msra.mxu0 %v2944
      %2977 = vmatprep.subr.bf16.mxu0 0
      %2978 = vmatpush1.bf16.msra.mxu0 %v2971
      %2979 = vmatprep.subr.bf16.mxu0 0
      %2980 = vmatpush1.bf16.msra.mxu0 0
      %2981 = vmatprep.subr.bf16.mxu0 0
      %2982 = vmatpush1.bf16.msra.mxu0 0
      %2983 = vmatprep.subr.bf16.mxu0 0
      %2984 = vmatpush1.bf16.msra.mxu0 0
      %2985 = vmatprep.subr.bf16.mxu0 0
      %2986 = vmatpush1.bf16.msra.mxu0 0
      %2987 = vmatprep.subr.bf16.mxu0 0
      %2988 = vmatpush1.bf16.msra.mxu0 0
      %2989 = vmatprep.subr.bf16.mxu0 0
      %2990 = vmatpush1.bf16.msra.mxu0 0
      %2991 = vmatprep.subr.bf16.mxu0 0
      %2992 = vmatpush1.bf16.msra.mxu0 0
      %2993 = vmatprep.subr.bf16.mxu0 0
      %2994 = vmatpush1.bf16.msra.mxu0 0
      %2995 = vmatprep.subr.bf16.mxu0 0
      %2996 = vmatpush1.bf16.msra.mxu0 0
      %2997 = vmatprep.subr.bf16.mxu0 0
      %2998 = vmatpush1.bf16.msra.mxu0 0
      %2999 = vmatprep.subr.bf16.mxu0 0
      %3000 = vmatpush1.bf16.msra.mxu0 0
      %3001 = vmatprep.subr.bf16.mxu0 0
      %3002 = vmatpush1.bf16.msra.mxu0 0
      %3003 = vmatprep.subr.bf16.mxu0 0
      %3004 = vmatpush1.bf16.msra.mxu0 0
      %3005 = vmatprep.mubr.bf16.mxu0 0
      %3006 = vmatmul.mubr.bf16.gmra.mrb[0].mxu0 %v2949
      %v3007 = vpop.f32.mrb[0].mxu0
      %v3008 = vadd.f32 %v2931, %v3007
      %v3009 = vpop.f32.mrb[0].mxu0
      %v3010 = vpop.f32.mrb[0].mxu0
      %v3011 = vadd.f32 %v2931, %v3010
      %v3012 = vpop.f32.mrb[0].mxu0
      %3013 = vmatprep.mubr.bf16.mxu0 0
      %3014 = vmatmul.mubr.bf16.gmra.mrb[0].mxu0 %v2951
      %v3015 = vpop.f32.mrb[0].mxu0
      %v3016 = vadd.f32 %v2931, %v3015
      %v3017 = vpop.f32.mrb[0].mxu0
      %v3018 = vpop.f32.mrb[0].mxu0
      %v3019 = vadd.f32 %v2931, %v3018
      %v3020 = vpop.f32.mrb[0].mxu0
      %3021 = vmatprep.mubr.bf16.mxu0 0
      %3022 = vmatmul.mubr.bf16.gmra.mrb[0].mxu0 %v2953
      %v3023 = vpop.f32.mrb[0].mxu0
      %v3024 = vadd.f32 %v2931, %v3023
      %v3025 = vpop.f32.mrb[0].mxu0
      %v3026 = vpop.f32.mrb[0].mxu0
      %v3027 = vadd.f32 %v2931, %v3026
      %v3028 = vpop.f32.mrb[0].mxu0
      %3029 = vmatprep.mubr.bf16.mxu0 0
      %3030 = vmatmul.mubr.bf16.gmra.mrb[0].mxu0 %v2955
      %v3031 = vpop.f32.mrb[0].mxu0
      %v3032 = vadd.f32 %v2931, %v3031
      %v3033 = vpop.f32.mrb[0].mxu0
      %v3034 = vpop.f32.mrb[0].mxu0
      %v3035 = vadd.f32 %v2931, %v3034
      %v3036 = vpop.f32.mrb[0].mxu0
      %3037 = vmatprep.mubr.bf16.mxu0 0
      %3038 = vmatmul.mubr.bf16.gmra.mrb[0].mxu0 %v2957
      %v3039 = vpop.f32.mrb[0].mxu0
      %v3040 = vadd.f32 %v2931, %v3039
      %v3041 = vpop.f32.mrb[0].mxu0
      %v3042 = vpop.f32.mrb[0].mxu0
      %v3043 = vadd.f32 %v2931, %v3042
      %v3044 = vpop.f32.mrb[0].mxu0
      %3045 = vmatprep.mubr.bf16.mxu0 0
      %3046 = vmatmul.mubr.bf16.gmra.mrb[0].mxu0 %v2959
      %v3047 = vpop.f32.mrb[0].mxu0
      %v3048 = vadd.f32 %v2931, %v3047
      %v3049 = vpop.f32.mrb[0].mxu0
      %v3050 = vpop.f32.mrb[0].mxu0
      %v3051 = vadd.f32 %v2931, %v3050
      %v3052 = vpop.f32.mrb[0].mxu0
      %3053 = vmatprep.mubr.bf16.mxu0 0
      %3054 = vmatmul.mubr.bf16.gmra.mrb[0].mxu0 %v2961
      %v3055 = vpop.f32.mrb[0].mxu0
      %v3056 = vadd.f32 %v2931, %v3055
      %v3057 = vpop.f32.mrb[0].mxu0
      %v3058 = vpop.f32.mrb[0].mxu0
      %v3059 = vadd.f32 %v2931, %v3058
      %v3060 = vpop.f32.mrb[0].mxu0
      %3061 = vmatprep.mubr.bf16.mxu0 0
      %3062 = vmatmul.mubr.bf16.gmra.mrb[0].mxu0 %v2963
      %v3063 = vpop.f32.mrb[0].mxu0
      %v3064 = vadd.f32 %v2931, %v3063
      %v3065 = vpop.f32.mrb[0].mxu0
      %v3066 = vpop.f32.mrb[0].mxu0
      %v3067 = vadd.f32 %v2931, %v3066
      %v3068 = vpop.f32.mrb[0].mxu0
      %3069 = vmatprep.mubr.bf16.mxu0 0
      %3070 = vmatmul.mubr.bf16.gmra.mrb[0].mxu0 %v2965
      %v3071 = vpop.f32.mrb[0].mxu0
      %v3072 = vadd.f32 %v2931, %v3071
      %v3073 = vpop.f32.mrb[0].mxu0
      %v3074 = vpop.f32.mrb[0].mxu0
      %v3075 = vadd.f32 %v2931, %v3074
      %v3076 = vpop.f32.mrb[0].mxu0
      %3077 = vmatprep.mubr.bf16.mxu0 0
      %3078 = vmatmul.mubr.bf16.gmra.mrb[0].mxu0 %v2967
      %v3079 = vpop.f32.mrb[0].mxu0
      %v3080 = vadd.f32 %v2931, %v3079
      %v3081 = vpop.f32.mrb[0].mxu0
      %v3082 = vpop.f32.mrb[0].mxu0
      %v3083 = vadd.f32 %v2931, %v3082
      %v3084 = vpop.f32.mrb[0].mxu0
      %3085 = vdwg.mxu0
      %v3086 = vmax.f32 %v3008, 0.0
      %v3087 = vmax.f32 %v3011, 0.0
      %v3088 = vmax.f32 %v3016, 0.0
      %v3089 = vmax.f32 %v3019, 0.0
      %v3090 = vmax.f32 %v3024, 0.0
      %v3091 = vmax.f32 %v3027, 0.0
      %v3092 = vmax.f32 %v3032, 0.0
      %v3093 = vmax.f32 %v3035, 0.0
      %v3094 = vmax.f32 %v3040, 0.0
      %v3095 = vmax.f32 %v3043, 0.0
      %v3096 = vmax.f32 %v3048, 0.0
      %v3097 = vmax.f32 %v3051, 0.0
      %v3098 = vmax.f32 %v3056, 0.0
      %v3099 = vmax.f32 %v3059, 0.0
      %v3100 = vmax.f32 %v3064, 0.0
      %v3101 = vmax.f32 %v3067, 0.0
      %v3102 = vmax.f32 %v3072, 0.0
      %v3103 = vmax.f32 %v3075, 0.0
      %v3104 = vmax.f32 %v3080, 0.0
      %v3105 = vmax.f32 %v3083, 0.0
      %v3106 = vpack.c.bf16 %v3087, %v3086
      %v3107 = vpack.c.bf16 %v3089, %v3088
      %v3108 = vpack.c.bf16 %v3091, %v3090
      %v3109 = vpack.c.bf16 %v3093, %v3092
      %v3110 = vpack.c.bf16 %v3095, %v3094
      %v3111 = vpack.c.bf16 %v3097, %v3096
      %v3112 = vpack.c.bf16 %v3099, %v3098
      %v3113 = vpack.c.bf16 %v3101, %v3100
      %v3114 = vpack.c.bf16 %v3103, %v3102
      %v3115 = vpack.c.bf16 %v3105, %v3104
      %v3126 = vunpack.c.l.b16 %v3106
      %v3127 = vunpack.c.h.b16 %v3106
      %v3128 = vunpack.c.l.b16 %v3107
      %v3129 = vunpack.c.h.b16 %v3107
      %v3130 = vunpack.c.l.b16 %v3108
      %v3131 = vunpack.c.h.b16 %v3108
      %v3132 = vunpack.c.l.b16 %v3109
      %v3133 = vunpack.c.h.b16 %v3109
      %v3134 = vunpack.c.l.b16 %v3110
      %v3135 = vunpack.c.h.b16 %v3110
      %v3136 = vunpack.c.l.b16 %v3111
      %v3137 = vunpack.c.h.b16 %v3111
      %v3138 = vunpack.c.l.b16 %v3112
      %v3139 = vunpack.c.h.b16 %v3112
      %v3140 = vunpack.c.l.b16 %v3113
      %v3141 = vunpack.c.h.b16 %v3113
      %v3142 = vunpack.c.l.b16 %v3114
      %v3143 = vunpack.c.h.b16 %v3114
      %v3144 = vunpack.c.l.b16 %v3115
      %v3145 = vunpack.c.h.b16 %v3115
      %v3146 = vpack.c.b16 %v3126, %v3126
      %v3147 = vpack.c.b16 %v3127, %v3127
      %v3148 = vpack.c.b16 %v3128, %v3128
      %v3149 = vpack.c.b16 %v3129, %v3129
      %v3150 = vpack.c.b16 %v3130, %v3130
      %v3151 = vpack.c.b16 %v3131, %v3131
      %v3152 = vpack.c.b16 %v3132, %v3132
      %v3153 = vpack.c.b16 %v3133, %v3133
      %v3154 = vpack.c.b16 %v3134, %v3134
      %v3155 = vpack.c.b16 %v3135, %v3135
      %v3156 = vpack.c.b16 %v3136, %v3136
      %v3157 = vpack.c.b16 %v3137, %v3137
      %v3158 = vpack.c.b16 %v3138, %v3138
      %v3159 = vpack.c.b16 %v3139, %v3139
      %v3160 = vpack.c.b16 %v3140, %v3140
      %v3161 = vpack.c.b16 %v3141, %v3141
      %v3162 = vpack.c.b16 %v3142, %v3142
      %v3163 = vpack.c.b16 %v3143, %v3143
      %v3164 = vpack.c.b16 %v3144, %v3144
      %v3165 = vpack.c.b16 %v3145, %v3145
      %v3167 = vshrl.u32 %v3146, 16
      %v3169 = vrot.slane %v3167, 7
      %v3170 = vshll.u32 %v3146, 16
      %v3172 = vor.u32 %v3169, %v3170
      %v3173 = vrot.slane %v3169, 4
      %v3175 = vshrl.u32 %v3147, 16
      %v3177 = vrot.slane %v3175, 7
      %v3178 = vshll.u32 %v3147, 16
      %v3180 = vor.u32 %v3177, %v3178
      %v3181 = vsel %vm746, %v3173, %v3180
      %v3182 = vrot.slane %v3177, 4
      %v3184 = vshrl.u32 %v3148, 16
      %v3186 = vrot.slane %v3184, 7
      %v3187 = vshll.u32 %v3148, 16
      %v3189 = vor.u32 %v3186, %v3187
      %v3190 = vrot.slane %v3186, 4
      %v3192 = vshrl.u32 %v3149, 16
      %v3194 = vrot.slane %v3192, 7
      %v3195 = vshll.u32 %v3149, 16
      %v3197 = vor.u32 %v3194, %v3195
      %v3198 = vsel %vm746, %v3190, %v3197
      %v3199 = vrot.slane %v3194, 4
      %v3201 = vshrl.u32 %v3150, 16
      %v3203 = vrot.slane %v3201, 7
      %v3204 = vshll.u32 %v3150, 16
      %v3206 = vor.u32 %v3203, %v3204
      %v3207 = vrot.slane %v3203, 4
      %v3209 = vshrl.u32 %v3151, 16
      %v3211 = vrot.slane %v3209, 7
      %v3212 = vshll.u32 %v3151, 16
      %v3214 = vor.u32 %v3211, %v3212
      %v3215 = vsel %vm746, %v3207, %v3214
      %v3216 = vrot.slane %v3211, 4
      %v3218 = vshrl.u32 %v3152, 16
      %v3220 = vrot.slane %v3218, 7
      %v3221 = vshll.u32 %v3152, 16
      %v3223 = vor.u32 %v3220, %v3221
      %v3224 = vrot.slane %v3220, 4
      %v3226 = vshrl.u32 %v3153, 16
      %v3228 = vrot.slane %v3226, 7
      %v3229 = vshll.u32 %v3153, 16
      %v3231 = vor.u32 %v3228, %v3229
      %v3232 = vsel %vm746, %v3224, %v3231
      %v3233 = vrot.slane %v3228, 4
      %v3235 = vshrl.u32 %v3154, 16
      %v3237 = vrot.slane %v3235, 7
      %v3238 = vshll.u32 %v3154, 16
      %v3240 = vor.u32 %v3237, %v3238
      %v3241 = vrot.slane %v3237, 4
      %v3243 = vshrl.u32 %v3155, 16
      %v3245 = vrot.slane %v3243, 7
      %v3246 = vshll.u32 %v3155, 16
      %v3248 = vor.u32 %v3245, %v3246
      %v3249 = vsel %vm746, %v3241, %v3248
      %v3250 = vrot.slane %v3245, 4
      %v3252 = vshrl.u32 %v3156, 16
      %v3254 = vrot.slane %v3252, 7
      %v3255 = vshll.u32 %v3156, 16
      %v3257 = vor.u32 %v3254, %v3255
      %v3258 = vrot.slane %v3254, 4
      %v3260 = vshrl.u32 %v3157, 16
      %v3262 = vrot.slane %v3260, 7
      %v3263 = vshll.u32 %v3157, 16
      %v3265 = vor.u32 %v3262, %v3263
      %v3266 = vsel %vm746, %v3258, %v3265
      %v3267 = vrot.slane %v3262, 4
      %v3269 = vshrl.u32 %v3158, 16
      %v3271 = vrot.slane %v3269, 7
      %v3272 = vshll.u32 %v3158, 16
      %v3274 = vor.u32 %v3271, %v3272
      %v3275 = vrot.slane %v3271, 4
      %v3277 = vshrl.u32 %v3159, 16
      %v3279 = vrot.slane %v3277, 7
      %v3280 = vshll.u32 %v3159, 16
      %v3282 = vor.u32 %v3279, %v3280
      %v3283 = vsel %vm746, %v3275, %v3282
      %v3284 = vrot.slane %v3279, 4
      %v3286 = vshrl.u32 %v3160, 16
      %v3288 = vrot.slane %v3286, 7
      %v3289 = vshll.u32 %v3160, 16
      %v3291 = vor.u32 %v3288, %v3289
      %v3292 = vrot.slane %v3288, 4
      %v3294 = vshrl.u32 %v3161, 16
      %v3296 = vrot.slane %v3294, 7
      %v3297 = vshll.u32 %v3161, 16
      %v3299 = vor.u32 %v3296, %v3297
      %v3300 = vsel %vm746, %v3292, %v3299
      %v3301 = vrot.slane %v3296, 4
      %v3303 = vshrl.u32 %v3162, 16
      %v3305 = vrot.slane %v3303, 7
      %v3306 = vshll.u32 %v3162, 16
      %v3308 = vor.u32 %v3305, %v3306
      %v3309 = vrot.slane %v3305, 4
      %v3311 = vshrl.u32 %v3163, 16
      %v3313 = vrot.slane %v3311, 7
      %v3314 = vshll.u32 %v3163, 16
      %v3316 = vor.u32 %v3313, %v3314
      %v3317 = vsel %vm746, %v3309, %v3316
      %v3318 = vrot.slane %v3313, 4
      %v3320 = vshrl.u32 %v3164, 16
      %v3322 = vrot.slane %v3320, 7
      %v3323 = vshll.u32 %v3164, 16
      %v3325 = vor.u32 %v3322, %v3323
      %v3326 = vrot.slane %v3322, 4
      %v3328 = vshrl.u32 %v3165, 16
      %v3330 = vrot.slane %v3328, 7
      %v3331 = vshll.u32 %v3165, 16
      %v3333 = vor.u32 %v3330, %v3331
      %v3334 = vsel %vm746, %v3326, %v3333
      %v3335 = vrot.slane %v3330, 4
      %vm3366 = vcmask 60416
      %vm3367 = vmand %vm3366, %vm370
      %v3368 = vld [vmem:[#allocation3] sm:$0xf]
      %v3369 = vsel %vm3367, %v3172, %v3368
      %3370 = vst [vmem:[#allocation3] sm:$0xf] %v3369
      %vm3371 = vcmask 60416
      %3372 = vst.msk [vmem:[#allocation3 + $0x4] sm:$0xf] %vm3371, %v3181
      %v3373 = vld [vmem:[#allocation3 + $0x8] sm:$0x1]
      %v3374 = vsel %vm409, %v3182, %v3373
      %3375 = vst [vmem:[#allocation3 + $0x8] sm:$0x1] %v3374
      %v3376 = vld [vmem:[#allocation3 + $0xc] sm:$0xf]
      %v3377 = vsel %vm3367, %v3189, %v3376
      %3378 = vst [vmem:[#allocation3 + $0xc] sm:$0xf] %v3377
      %3379 = vst.msk [vmem:[#allocation3 + $0x10] sm:$0xf] %vm3371, %v3198
      %v3380 = vld [vmem:[#allocation3 + $0x14] sm:$0x1]
      %v3381 = vsel %vm409, %v3199, %v3380
      %3382 = vst [vmem:[#allocation3 + $0x14] sm:$0x1] %v3381
      %v3383 = vld [vmem:[#allocation3 + $0x18] sm:$0xf]
      %v3384 = vsel %vm3367, %v3206, %v3383
      %3385 = vst [vmem:[#allocation3 + $0x18] sm:$0xf] %v3384
      %3386 = vst.msk [vmem:[#allocation3 + $0x1c] sm:$0xf] %vm3371, %v3215
      %v3387 = vld [vmem:[#allocation3 + $0x20] sm:$0x1]
      %v3388 = vsel %vm409, %v3216, %v3387
      %3389 = vst [vmem:[#allocation3 + $0x20] sm:$0x1] %v3388
      %v3390 = vld [vmem:[#allocation3 + $0x24] sm:$0xf]
      %v3391 = vsel %vm3367, %v3223, %v3390
      %3392 = vst [vmem:[#allocation3 + $0x24] sm:$0xf] %v3391
      %3393 = vst.msk [vmem:[#allocation3 + $0x28] sm:$0xf] %vm3371, %v3232
      %v3394 = vld [vmem:[#allocation3 + $0x2c] sm:$0x1]
      %v3395 = vsel %vm409, %v3233, %v3394
      %3396 = vst [vmem:[#allocation3 + $0x2c] sm:$0x1] %v3395
      %v3397 = vld [vmem:[#allocation3 + $0x30] sm:$0xf]
      %v3398 = vsel %vm3367, %v3240, %v3397
      %3399 = vst [vmem:[#allocation3 + $0x30] sm:$0xf] %v3398
      %3400 = vst.msk [vmem:[#allocation3 + $0x34] sm:$0xf] %vm3371, %v3249
      %v3401 = vld [vmem:[#allocation3 + $0x38] sm:$0x1]
      %v3402 = vsel %vm409, %v3250, %v3401
      %3403 = vst [vmem:[#allocation3 + $0x38] sm:$0x1] %v3402
      %v3404 = vld [vmem:[#allocation3 + $0x3c] sm:$0xf]
      %v3405 = vsel %vm3367, %v3257, %v3404
      %3406 = vst [vmem:[#allocation3 + $0x3c] sm:$0xf] %v3405
      %3407 = vst.msk [vmem:[#allocation3 + $0x40] sm:$0xf] %vm3371, %v3266
      %v3408 = vld [vmem:[#allocation3 + $0x44] sm:$0x1]
      %v3409 = vsel %vm409, %v3267, %v3408
      %3410 = vst [vmem:[#allocation3 + $0x44] sm:$0x1] %v3409
      %v3411 = vld [vmem:[#allocation3 + $0x48] sm:$0xf]
      %v3412 = vsel %vm3367, %v3274, %v3411
      %3413 = vst [vmem:[#allocation3 + $0x48] sm:$0xf] %v3412
      %3414 = vst.msk [vmem:[#allocation3 + $0x4c] sm:$0xf] %vm3371, %v3283
      %v3415 = vld [vmem:[#allocation3 + $0x50] sm:$0x1]
      %v3416 = vsel %vm409, %v3284, %v3415
      %3417 = vst [vmem:[#allocation3 + $0x50] sm:$0x1] %v3416
      %v3418 = vld [vmem:[#allocation3 + $0x54] sm:$0xf]
      %v3419 = vsel %vm3367, %v3291, %v3418
      %3420 = vst [vmem:[#allocation3 + $0x54] sm:$0xf] %v3419
      %3421 = vst.msk [vmem:[#allocation3 + $0x58] sm:$0xf] %vm3371, %v3300
      %v3422 = vld [vmem:[#allocation3 + $0x5c] sm:$0x1]
      %v3423 = vsel %vm409, %v3301, %v3422
      %3424 = vst [vmem:[#allocation3 + $0x5c] sm:$0x1] %v3423
      %v3425 = vld [vmem:[#allocation3 + $0x60] sm:$0xf]
      %v3426 = vsel %vm3367, %v3308, %v3425
      %3427 = vst [vmem:[#allocation3 + $0x60] sm:$0xf] %v3426
      %3428 = vst.msk [vmem:[#allocation3 + $0x64] sm:$0xf] %vm3371, %v3317
      %v3429 = vld [vmem:[#allocation3 + $0x68] sm:$0x1]
      %v3430 = vsel %vm409, %v3318, %v3429
      %3431 = vst [vmem:[#allocation3 + $0x68] sm:$0x1] %v3430
      %v3432 = vld [vmem:[#allocation3 + $0x6c] sm:$0xf]
      %v3433 = vsel %vm3367, %v3325, %v3432
      %3434 = vst [vmem:[#allocation3 + $0x6c] sm:$0xf] %v3433
      %3435 = vst.msk [vmem:[#allocation3 + $0x70] sm:$0xf] %vm3371, %v3334
      %v3436 = vld [vmem:[#allocation3 + $0x74] sm:$0x1]
      %v3437 = vsel %vm409, %v3335, %v3436
      %3438 = vst [vmem:[#allocation3 + $0x74] sm:$0x1] %v3437
      %p3439 = scmp.eq.s32.totalorder %s22, 0
      // Predicated region
      $region45: #{down_forward.1} parent=43 // pred_check
        %p3440 = pneg %p3439
      $region46: #{down_forward.1} parent=43 // pred_check_branch
        %3442 = sbr.rel (%p3440) target = $region48
      $region47: #{down_forward.1} parent=43 // pred_region
        %3443 = vst.msk [vmem:[#allocation3] sm:$0xf] %vm3371, 0
        %3444 = vst.msk [vmem:[#allocation3 + $0x4] sm:$0xf] %vm3371, 0
        %vm3445 = vcmask 57344
        %3446 = vst.msk [vmem:[#allocation3 + $0x8] sm:$0x1] %vm3445, 0
      $region48: #{down_forward.1} parent=43 // pred_fallthru
        _
      %p3447 = scmp.eq.s32.totalorder %s22, 1
      // Predicated region
      $region49: #{down_forward.1} parent=43 // pred_check
        %p3448 = pneg %p3447
      $region50: #{down_forward.1} parent=43 // pred_check_branch
        %3450 = sbr.rel (%p3448) target = $region52
      $region51: #{down_forward.1} parent=43 // pred_region
        %s3451 = scalar_lea.vmem [#allocation3], 108
        %3452 = vst.msk [vmem:[%s3451] sm:$0xf] %vm3371, 0
        %3453 = vst.msk [vmem:[%s3451 + $0x4] sm:$0xf] %vm3371, 0
        %vm3454 = vcmask 57344
        %3455 = vst.msk [vmem:[%s3451 + $0x8] sm:$0x1] %vm3454, 0
      $region52: #{down_forward.1} parent=43 // pred_fallthru
        _
      %v3456 = vld [vmem:[#allocation3] sm:$0xf]
      %v3457 = vld [vmem:[#allocation3 + $0x4] sm:$0xf]
      %v3458 = vld [vmem:[#allocation3 + $0xc] sm:$0xf]
      %v3459 = vld [vmem:[#allocation3 + $0x10] sm:$0xf]
      %v3460 = vld [vmem:[#allocation3 + $0x18] sm:$0xf]
      %v3461 = vld [vmem:[#allocation3 + $0x1c] sm:$0xf]
      %v3462 = vld [vmem:[#allocation3 + $0x24] sm:$0xf]
      %v3463 = vld [vmem:[#allocation3 + $0x28] sm:$0xf]
      %v3464 = vld [vmem:[#allocation3 + $0x30] sm:$0xf]
      %v3465 = vld [vmem:[#allocation3 + $0x34] sm:$0xf]
      %v3466 = vld [vmem:[#allocation3 + $0x3c] sm:$0xf]
      %v3467 = vld [vmem:[#allocation3 + $0x40] sm:$0xf]
      %v3468 = vld [vmem:[#allocation3 + $0x48] sm:$0xf]
      %v3469 = vld [vmem:[#allocation3 + $0x4c] sm:$0xf]
      %v3470 = vld [vmem:[#allocation3 + $0x54] sm:$0xf]
      %v3471 = vld [vmem:[#allocation3 + $0x58] sm:$0xf]
      %v3472 = vld [vmem:[#allocation3 + $0x8] sm:$0x1]
      %v3473 = vld [vmem:[#allocation3 + $0x14] sm:$0x1]
      %v3474 = vld [vmem:[#allocation3 + $0x20] sm:$0x1]
      %v3475 = vld [vmem:[#allocation3 + $0x2c] sm:$0x1]
      %v3476 = vld [vmem:[#allocation3 + $0x38] sm:$0x1]
      %v3477 = vld [vmem:[#allocation3 + $0x44] sm:$0x1]
      %v3478 = vld [vmem:[#allocation3 + $0x50] sm:$0x1]
      %v3479 = vld [vmem:[#allocation3 + $0x5c] sm:$0x1]
      %v3481 = vshrl.u32 %v3456, 16
      %v3483 = vrot.slane %v3481, 4
      %v3484 = vshll.u32 %v3456, 16
      %v3486 = vrot.slane %v3484, 5
      %v3487 = vor.u32 %v3483, %v3486
      %v3488 = vrot.slane %v3487, 4
      %v3490 = vshll.u32 %v3457, 16
      %v3492 = vrot.slane %v3490, 5
      %v3493 = vsel %vm1168, %v3488, %v3492
      %v3494 = vshrl.u32 %v3457, 16
      %v3496 = vrot.slane %v3494, 4
      %v3497 = vor.u32 %v3496, %v3492
      %v3498 = vrot.slane %v3497, 4
      %v3500 = vshll.u32 %v3472, 16
      %v3502 = vrot.slane %v3500, 5
      %v3503 = vsel %vm1168, %v3498, %v3502
      %v3505 = vshrl.u32 %v3458, 16
      %v3507 = vrot.slane %v3505, 4
      %v3508 = vshll.u32 %v3458, 16
      %v3510 = vrot.slane %v3508, 5
      %v3511 = vor.u32 %v3507, %v3510
      %v3512 = vrot.slane %v3511, 4
      %v3514 = vshll.u32 %v3459, 16
      %v3516 = vrot.slane %v3514, 5
      %v3517 = vsel %vm1168, %v3512, %v3516
      %v3518 = vshrl.u32 %v3459, 16
      %v3520 = vrot.slane %v3518, 4
      %v3521 = vor.u32 %v3520, %v3516
      %v3522 = vrot.slane %v3521, 4
      %v3524 = vshll.u32 %v3473, 16
      %v3526 = vrot.slane %v3524, 5
      %v3527 = vsel %vm1168, %v3522, %v3526
      %v3529 = vshrl.u32 %v3460, 16
      %v3531 = vrot.slane %v3529, 4
      %v3532 = vshll.u32 %v3460, 16
      %v3534 = vrot.slane %v3532, 5
      %v3535 = vor.u32 %v3531, %v3534
      %v3536 = vrot.slane %v3535, 4
      %v3538 = vshll.u32 %v3461, 16
      %v3540 = vrot.slane %v3538, 5
      %v3541 = vsel %vm1168, %v3536, %v3540
      %v3542 = vshrl.u32 %v3461, 16
      %v3544 = vrot.slane %v3542, 4
      %v3545 = vor.u32 %v3544, %v3540
      %v3546 = vrot.slane %v3545, 4
      %v3548 = vshll.u32 %v3474, 16
      %v3550 = vrot.slane %v3548, 5
      %v3551 = vsel %vm1168, %v3546, %v3550
      %v3553 = vshrl.u32 %v3462, 16
      %v3555 = vrot.slane %v3553, 4
      %v3556 = vshll.u32 %v3462, 16
      %v3558 = vrot.slane %v3556, 5
      %v3559 = vor.u32 %v3555, %v3558
      %v3560 = vrot.slane %v3559, 4
      %v3562 = vshll.u32 %v3463, 16
      %v3564 = vrot.slane %v3562, 5
      %v3565 = vsel %vm1168, %v3560, %v3564
      %v3566 = vshrl.u32 %v3463, 16
      %v3568 = vrot.slane %v3566, 4
      %v3569 = vor.u32 %v3568, %v3564
      %v3570 = vrot.slane %v3569, 4
      %v3572 = vshll.u32 %v3475, 16
      %v3574 = vrot.slane %v3572, 5
      %v3575 = vsel %vm1168, %v3570, %v3574
      %v3577 = vshrl.u32 %v3464, 16
      %v3579 = vrot.slane %v3577, 4
      %v3580 = vshll.u32 %v3464, 16
      %v3582 = vrot.slane %v3580, 5
      %v3583 = vor.u32 %v3579, %v3582
      %v3584 = vrot.slane %v3583, 4
      %v3586 = vshll.u32 %v3465, 16
      %v3588 = vrot.slane %v3586, 5
      %v3589 = vsel %vm1168, %v3584, %v3588
      %v3590 = vshrl.u32 %v3465, 16
      %v3592 = vrot.slane %v3590, 4
      %v3593 = vor.u32 %v3592, %v3588
      %v3594 = vrot.slane %v3593, 4
      %v3596 = vshll.u32 %v3476, 16
      %v3598 = vrot.slane %v3596, 5
      %v3599 = vsel %vm1168, %v3594, %v3598
      %v3601 = vshrl.u32 %v3466, 16
      %v3603 = vrot.slane %v3601, 4
      %v3604 = vshll.u32 %v3466, 16
      %v3606 = vrot.slane %v3604, 5
      %v3607 = vor.u32 %v3603, %v3606
      %v3608 = vrot.slane %v3607, 4
      %v3610 = vshll.u32 %v3467, 16
      %v3612 = vrot.slane %v3610, 5
      %v3613 = vsel %vm1168, %v3608, %v3612
      %v3614 = vshrl.u32 %v3467, 16
      %v3616 = vrot.slane %v3614, 4
      %v3617 = vor.u32 %v3616, %v3612
      %v3618 = vrot.slane %v3617, 4
      %v3620 = vshll.u32 %v3477, 16
      %v3622 = vrot.slane %v3620, 5
      %v3623 = vsel %vm1168, %v3618, %v3622
      %v3625 = vshrl.u32 %v3468, 16
      %v3627 = vrot.slane %v3625, 4
      %v3628 = vshll.u32 %v3468, 16
      %v3630 = vrot.slane %v3628, 5
      %v3631 = vor.u32 %v3627, %v3630
      %v3632 = vrot.slane %v3631, 4
      %v3634 = vshll.u32 %v3469, 16
      %v3636 = vrot.slane %v3634, 5
      %v3637 = vsel %vm1168, %v3632, %v3636
      %v3638 = vshrl.u32 %v3469, 16
      %v3640 = vrot.slane %v3638, 4
      %v3641 = vor.u32 %v3640, %v3636
      %v3642 = vrot.slane %v3641, 4
      %v3644 = vshll.u32 %v3478, 16
      %v3646 = vrot.slane %v3644, 5
      %v3647 = vsel %vm1168, %v3642, %v3646
      %v3649 = vshrl.u32 %v3470, 16
      %v3651 = vrot.slane %v3649, 4
      %v3652 = vshll.u32 %v3470, 16
      %v3654 = vrot.slane %v3652, 5
      %v3655 = vor.u32 %v3651, %v3654
      %v3656 = vrot.slane %v3655, 4
      %v3658 = vshll.u32 %v3471, 16
      %v3660 = vrot.slane %v3658, 5
      %v3661 = vsel %vm1168, %v3656, %v3660
      %v3662 = vshrl.u32 %v3471, 16
      %v3664 = vrot.slane %v3662, 4
      %v3665 = vor.u32 %v3664, %v3660
      %v3666 = vrot.slane %v3665, 4
      %v3668 = vshll.u32 %v3479, 16
      %v3670 = vrot.slane %v3668, 5
      %v3671 = vsel %vm1168, %v3666, %v3670
      %v3672 = vld [vmem:[#allocation3] sm:$0xe]
      %v3673 = vld [vmem:[#allocation3 + $0xc] sm:$0xe]
      %v3674 = vld [vmem:[#allocation3 + $0x18] sm:$0xe]
      %v3675 = vld [vmem:[#allocation3 + $0x24] sm:$0xe]
      %v3676 = vld [vmem:[#allocation3 + $0x30] sm:$0xe]
      %v3677 = vld [vmem:[#allocation3 + $0x3c] sm:$0xe]
      %v3678 = vld [vmem:[#allocation3 + $0x48] sm:$0xe]
      %v3679 = vld [vmem:[#allocation3 + $0x54] sm:$0xe]
      %v3704 = vrot.slane %v3672, 5
      %v3705 = vrot.slane %v3704, 4
      %v3706 = vrot.slane %v3457, 5
      %v3707 = vsel %vm1451, %v3705, %v3706
      %v3708 = vrot.slane %v3706, 4
      %v3709 = vrot.slane %v3472, 5
      %v3710 = vsel %vm1451, %v3708, %v3709
      %v3711 = vrot.slane %v3673, 5
      %v3712 = vrot.slane %v3711, 4
      %v3713 = vrot.slane %v3459, 5
      %v3714 = vsel %vm1451, %v3712, %v3713
      %v3715 = vrot.slane %v3713, 4
      %v3716 = vrot.slane %v3473, 5
      %v3717 = vsel %vm1451, %v3715, %v3716
      %v3718 = vrot.slane %v3674, 5
      %v3719 = vrot.slane %v3718, 4
      %v3720 = vrot.slane %v3461, 5
      %v3721 = vsel %vm1451, %v3719, %v3720
      %v3722 = vrot.slane %v3720, 4
      %v3723 = vrot.slane %v3474, 5
      %v3724 = vsel %vm1451, %v3722, %v3723
      %v3725 = vrot.slane %v3675, 5
      %v3726 = vrot.slane %v3725, 4
      %v3727 = vrot.slane %v3463, 5
      %v3728 = vsel %vm1451, %v3726, %v3727
      %v3729 = vrot.slane %v3727, 4
      %v3730 = vrot.slane %v3475, 5
      %v3731 = vsel %vm1451, %v3729, %v3730
      %v3732 = vrot.slane %v3676, 5
      %v3733 = vrot.slane %v3732, 4
      %v3734 = vrot.slane %v3465, 5
      %v3735 = vsel %vm1451, %v3733, %v3734
      %v3736 = vrot.slane %v3734, 4
      %v3737 = vrot.slane %v3476, 5
      %v3738 = vsel %vm1451, %v3736, %v3737
      %v3739 = vrot.slane %v3677, 5
      %v3740 = vrot.slane %v3739, 4
      %v3741 = vrot.slane %v3467, 5
      %v3742 = vsel %vm1451, %v3740, %v3741
      %v3743 = vrot.slane %v3741, 4
      %v3744 = vrot.slane %v3477, 5
      %v3745 = vsel %vm1451, %v3743, %v3744
      %v3746 = vrot.slane %v3678, 5
      %v3747 = vrot.slane %v3746, 4
      %v3748 = vrot.slane %v3469, 5
      %v3749 = vsel %vm1451, %v3747, %v3748
      %v3750 = vrot.slane %v3748, 4
      %v3751 = vrot.slane %v3478, 5
      %v3752 = vsel %vm1451, %v3750, %v3751
      %v3753 = vrot.slane %v3679, 5
      %v3754 = vrot.slane %v3753, 4
      %v3755 = vrot.slane %v3471, 5
      %v3756 = vsel %vm1451, %v3754, %v3755
      %v3757 = vrot.slane %v3755, 4
      %v3758 = vrot.slane %v3479, 5
      %v3759 = vsel %vm1451, %v3757, %v3758
      %s3760 = scalar_lea.vmem [#allocation3], 12
      %v3761 = vld [vmem:[%s3760] sm:$0xf]
      %v3762 = vld [vmem:[%s3760 + $0x4] sm:$0xf]
      %v3763 = vld [vmem:[%s3760 + $0xc] sm:$0xf]
      %v3764 = vld [vmem:[%s3760 + $0x10] sm:$0xf]
      %v3765 = vld [vmem:[%s3760 + $0x18] sm:$0xf]
      %v3766 = vld [vmem:[%s3760 + $0x1c] sm:$0xf]
      %v3767 = vld [vmem:[%s3760 + $0x24] sm:$0xf]
      %v3768 = vld [vmem:[%s3760 + $0x28] sm:$0xf]
      %v3769 = vld [vmem:[%s3760 + $0x30] sm:$0xf]
      %v3770 = vld [vmem:[%s3760 + $0x34] sm:$0xf]
      %v3771 = vld [vmem:[%s3760 + $0x3c] sm:$0xf]
      %v3772 = vld [vmem:[%s3760 + $0x40] sm:$0xf]
      %v3773 = vld [vmem:[%s3760 + $0x48] sm:$0xf]
      %v3774 = vld [vmem:[%s3760 + $0x4c] sm:$0xf]
      %v3775 = vld [vmem:[%s3760 + $0x54] sm:$0xf]
      %v3776 = vld [vmem:[%s3760 + $0x58] sm:$0xf]
      %v3777 = vld [vmem:[%s3760 + $0x8] sm:$0x1]
      %v3778 = vld [vmem:[%s3760 + $0x14] sm:$0x1]
      %v3779 = vld [vmem:[%s3760 + $0x20] sm:$0x1]
      %v3780 = vld [vmem:[%s3760 + $0x2c] sm:$0x1]
      %v3781 = vld [vmem:[%s3760 + $0x38] sm:$0x1]
      %v3782 = vld [vmem:[%s3760 + $0x44] sm:$0x1]
      %v3783 = vld [vmem:[%s3760 + $0x50] sm:$0x1]
      %v3784 = vld [vmem:[%s3760 + $0x5c] sm:$0x1]
      %v3786 = vshrl.u32 %v3761, 16
      %v3788 = vrot.slane %v3786, 4
      %v3789 = vshll.u32 %v3761, 16
      %v3791 = vrot.slane %v3789, 5
      %v3792 = vor.u32 %v3788, %v3791
      %v3793 = vrot.slane %v3792, 4
      %v3795 = vshll.u32 %v3762, 16
      %v3797 = vrot.slane %v3795, 5
      %v3798 = vsel %vm1168, %v3793, %v3797
      %v3799 = vshrl.u32 %v3762, 16
      %v3801 = vrot.slane %v3799, 4
      %v3802 = vor.u32 %v3801, %v3797
      %v3803 = vrot.slane %v3802, 4
      %v3805 = vshll.u32 %v3777, 16
      %v3807 = vrot.slane %v3805, 5
      %v3808 = vsel %vm1168, %v3803, %v3807
      %v3810 = vshrl.u32 %v3763, 16
      %v3812 = vrot.slane %v3810, 4
      %v3813 = vshll.u32 %v3763, 16
      %v3815 = vrot.slane %v3813, 5
      %v3816 = vor.u32 %v3812, %v3815
      %v3817 = vrot.slane %v3816, 4
      %v3819 = vshll.u32 %v3764, 16
      %v3821 = vrot.slane %v3819, 5
      %v3822 = vsel %vm1168, %v3817, %v3821
      %v3823 = vshrl.u32 %v3764, 16
      %v3825 = vrot.slane %v3823, 4
      %v3826 = vor.u32 %v3825, %v3821
      %v3827 = vrot.slane %v3826, 4
      %v3829 = vshll.u32 %v3778, 16
      %v3831 = vrot.slane %v3829, 5
      %v3832 = vsel %vm1168, %v3827, %v3831
      %v3834 = vshrl.u32 %v3765, 16
      %v3836 = vrot.slane %v3834, 4
      %v3837 = vshll.u32 %v3765, 16
      %v3839 = vrot.slane %v3837, 5
      %v3840 = vor.u32 %v3836, %v3839
      %v3841 = vrot.slane %v3840, 4
      %v3843 = vshll.u32 %v3766, 16
      %v3845 = vrot.slane %v3843, 5
      %v3846 = vsel %vm1168, %v3841, %v3845
      %v3847 = vshrl.u32 %v3766, 16
      %v3849 = vrot.slane %v3847, 4
      %v3850 = vor.u32 %v3849, %v3845
      %v3851 = vrot.slane %v3850, 4
      %v3853 = vshll.u32 %v3779, 16
      %v3855 = vrot.slane %v3853, 5
      %v3856 = vsel %vm1168, %v3851, %v3855
      %v3858 = vshrl.u32 %v3767, 16
      %v3860 = vrot.slane %v3858, 4
      %v3861 = vshll.u32 %v3767, 16
      %v3863 = vrot.slane %v3861, 5
      %v3864 = vor.u32 %v3860, %v3863
      %v3865 = vrot.slane %v3864, 4
      %v3867 = vshll.u32 %v3768, 16
      %v3869 = vrot.slane %v3867, 5
      %v3870 = vsel %vm1168, %v3865, %v3869
      %v3871 = vshrl.u32 %v3768, 16
      %v3873 = vrot.slane %v3871, 4
      %v3874 = vor.u32 %v3873, %v3869
      %v3875 = vrot.slane %v3874, 4
      %v3877 = vshll.u32 %v3780, 16
      %v3879 = vrot.slane %v3877, 5
      %v3880 = vsel %vm1168, %v3875, %v3879
      %v3882 = vshrl.u32 %v3769, 16
      %v3884 = vrot.slane %v3882, 4
      %v3885 = vshll.u32 %v3769, 16
      %v3887 = vrot.slane %v3885, 5
      %v3888 = vor.u32 %v3884, %v3887
      %v3889 = vrot.slane %v3888, 4
      %v3891 = vshll.u32 %v3770, 16
      %v3893 = vrot.slane %v3891, 5
      %v3894 = vsel %vm1168, %v3889, %v3893
      %v3895 = vshrl.u32 %v3770, 16
      %v3897 = vrot.slane %v3895, 4
      %v3898 = vor.u32 %v3897, %v3893
      %v3899 = vrot.slane %v3898, 4
      %v3901 = vshll.u32 %v3781, 16
      %v3903 = vrot.slane %v3901, 5
      %v3904 = vsel %vm1168, %v3899, %v3903
      %v3906 = vshrl.u32 %v3771, 16
      %v3908 = vrot.slane %v3906, 4
      %v3909 = vshll.u32 %v3771, 16
      %v3911 = vrot.slane %v3909, 5
      %v3912 = vor.u32 %v3908, %v3911
      %v3913 = vrot.slane %v3912, 4
      %v3915 = vshll.u32 %v3772, 16
      %v3917 = vrot.slane %v3915, 5
      %v3918 = vsel %vm1168, %v3913, %v3917
      %v3919 = vshrl.u32 %v3772, 16
      %v3921 = vrot.slane %v3919, 4
      %v3922 = vor.u32 %v3921, %v3917
      %v3923 = vrot.slane %v3922, 4
      %v3925 = vshll.u32 %v3782, 16
      %v3927 = vrot.slane %v3925, 5
      %v3928 = vsel %vm1168, %v3923, %v3927
      %v3930 = vshrl.u32 %v3773, 16
      %v3932 = vrot.slane %v3930, 4
      %v3933 = vshll.u32 %v3773, 16
      %v3935 = vrot.slane %v3933, 5
      %v3936 = vor.u32 %v3932, %v3935
      %v3937 = vrot.slane %v3936, 4
      %v3939 = vshll.u32 %v3774, 16
      %v3941 = vrot.slane %v3939, 5
      %v3942 = vsel %vm1168, %v3937, %v3941
      %v3943 = vshrl.u32 %v3774, 16
      %v3945 = vrot.slane %v3943, 4
      %v3946 = vor.u32 %v3945, %v3941
      %v3947 = vrot.slane %v3946, 4
      %v3949 = vshll.u32 %v3783, 16
      %v3951 = vrot.slane %v3949, 5
      %v3952 = vsel %vm1168, %v3947, %v3951
      %v3954 = vshrl.u32 %v3775, 16
      %v3956 = vrot.slane %v3954, 4
      %v3957 = vshll.u32 %v3775, 16
      %v3959 = vrot.slane %v3957, 5
      %v3960 = vor.u32 %v3956, %v3959
      %v3961 = vrot.slane %v3960, 4
      %v3963 = vshll.u32 %v3776, 16
      %v3965 = vrot.slane %v3963, 5
      %v3966 = vsel %vm1168, %v3961, %v3965
      %v3967 = vshrl.u32 %v3776, 16
      %v3969 = vrot.slane %v3967, 4
      %v3970 = vor.u32 %v3969, %v3965
      %v3971 = vrot.slane %v3970, 4
      %v3973 = vshll.u32 %v3784, 16
      %v3975 = vrot.slane %v3973, 5
      %v3976 = vsel %vm1168, %v3971, %v3975
      %v3977 = vld [vmem:[%s3760] sm:$0xe]
      %v3978 = vld [vmem:[%s3760 + $0xc] sm:$0xe]
      %v3979 = vld [vmem:[%s3760 + $0x18] sm:$0xe]
      %v3980 = vld [vmem:[%s3760 + $0x24] sm:$0xe]
      %v3981 = vld [vmem:[%s3760 + $0x30] sm:$0xe]
      %v3982 = vld [vmem:[%s3760 + $0x3c] sm:$0xe]
      %v3983 = vld [vmem:[%s3760 + $0x48] sm:$0xe]
      %v3984 = vld [vmem:[%s3760 + $0x54] sm:$0xe]
      %v4009 = vrot.slane %v3977, 5
      %v4010 = vrot.slane %v4009, 4
      %v4011 = vrot.slane %v3762, 5
      %v4012 = vsel %vm1451, %v4010, %v4011
      %v4013 = vrot.slane %v4011, 4
      %v4014 = vrot.slane %v3777, 5
      %v4015 = vsel %vm1451, %v4013, %v4014
      %v4016 = vrot.slane %v3978, 5
      %v4017 = vrot.slane %v4016, 4
      %v4018 = vrot.slane %v3764, 5
      %v4019 = vsel %vm1451, %v4017, %v4018
      %v4020 = vrot.slane %v4018, 4
      %v4021 = vrot.slane %v3778, 5
      %v4022 = vsel %vm1451, %v4020, %v4021
      %v4023 = vrot.slane %v3979, 5
      %v4024 = vrot.slane %v4023, 4
      %v4025 = vrot.slane %v3766, 5
      %v4026 = vsel %vm1451, %v4024, %v4025
      %v4027 = vrot.slane %v4025, 4
      %v4028 = vrot.slane %v3779, 5
      %v4029 = vsel %vm1451, %v4027, %v4028
      %v4030 = vrot.slane %v3980, 5
      %v4031 = vrot.slane %v4030, 4
      %v4032 = vrot.slane %v3768, 5
      %v4033 = vsel %vm1451, %v4031, %v4032
      %v4034 = vrot.slane %v4032, 4
      %v4035 = vrot.slane %v3780, 5
      %v4036 = vsel %vm1451, %v4034, %v4035
      %v4037 = vrot.slane %v3981, 5
      %v4038 = vrot.slane %v4037, 4
      %v4039 = vrot.slane %v3770, 5
      %v4040 = vsel %vm1451, %v4038, %v4039
      %v4041 = vrot.slane %v4039, 4
      %v4042 = vrot.slane %v3781, 5
      %v4043 = vsel %vm1451, %v4041, %v4042
      %v4044 = vrot.slane %v3982, 5
      %v4045 = vrot.slane %v4044, 4
      %v4046 = vrot.slane %v3772, 5
      %v4047 = vsel %vm1451, %v4045, %v4046
      %v4048 = vrot.slane %v4046, 4
      %v4049 = vrot.slane %v3782, 5
      %v4050 = vsel %vm1451, %v4048, %v4049
      %v4051 = vrot.slane %v3983, 5
      %v4052 = vrot.slane %v4051, 4
      %v4053 = vrot.slane %v3774, 5
      %v4054 = vsel %vm1451, %v4052, %v4053
      %v4055 = vrot.slane %v4053, 4
      %v4056 = vrot.slane %v3783, 5
      %v4057 = vsel %vm1451, %v4055, %v4056
      %v4058 = vrot.slane %v3984, 5
      %v4059 = vrot.slane %v4058, 4
      %v4060 = vrot.slane %v3776, 5
      %v4061 = vsel %vm1451, %v4059, %v4060
      %v4062 = vrot.slane %v4060, 4
      %v4063 = vrot.slane %v3784, 5
      %v4064 = vsel %vm1451, %v4062, %v4063
      %s4065 = scalar_lea.vmem [#allocation3], 24
      %v4066 = vld [vmem:[%s4065] sm:$0xf]
      %v4067 = vld [vmem:[%s4065 + $0x4] sm:$0xf]
      %v4068 = vld [vmem:[%s4065 + $0xc] sm:$0xf]
      %v4069 = vld [vmem:[%s4065 + $0x10] sm:$0xf]
      %v4070 = vld [vmem:[%s4065 + $0x18] sm:$0xf]
      %v4071 = vld [vmem:[%s4065 + $0x1c] sm:$0xf]
      %v4072 = vld [vmem:[%s4065 + $0x24] sm:$0xf]
      %v4073 = vld [vmem:[%s4065 + $0x28] sm:$0xf]
      %v4074 = vld [vmem:[%s4065 + $0x30] sm:$0xf]
      %v4075 = vld [vmem:[%s4065 + $0x34] sm:$0xf]
      %v4076 = vld [vmem:[%s4065 + $0x3c] sm:$0xf]
      %v4077 = vld [vmem:[%s4065 + $0x40] sm:$0xf]
      %v4078 = vld [vmem:[%s4065 + $0x48] sm:$0xf]
      %v4079 = vld [vmem:[%s4065 + $0x4c] sm:$0xf]
      %v4080 = vld [vmem:[%s4065 + $0x54] sm:$0xf]
      %v4081 = vld [vmem:[%s4065 + $0x58] sm:$0xf]
      %v4082 = vld [vmem:[%s4065 + $0x8] sm:$0x1]
      %v4083 = vld [vmem:[%s4065 + $0x14] sm:$0x1]
      %v4084 = vld [vmem:[%s4065 + $0x20] sm:$0x1]
      %v4085 = vld [vmem:[%s4065 + $0x2c] sm:$0x1]
      %v4086 = vld [vmem:[%s4065 + $0x38] sm:$0x1]
      %v4087 = vld [vmem:[%s4065 + $0x44] sm:$0x1]
      %v4088 = vld [vmem:[%s4065 + $0x50] sm:$0x1]
      %v4089 = vld [vmem:[%s4065 + $0x5c] sm:$0x1]
      %v4091 = vshrl.u32 %v4066, 16
      %v4093 = vrot.slane %v4091, 4
      %v4094 = vshll.u32 %v4066, 16
      %v4096 = vrot.slane %v4094, 5
      %v4097 = vor.u32 %v4093, %v4096
      %v4098 = vrot.slane %v4097, 4
      %v4100 = vshll.u32 %v4067, 16
      %v4102 = vrot.slane %v4100, 5
      %v4103 = vsel %vm1168, %v4098, %v4102
      %v4104 = vshrl.u32 %v4067, 16
      %v4106 = vrot.slane %v4104, 4
      %v4107 = vor.u32 %v4106, %v4102
      %v4108 = vrot.slane %v4107, 4
      %v4110 = vshll.u32 %v4082, 16
      %v4112 = vrot.slane %v4110, 5
      %v4113 = vsel %vm1168, %v4108, %v4112
      %v4115 = vshrl.u32 %v4068, 16
      %v4117 = vrot.slane %v4115, 4
      %v4118 = vshll.u32 %v4068, 16
      %v4120 = vrot.slane %v4118, 5
      %v4121 = vor.u32 %v4117, %v4120
      %v4122 = vrot.slane %v4121, 4
      %v4124 = vshll.u32 %v4069, 16
      %v4126 = vrot.slane %v4124, 5
      %v4127 = vsel %vm1168, %v4122, %v4126
      %v4128 = vshrl.u32 %v4069, 16
      %v4130 = vrot.slane %v4128, 4
      %v4131 = vor.u32 %v4130, %v4126
      %v4132 = vrot.slane %v4131, 4
      %v4134 = vshll.u32 %v4083, 16
      %v4136 = vrot.slane %v4134, 5
      %v4137 = vsel %vm1168, %v4132, %v4136
      %v4139 = vshrl.u32 %v4070, 16
      %v4141 = vrot.slane %v4139, 4
      %v4142 = vshll.u32 %v4070, 16
      %v4144 = vrot.slane %v4142, 5
      %v4145 = vor.u32 %v4141, %v4144
      %v4146 = vrot.slane %v4145, 4
      %v4148 = vshll.u32 %v4071, 16
      %v4150 = vrot.slane %v4148, 5
      %v4151 = vsel %vm1168, %v4146, %v4150
      %v4152 = vshrl.u32 %v4071, 16
      %v4154 = vrot.slane %v4152, 4
      %v4155 = vor.u32 %v4154, %v4150
      %v4156 = vrot.slane %v4155, 4
      %v4158 = vshll.u32 %v4084, 16
      %v4160 = vrot.slane %v4158, 5
      %v4161 = vsel %vm1168, %v4156, %v4160
      %v4163 = vshrl.u32 %v4072, 16
      %v4165 = vrot.slane %v4163, 4
      %v4166 = vshll.u32 %v4072, 16
      %v4168 = vrot.slane %v4166, 5
      %v4169 = vor.u32 %v4165, %v4168
      %v4170 = vrot.slane %v4169, 4
      %v4172 = vshll.u32 %v4073, 16
      %v4174 = vrot.slane %v4172, 5
      %v4175 = vsel %vm1168, %v4170, %v4174
      %v4176 = vshrl.u32 %v4073, 16
      %v4178 = vrot.slane %v4176, 4
      %v4179 = vor.u32 %v4178, %v4174
      %v4180 = vrot.slane %v4179, 4
      %v4182 = vshll.u32 %v4085, 16
      %v4184 = vrot.slane %v4182, 5
      %v4185 = vsel %vm1168, %v4180, %v4184
      %v4187 = vshrl.u32 %v4074, 16
      %v4189 = vrot.slane %v4187, 4
      %v4190 = vshll.u32 %v4074, 16
      %v4192 = vrot.slane %v4190, 5
      %v4193 = vor.u32 %v4189, %v4192
      %v4194 = vrot.slane %v4193, 4
      %v4196 = vshll.u32 %v4075, 16
      %v4198 = vrot.slane %v4196, 5
      %v4199 = vsel %vm1168, %v4194, %v4198
      %v4200 = vshrl.u32 %v4075, 16
      %v4202 = vrot.slane %v4200, 4
      %v4203 = vor.u32 %v4202, %v4198
      %v4204 = vrot.slane %v4203, 4
      %v4206 = vshll.u32 %v4086, 16
      %v4208 = vrot.slane %v4206, 5
      %v4209 = vsel %vm1168, %v4204, %v4208
      %v4211 = vshrl.u32 %v4076, 16
      %v4213 = vrot.slane %v4211, 4
      %v4214 = vshll.u32 %v4076, 16
      %v4216 = vrot.slane %v4214, 5
      %v4217 = vor.u32 %v4213, %v4216
      %v4218 = vrot.slane %v4217, 4
      %v4220 = vshll.u32 %v4077, 16
      %v4222 = vrot.slane %v4220, 5
      %v4223 = vsel %vm1168, %v4218, %v4222
      %v4224 = vshrl.u32 %v4077, 16
      %v4226 = vrot.slane %v4224, 4
      %v4227 = vor.u32 %v4226, %v4222
      %v4228 = vrot.slane %v4227, 4
      %v4230 = vshll.u32 %v4087, 16
      %v4232 = vrot.slane %v4230, 5
      %v4233 = vsel %vm1168, %v4228, %v4232
      %v4235 = vshrl.u32 %v4078, 16
      %v4237 = vrot.slane %v4235, 4
      %v4238 = vshll.u32 %v4078, 16
      %v4240 = vrot.slane %v4238, 5
      %v4241 = vor.u32 %v4237, %v4240
      %v4242 = vrot.slane %v4241, 4
      %v4244 = vshll.u32 %v4079, 16
      %v4246 = vrot.slane %v4244, 5
      %v4247 = vsel %vm1168, %v4242, %v4246
      %v4248 = vshrl.u32 %v4079, 16
      %v4250 = vrot.slane %v4248, 4
      %v4251 = vor.u32 %v4250, %v4246
      %v4252 = vrot.slane %v4251, 4
      %v4254 = vshll.u32 %v4088, 16
      %v4256 = vrot.slane %v4254, 5
      %v4257 = vsel %vm1168, %v4252, %v4256
      %v4259 = vshrl.u32 %v4080, 16
      %v4261 = vrot.slane %v4259, 4
      %v4262 = vshll.u32 %v4080, 16
      %v4264 = vrot.slane %v4262, 5
      %v4265 = vor.u32 %v4261, %v4264
      %v4266 = vrot.slane %v4265, 4
      %v4268 = vshll.u32 %v4081, 16
      %v4270 = vrot.slane %v4268, 5
      %v4271 = vsel %vm1168, %v4266, %v4270
      %v4272 = vshrl.u32 %v4081, 16
      %v4274 = vrot.slane %v4272, 4
      %v4275 = vor.u32 %v4274, %v4270
      %v4276 = vrot.slane %v4275, 4
      %v4278 = vshll.u32 %v4089, 16
      %v4280 = vrot.slane %v4278, 5
      %v4281 = vsel %vm1168, %v4276, %v4280
      %v4282 = vld [vmem:[%s4065] sm:$0xe]
      %v4283 = vld [vmem:[%s4065 + $0xc] sm:$0xe]
      %v4284 = vld [vmem:[%s4065 + $0x18] sm:$0xe]
      %v4285 = vld [vmem:[%s4065 + $0x24] sm:$0xe]
      %v4286 = vld [vmem:[%s4065 + $0x30] sm:$0xe]
      %v4287 = vld [vmem:[%s4065 + $0x3c] sm:$0xe]
      %v4288 = vld [vmem:[%s4065 + $0x48] sm:$0xe]
      %v4289 = vld [vmem:[%s4065 + $0x54] sm:$0xe]
      %v4314 = vrot.slane %v4282, 5
      %v4315 = vrot.slane %v4314, 4
      %v4316 = vrot.slane %v4067, 5
      %v4317 = vsel %vm1451, %v4315, %v4316
      %v4318 = vrot.slane %v4316, 4
      %v4319 = vrot.slane %v4082, 5
      %v4320 = vsel %vm1451, %v4318, %v4319
      %v4321 = vrot.slane %v4283, 5
      %v4322 = vrot.slane %v4321, 4
      %v4323 = vrot.slane %v4069, 5
      %v4324 = vsel %vm1451, %v4322, %v4323
      %v4325 = vrot.slane %v4323, 4
      %v4326 = vrot.slane %v4083, 5
      %v4327 = vsel %vm1451, %v4325, %v4326
      %v4328 = vrot.slane %v4284, 5
      %v4329 = vrot.slane %v4328, 4
      %v4330 = vrot.slane %v4071, 5
      %v4331 = vsel %vm1451, %v4329, %v4330
      %v4332 = vrot.slane %v4330, 4
      %v4333 = vrot.slane %v4084, 5
      %v4334 = vsel %vm1451, %v4332, %v4333
      %v4335 = vrot.slane %v4285, 5
      %v4336 = vrot.slane %v4335, 4
      %v4337 = vrot.slane %v4073, 5
      %v4338 = vsel %vm1451, %v4336, %v4337
      %v4339 = vrot.slane %v4337, 4
      %v4340 = vrot.slane %v4085, 5
      %v4341 = vsel %vm1451, %v4339, %v4340
      %v4342 = vrot.slane %v4286, 5
      %v4343 = vrot.slane %v4342, 4
      %v4344 = vrot.slane %v4075, 5
      %v4345 = vsel %vm1451, %v4343, %v4344
      %v4346 = vrot.slane %v4344, 4
      %v4347 = vrot.slane %v4086, 5
      %v4348 = vsel %vm1451, %v4346, %v4347
      %v4349 = vrot.slane %v4287, 5
      %v4350 = vrot.slane %v4349, 4
      %v4351 = vrot.slane %v4077, 5
      %v4352 = vsel %vm1451, %v4350, %v4351
      %v4353 = vrot.slane %v4351, 4
      %v4354 = vrot.slane %v4087, 5
      %v4355 = vsel %vm1451, %v4353, %v4354
      %v4356 = vrot.slane %v4288, 5
      %v4357 = vrot.slane %v4356, 4
      %v4358 = vrot.slane %v4079, 5
      %v4359 = vsel %vm1451, %v4357, %v4358
      %v4360 = vrot.slane %v4358, 4
      %v4361 = vrot.slane %v4088, 5
      %v4362 = vsel %vm1451, %v4360, %v4361
      %v4363 = vrot.slane %v4289, 5
      %v4364 = vrot.slane %v4363, 4
      %v4365 = vrot.slane %v4081, 5
      %v4366 = vsel %vm1451, %v4364, %v4365
      %v4367 = vrot.slane %v4365, 4
      %v4368 = vrot.slane %v4089, 5
      %v4369 = vsel %vm1451, %v4367, %v4368
      %v4378 = vunpack.c.l.b16 %v3456
      %v4379 = vunpack.c.l.b16 %v3457
      %v4380 = vunpack.c.l.b16 %v3458
      %v4381 = vunpack.c.l.b16 %v3459
      %v4382 = vunpack.c.l.b16 %v3460
      %v4383 = vunpack.c.l.b16 %v3461
      %v4384 = vunpack.c.l.b16 %v3462
      %v4385 = vunpack.c.l.b16 %v3463
      %v4386 = vunpack.c.l.b16 %v3464
      %v4387 = vunpack.c.l.b16 %v3465
      %v4388 = vunpack.c.l.b16 %v3466
      %v4389 = vunpack.c.l.b16 %v3467
      %v4390 = vunpack.c.l.b16 %v3468
      %v4391 = vunpack.c.l.b16 %v3469
      %v4392 = vunpack.c.l.b16 %v3470
      %v4393 = vunpack.c.l.b16 %v3471
      %v4394 = vpack.c.b16 %v4379, %v4378
      %v4395 = vpack.c.b16 %v4381, %v4380
      %v4396 = vpack.c.b16 %v4383, %v4382
      %v4397 = vpack.c.b16 %v4385, %v4384
      %v4398 = vpack.c.b16 %v4387, %v4386
      %v4399 = vpack.c.b16 %v4389, %v4388
      %v4400 = vpack.c.b16 %v4391, %v4390
      %v4401 = vpack.c.b16 %v4393, %v4392
      %v4402 = vunpack.c.l.b16 %v3493
      %v4403 = vunpack.c.l.b16 %v3503
      %v4404 = vunpack.c.l.b16 %v3517
      %v4405 = vunpack.c.l.b16 %v3527
      %v4406 = vunpack.c.l.b16 %v3541
      %v4407 = vunpack.c.l.b16 %v3551
      %v4408 = vunpack.c.l.b16 %v3565
      %v4409 = vunpack.c.l.b16 %v3575
      %v4410 = vunpack.c.l.b16 %v3589
      %v4411 = vunpack.c.l.b16 %v3599
      %v4412 = vunpack.c.l.b16 %v3613
      %v4413 = vunpack.c.l.b16 %v3623
      %v4414 = vunpack.c.l.b16 %v3637
      %v4415 = vunpack.c.l.b16 %v3647
      %v4416 = vunpack.c.l.b16 %v3661
      %v4417 = vunpack.c.l.b16 %v3671
      %v4418 = vpack.c.b16 %v4403, %v4402
      %v4419 = vpack.c.b16 %v4405, %v4404
      %v4420 = vpack.c.b16 %v4407, %v4406
      %v4421 = vpack.c.b16 %v4409, %v4408
      %v4422 = vpack.c.b16 %v4411, %v4410
      %v4423 = vpack.c.b16 %v4413, %v4412
      %v4424 = vpack.c.b16 %v4415, %v4414
      %v4425 = vpack.c.b16 %v4417, %v4416
      %4426 = vrot.lane.b32.xlu0 %v4418, 8
      %v4427 = vpop.permute.xlu0 %4426
      %4428 = vrot.lane.b32.xlu0 %v4419, 8
      %v4429 = vpop.permute.xlu0 %4428
      %4430 = vrot.lane.b32.xlu0 %v4420, 8
      %v4431 = vpop.permute.xlu0 %4430
      %4432 = vrot.lane.b32.xlu0 %v4421, 8
      %v4433 = vpop.permute.xlu0 %4432
      %4434 = vrot.lane.b32.xlu0 %v4422, 8
      %v4435 = vpop.permute.xlu0 %4434
      %4436 = vrot.lane.b32.xlu0 %v4423, 8
      %v4437 = vpop.permute.xlu0 %4436
      %4438 = vrot.lane.b32.xlu0 %v4424, 8
      %v4439 = vpop.permute.xlu0 %4438
      %4440 = vrot.lane.b32.xlu0 %v4425, 8
      %v4441 = vpop.permute.xlu0 %4440
      %v4442 = vunpack.c.l.b16 %v3707
      %v4443 = vunpack.c.l.b16 %v3710
      %v4444 = vunpack.c.l.b16 %v3714
      %v4445 = vunpack.c.l.b16 %v3717
      %v4446 = vunpack.c.l.b16 %v3721
      %v4447 = vunpack.c.l.b16 %v3724
      %v4448 = vunpack.c.l.b16 %v3728
      %v4449 = vunpack.c.l.b16 %v3731
      %v4450 = vunpack.c.l.b16 %v3735
      %v4451 = vunpack.c.l.b16 %v3738
      %v4452 = vunpack.c.l.b16 %v3742
      %v4453 = vunpack.c.l.b16 %v3745
      %v4454 = vunpack.c.l.b16 %v3749
      %v4455 = vunpack.c.l.b16 %v3752
      %v4456 = vunpack.c.l.b16 %v3756
      %v4457 = vunpack.c.l.b16 %v3759
      %v4458 = vpack.c.b16 %v4443, %v4442
      %v4459 = vpack.c.b16 %v4445, %v4444
      %v4460 = vpack.c.b16 %v4447, %v4446
      %v4461 = vpack.c.b16 %v4449, %v4448
      %v4462 = vpack.c.b16 %v4451, %v4450
      %v4463 = vpack.c.b16 %v4453, %v4452
      %v4464 = vpack.c.b16 %v4455, %v4454
      %v4465 = vpack.c.b16 %v4457, %v4456
      %4466 = vrot.lane.b32.xlu0 %v4458, 16
      %v4467 = vpop.permute.xlu0 %4466
      %4468 = vrot.lane.b32.xlu0 %v4459, 16
      %v4469 = vpop.permute.xlu0 %4468
      %4470 = vrot.lane.b32.xlu0 %v4460, 16
      %v4471 = vpop.permute.xlu0 %4470
      %4472 = vrot.lane.b32.xlu0 %v4461, 16
      %v4473 = vpop.permute.xlu0 %4472
      %4474 = vrot.lane.b32.xlu0 %v4462, 16
      %v4475 = vpop.permute.xlu0 %4474
      %4476 = vrot.lane.b32.xlu0 %v4463, 16
      %v4477 = vpop.permute.xlu0 %4476
      %4478 = vrot.lane.b32.xlu0 %v4464, 16
      %v4479 = vpop.permute.xlu0 %4478
      %4480 = vrot.lane.b32.xlu0 %v4465, 16
      %v4481 = vpop.permute.xlu0 %4480
      %v4490 = vunpack.c.l.b16 %v3761
      %v4491 = vunpack.c.l.b16 %v3762
      %v4492 = vunpack.c.l.b16 %v3763
      %v4493 = vunpack.c.l.b16 %v3764
      %v4494 = vunpack.c.l.b16 %v3765
      %v4495 = vunpack.c.l.b16 %v3766
      %v4496 = vunpack.c.l.b16 %v3767
      %v4497 = vunpack.c.l.b16 %v3768
      %v4498 = vunpack.c.l.b16 %v3769
      %v4499 = vunpack.c.l.b16 %v3770
      %v4500 = vunpack.c.l.b16 %v3771
      %v4501 = vunpack.c.l.b16 %v3772
      %v4502 = vunpack.c.l.b16 %v3773
      %v4503 = vunpack.c.l.b16 %v3774
      %v4504 = vunpack.c.l.b16 %v3775
      %v4505 = vunpack.c.l.b16 %v3776
      %v4506 = vpack.c.b16 %v4491, %v4490
      %v4507 = vpack.c.b16 %v4493, %v4492
      %v4508 = vpack.c.b16 %v4495, %v4494
      %v4509 = vpack.c.b16 %v4497, %v4496
      %v4510 = vpack.c.b16 %v4499, %v4498
      %v4511 = vpack.c.b16 %v4501, %v4500
      %v4512 = vpack.c.b16 %v4503, %v4502
      %v4513 = vpack.c.b16 %v4505, %v4504
      %4514 = vrot.lane.b32.xlu0 %v4506, 24
      %v4515 = vpop.permute.xlu0 %4514
      %4516 = vrot.lane.b32.xlu0 %v4507, 24
      %v4517 = vpop.permute.xlu0 %4516
      %4518 = vrot.lane.b32.xlu0 %v4508, 24
      %v4519 = vpop.permute.xlu0 %4518
      %4520 = vrot.lane.b32.xlu0 %v4509, 24
      %v4521 = vpop.permute.xlu0 %4520
      %4522 = vrot.lane.b32.xlu0 %v4510, 24
      %v4523 = vpop.permute.xlu0 %4522
      %4524 = vrot.lane.b32.xlu0 %v4511, 24
      %v4525 = vpop.permute.xlu0 %4524
      %4526 = vrot.lane.b32.xlu0 %v4512, 24
      %v4527 = vpop.permute.xlu0 %4526
      %4528 = vrot.lane.b32.xlu0 %v4513, 24
      %v4529 = vpop.permute.xlu0 %4528
      %v4530 = vunpack.c.l.b16 %v3798
      %v4531 = vunpack.c.l.b16 %v3808
      %v4532 = vunpack.c.l.b16 %v3822
      %v4533 = vunpack.c.l.b16 %v3832
      %v4534 = vunpack.c.l.b16 %v3846
      %v4535 = vunpack.c.l.b16 %v3856
      %v4536 = vunpack.c.l.b16 %v3870
      %v4537 = vunpack.c.l.b16 %v3880
      %v4538 = vunpack.c.l.b16 %v3894
      %v4539 = vunpack.c.l.b16 %v3904
      %v4540 = vunpack.c.l.b16 %v3918
      %v4541 = vunpack.c.l.b16 %v3928
      %v4542 = vunpack.c.l.b16 %v3942
      %v4543 = vunpack.c.l.b16 %v3952
      %v4544 = vunpack.c.l.b16 %v3966
      %v4545 = vunpack.c.l.b16 %v3976
      %v4546 = vpack.c.b16 %v4531, %v4530
      %v4547 = vpack.c.b16 %v4533, %v4532
      %v4548 = vpack.c.b16 %v4535, %v4534
      %v4549 = vpack.c.b16 %v4537, %v4536
      %v4550 = vpack.c.b16 %v4539, %v4538
      %v4551 = vpack.c.b16 %v4541, %v4540
      %v4552 = vpack.c.b16 %v4543, %v4542
      %v4553 = vpack.c.b16 %v4545, %v4544
      %4554 = vrot.lane.b32.xlu0 %v4546, 32
      %v4555 = vpop.permute.xlu0 %4554
      %4556 = vrot.lane.b32.xlu0 %v4547, 32
      %v4557 = vpop.permute.xlu0 %4556
      %4558 = vrot.lane.b32.xlu0 %v4548, 32
      %v4559 = vpop.permute.xlu0 %4558
      %4560 = vrot.lane.b32.xlu0 %v4549, 32
      %v4561 = vpop.permute.xlu0 %4560
      %4562 = vrot.lane.b32.xlu0 %v4550, 32
      %v4563 = vpop.permute.xlu0 %4562
      %4564 = vrot.lane.b32.xlu0 %v4551, 32
      %v4565 = vpop.permute.xlu0 %4564
      %4566 = vrot.lane.b32.xlu0 %v4552, 32
      %v4567 = vpop.permute.xlu0 %4566
      %4568 = vrot.lane.b32.xlu0 %v4553, 32
      %v4569 = vpop.permute.xlu0 %4568
      %v4570 = vunpack.c.l.b16 %v4012
      %v4571 = vunpack.c.l.b16 %v4015
      %v4572 = vunpack.c.l.b16 %v4019
      %v4573 = vunpack.c.l.b16 %v4022
      %v4574 = vunpack.c.l.b16 %v4026
      %v4575 = vunpack.c.l.b16 %v4029
      %v4576 = vunpack.c.l.b16 %v4033
      %v4577 = vunpack.c.l.b16 %v4036
      %v4578 = vunpack.c.l.b16 %v4040
      %v4579 = vunpack.c.l.b16 %v4043
      %v4580 = vunpack.c.l.b16 %v4047
      %v4581 = vunpack.c.l.b16 %v4050
      %v4582 = vunpack.c.l.b16 %v4054
      %v4583 = vunpack.c.l.b16 %v4057
      %v4584 = vunpack.c.l.b16 %v4061
      %v4585 = vunpack.c.l.b16 %v4064
      %v4586 = vpack.c.b16 %v4571, %v4570
      %v4587 = vpack.c.b16 %v4573, %v4572
      %v4588 = vpack.c.b16 %v4575, %v4574
      %v4589 = vpack.c.b16 %v4577, %v4576
      %v4590 = vpack.c.b16 %v4579, %v4578
      %v4591 = vpack.c.b16 %v4581, %v4580
      %v4592 = vpack.c.b16 %v4583, %v4582
      %v4593 = vpack.c.b16 %v4585, %v4584
      %4594 = vrot.lane.b32.xlu0 %v4586, 40
      %v4595 = vpop.permute.xlu0 %4594
      %4596 = vrot.lane.b32.xlu0 %v4587, 40
      %v4597 = vpop.permute.xlu0 %4596
      %4598 = vrot.lane.b32.xlu0 %v4588, 40
      %v4599 = vpop.permute.xlu0 %4598
      %4600 = vrot.lane.b32.xlu0 %v4589, 40
      %v4601 = vpop.permute.xlu0 %4600
      %4602 = vrot.lane.b32.xlu0 %v4590, 40
      %v4603 = vpop.permute.xlu0 %4602
      %4604 = vrot.lane.b32.xlu0 %v4591, 40
      %v4605 = vpop.permute.xlu0 %4604
      %4606 = vrot.lane.b32.xlu0 %v4592, 40
      %v4607 = vpop.permute.xlu0 %4606
      %4608 = vrot.lane.b32.xlu0 %v4593, 40
      %v4609 = vpop.permute.xlu0 %4608
      %v4618 = vunpack.c.l.b16 %v4066
      %v4619 = vunpack.c.l.b16 %v4067
      %v4620 = vunpack.c.l.b16 %v4068
      %v4621 = vunpack.c.l.b16 %v4069
      %v4622 = vunpack.c.l.b16 %v4070
      %v4623 = vunpack.c.l.b16 %v4071
      %v4624 = vunpack.c.l.b16 %v4072
      %v4625 = vunpack.c.l.b16 %v4073
      %v4626 = vunpack.c.l.b16 %v4074
      %v4627 = vunpack.c.l.b16 %v4075
      %v4628 = vunpack.c.l.b16 %v4076
      %v4629 = vunpack.c.l.b16 %v4077
      %v4630 = vunpack.c.l.b16 %v4078
      %v4631 = vunpack.c.l.b16 %v4079
      %v4632 = vunpack.c.l.b16 %v4080
      %v4633 = vunpack.c.l.b16 %v4081
      %v4634 = vpack.c.b16 %v4619, %v4618
      %v4635 = vpack.c.b16 %v4621, %v4620
      %v4636 = vpack.c.b16 %v4623, %v4622
      %v4637 = vpack.c.b16 %v4625, %v4624
      %v4638 = vpack.c.b16 %v4627, %v4626
      %v4639 = vpack.c.b16 %v4629, %v4628
      %v4640 = vpack.c.b16 %v4631, %v4630
      %v4641 = vpack.c.b16 %v4633, %v4632
      %4642 = vrot.lane.b32.xlu0 %v4634, 48
      %v4643 = vpop.permute.xlu0 %4642
      %4644 = vrot.lane.b32.xlu0 %v4635, 48
      %v4645 = vpop.permute.xlu0 %4644
      %4646 = vrot.lane.b32.xlu0 %v4636, 48
      %v4647 = vpop.permute.xlu0 %4646
      %4648 = vrot.lane.b32.xlu0 %v4637, 48
      %v4649 = vpop.permute.xlu0 %4648
      %4650 = vrot.lane.b32.xlu0 %v4638, 48
      %v4651 = vpop.permute.xlu0 %4650
      %4652 = vrot.lane.b32.xlu0 %v4639, 48
      %v4653 = vpop.permute.xlu0 %4652
      %4654 = vrot.lane.b32.xlu0 %v4640, 48
      %v4655 = vpop.permute.xlu0 %4654
      %4656 = vrot.lane.b32.xlu0 %v4641, 48
      %v4657 = vpop.permute.xlu0 %4656
      %v4658 = vunpack.c.l.b16 %v4103
      %v4659 = vunpack.c.l.b16 %v4113
      %v4660 = vunpack.c.l.b16 %v4127
      %v4661 = vunpack.c.l.b16 %v4137
      %v4662 = vunpack.c.l.b16 %v4151
      %v4663 = vunpack.c.l.b16 %v4161
      %v4664 = vunpack.c.l.b16 %v4175
      %v4665 = vunpack.c.l.b16 %v4185
      %v4666 = vunpack.c.l.b16 %v4199
      %v4667 = vunpack.c.l.b16 %v4209
      %v4668 = vunpack.c.l.b16 %v4223
      %v4669 = vunpack.c.l.b16 %v4233
      %v4670 = vunpack.c.l.b16 %v4247
      %v4671 = vunpack.c.l.b16 %v4257
      %v4672 = vunpack.c.l.b16 %v4271
      %v4673 = vunpack.c.l.b16 %v4281
      %v4674 = vpack.c.b16 %v4659, %v4658
      %v4675 = vpack.c.b16 %v4661, %v4660
      %v4676 = vpack.c.b16 %v4663, %v4662
      %v4677 = vpack.c.b16 %v4665, %v4664
      %v4678 = vpack.c.b16 %v4667, %v4666
      %v4679 = vpack.c.b16 %v4669, %v4668
      %v4680 = vpack.c.b16 %v4671, %v4670
      %v4681 = vpack.c.b16 %v4673, %v4672
      %4682 = vrot.lane.b32.xlu0 %v4674, 56
      %v4683 = vpop.permute.xlu0 %4682
      %4684 = vrot.lane.b32.xlu0 %v4675, 56
      %v4685 = vpop.permute.xlu0 %4684
      %4686 = vrot.lane.b32.xlu0 %v4676, 56
      %v4687 = vpop.permute.xlu0 %4686
      %4688 = vrot.lane.b32.xlu0 %v4677, 56
      %v4689 = vpop.permute.xlu0 %4688
      %4690 = vrot.lane.b32.xlu0 %v4678, 56
      %v4691 = vpop.permute.xlu0 %4690
      %4692 = vrot.lane.b32.xlu0 %v4679, 56
      %v4693 = vpop.permute.xlu0 %4692
      %4694 = vrot.lane.b32.xlu0 %v4680, 56
      %v4695 = vpop.permute.xlu0 %4694
      %4696 = vrot.lane.b32.xlu0 %v4681, 56
      %v4697 = vpop.permute.xlu0 %4696
      %v4698 = vunpack.c.l.b16 %v4317
      %v4699 = vunpack.c.l.b16 %v4320
      %v4700 = vunpack.c.l.b16 %v4324
      %v4701 = vunpack.c.l.b16 %v4327
      %v4702 = vunpack.c.l.b16 %v4331
      %v4703 = vunpack.c.l.b16 %v4334
      %v4704 = vunpack.c.l.b16 %v4338
      %v4705 = vunpack.c.l.b16 %v4341
      %v4706 = vunpack.c.l.b16 %v4345
      %v4707 = vunpack.c.l.b16 %v4348
      %v4708 = vunpack.c.l.b16 %v4352
      %v4709 = vunpack.c.l.b16 %v4355
      %v4710 = vunpack.c.l.b16 %v4359
      %v4711 = vunpack.c.l.b16 %v4362
      %v4712 = vunpack.c.l.b16 %v4366
      %v4713 = vunpack.c.l.b16 %v4369
      %v4714 = vpack.c.b16 %v4699, %v4698
      %v4715 = vpack.c.b16 %v4701, %v4700
      %v4716 = vpack.c.b16 %v4703, %v4702
      %v4717 = vpack.c.b16 %v4705, %v4704
      %v4718 = vpack.c.b16 %v4707, %v4706
      %v4719 = vpack.c.b16 %v4709, %v4708
      %v4720 = vpack.c.b16 %v4711, %v4710
      %v4721 = vpack.c.b16 %v4713, %v4712
      %4722 = vrot.lane.b32.xlu0 %v4714, 64
      %v4723 = vpop.permute.xlu0 %4722
      %4724 = vrot.lane.b32.xlu0 %v4715, 64
      %v4725 = vpop.permute.xlu0 %4724
      %4726 = vrot.lane.b32.xlu0 %v4716, 64
      %v4727 = vpop.permute.xlu0 %4726
      %4728 = vrot.lane.b32.xlu0 %v4717, 64
      %v4729 = vpop.permute.xlu0 %4728
      %4730 = vrot.lane.b32.xlu0 %v4718, 64
      %v4731 = vpop.permute.xlu0 %4730
      %4732 = vrot.lane.b32.xlu0 %v4719, 64
      %v4733 = vpop.permute.xlu0 %4732
      %4734 = vrot.lane.b32.xlu0 %v4720, 64
      %v4735 = vpop.permute.xlu0 %4734
      %4736 = vrot.lane.b32.xlu0 %v4721, 64
      %v4737 = vpop.permute.xlu0 %4736
      %v4740 = vsel %vm2774, %v4394, %v4427
      %v4743 = vsel %vm2774, %v4395, %v4429
      %v4746 = vsel %vm2774, %v4396, %v4431
      %v4749 = vsel %vm2774, %v4397, %v4433
      %v4752 = vsel %vm2774, %v4398, %v4435
      %v4755 = vsel %vm2774, %v4399, %v4437
      %v4758 = vsel %vm2774, %v4400, %v4439
      %v4761 = vsel %vm2774, %v4401, %v4441
      %v4763 = vsel %vm2816, %v4740, %v4467
      %v4765 = vsel %vm2816, %v4743, %v4469
      %v4767 = vsel %vm2816, %v4746, %v4471
      %v4769 = vsel %vm2816, %v4749, %v4473
      %v4771 = vsel %vm2816, %v4752, %v4475
      %v4773 = vsel %vm2816, %v4755, %v4477
      %v4775 = vsel %vm2816, %v4758, %v4479
      %v4777 = vsel %vm2816, %v4761, %v4481
      %v4779 = vsel %vm2858, %v4763, %v4515
      %v4781 = vsel %vm2858, %v4765, %v4517
      %v4783 = vsel %vm2858, %v4767, %v4519
      %v4785 = vsel %vm2858, %v4769, %v4521
      %v4787 = vsel %vm2858, %v4771, %v4523
      %v4789 = vsel %vm2858, %v4773, %v4525
      %v4791 = vsel %vm2858, %v4775, %v4527
      %v4793 = vsel %vm2858, %v4777, %v4529
      %v4795 = vsel %vm2900, %v4779, %v4555
      %v4797 = vsel %vm2900, %v4781, %v4557
      %v4799 = vsel %vm2900, %v4783, %v4559
      %v4801 = vsel %vm2900, %v4785, %v4561
      %v4803 = vsel %vm2900, %v4787, %v4563
      %v4805 = vsel %vm2900, %v4789, %v4565
      %v4807 = vsel %vm2900, %v4791, %v4567
      %v4809 = vsel %vm2900, %v4793, %v4569
      %vm4810 = vcmask 326656
      %v4812 = vsel %vm4810, %v4795, %v4595
      %v4814 = vsel %vm4810, %v4797, %v4597
      %v4816 = vsel %vm4810, %v4799, %v4599
      %v4818 = vsel %vm4810, %v4801, %v4601
      %v4820 = vsel %vm4810, %v4803, %v4603
      %v4822 = vsel %vm4810, %v4805, %v4605
      %v4824 = vsel %vm4810, %v4807, %v4607
      %v4826 = vsel %vm4810, %v4809, %v4609
      %vm4827 = vcmask 392192
      %v4829 = vsel %vm4827, %v4812, %v4643
      %v4831 = vsel %vm4827, %v4814, %v4645
      %v4833 = vsel %vm4827, %v4816, %v4647
      %v4835 = vsel %vm4827, %v4818, %v4649
      %v4837 = vsel %vm4827, %v4820, %v4651
      %v4839 = vsel %vm4827, %v4822, %v4653
      %v4841 = vsel %vm4827, %v4824, %v4655
      %v4843 = vsel %vm4827, %v4826, %v4657
      %vm4844 = vcmask 457728
      %v4846 = vsel %vm4844, %v4829, %v4683
      %v4848 = vsel %vm4844, %v4831, %v4685
      %v4850 = vsel %vm4844, %v4833, %v4687
      %v4852 = vsel %vm4844, %v4835, %v4689
      %v4854 = vsel %vm4844, %v4837, %v4691
      %v4856 = vsel %vm4844, %v4839, %v4693
      %v4858 = vsel %vm4844, %v4841, %v4695
      %v4860 = vsel %vm4844, %v4843, %v4697
      %vm4861 = vcmask 523264
      %v4863 = vsel %vm4861, %v4846, %v4723
      %v4865 = vsel %vm4861, %v4848, %v4725
      %v4867 = vsel %vm4861, %v4850, %v4727
      %v4869 = vsel %vm4861, %v4852, %v4729
      %v4871 = vsel %vm4861, %v4854, %v4731
      %v4873 = vsel %vm4861, %v4856, %v4733
      %v4875 = vsel %vm4861, %v4858, %v4735
      %v4877 = vsel %vm4861, %v4860, %v4737
      %v4878 = vld [vmem:[%s4] sm:$0xf]
      %v4879 = vld [vmem:[%s4 + $0x4] sm:$0xf]
      %v4880 = vld [vmem:[%s4 + $0x8] sm:$0xf]
      %v4881 = vld [vmem:[%s4 + $0xc] sm:$0xf]
      %v4882 = vld [vmem:[%s4 + $0x10] sm:$0xf]
      %v4883 = vld [vmem:[%s4 + $0x14] sm:$0xf]
      %v4884 = vld [vmem:[%s4 + $0x18] sm:$0xf]
      %v4885 = vld [vmem:[%s4 + $0x1c] sm:$0xf]
      %v4886 = vld [vmem:[%s4 + $0x20] sm:$0xf]
      %v4887 = vld [vmem:[%s5] sm:$0x1]
      %v4889 = vlaneseq
      %v4890 = vshrl.u32 %v4889, 7
      %v4891 = vsub.s32 0, %v4890
      %v4892 = vrot.slane %v4887, %v4891
      %v4903 = vunpack.c.l.b16 %v4878
      %v4904 = vunpack.c.l.b16 %v4879
      %v4905 = vunpack.c.l.b16 %v4880
      %v4906 = vunpack.c.l.b16 %v4881
      %v4907 = vunpack.c.l.b16 %v4882
      %v4908 = vunpack.c.l.b16 %v4883
      %v4909 = vunpack.c.l.b16 %v4884
      %v4910 = vunpack.c.l.b16 %v4885
      %v4911 = vunpack.c.l.b16 %v4886
      %v4912 = vpack.c.b16 %v4904, %v4903
      %v4913 = vpack.c.b16 %v4906, %v4905
      %v4914 = vpack.c.b16 %v4908, %v4907
      %v4915 = vpack.c.b16 %v4910, %v4909
      %v4916 = vpack.c.b16 %v4911, %v4911
      %vm4921 = vcmask 588800
      %v4922 = vsel %vm4921, %v4863, 0
      %v4924 = vsel %vm4921, %v4865, 0
      %v4926 = vsel %vm4921, %v4867, 0
      %v4928 = vsel %vm4921, %v4869, 0
      %v4930 = vsel %vm4921, %v4871, 0
      %v4932 = vsel %vm4921, %v4873, 0
      %v4934 = vsel %vm4921, %v4875, 0
      %v4936 = vsel %vm4921, %v4877, 0
      %vm4938 = vcmask 1043456
      %v4940 = vsel %vm4938, %v4916, 0
      %4942 = vmatprep.subr.bf16.mxu0 0
      %4943 = vmatpush1.bf16.msra.mxu0 %v4912
      %4944 = vmatprep.subr.bf16.mxu0 0
      %4945 = vmatpush1.bf16.msra.mxu0 %v4913
      %4946 = vmatprep.subr.bf16.mxu0 0
      %4947 = vmatpush1.bf16.msra.mxu0 %v4914
      %4948 = vmatprep.subr.bf16.mxu0 0
      %4949 = vmatpush1.bf16.msra.mxu0 %v4915
      %4950 = vmatprep.subr.bf16.mxu0 0
      %4951 = vmatpush1.bf16.msra.mxu0 %v4940
      %4952 = vmatprep.subr.bf16.mxu0 0
      %4953 = vmatpush1.bf16.msra.mxu0 0
      %4954 = vmatprep.subr.bf16.mxu0 0
      %4955 = vmatpush1.bf16.msra.mxu0 0
      %4956 = vmatprep.subr.bf16.mxu0 0
      %4957 = vmatpush1.bf16.msra.mxu0 0
      %4958 = vmatprep.subr.bf16.mxu0 0
      %4959 = vmatpush1.bf16.msra.mxu0 0
      %4960 = vmatprep.subr.bf16.mxu0 0
      %4961 = vmatpush1.bf16.msra.mxu0 0
      %4962 = vmatprep.subr.bf16.mxu0 0
      %4963 = vmatpush1.bf16.msra.mxu0 0
      %4964 = vmatprep.subr.bf16.mxu0 0
      %4965 = vmatpush1.bf16.msra.mxu0 0
      %4966 = vmatprep.subr.bf16.mxu0 0
      %4967 = vmatpush1.bf16.msra.mxu0 0
      %4968 = vmatprep.subr.bf16.mxu0 0
      %4969 = vmatpush1.bf16.msra.mxu0 0
      %4970 = vmatprep.subr.bf16.mxu0 0
      %4971 = vmatpush1.bf16.msra.mxu0 0
      %4972 = vmatprep.subr.bf16.mxu0 0
      %4973 = vmatpush1.bf16.msra.mxu0 0
      %4974 = vmatprep.mubr.bf16.mxu0 0
      %4975 = vmatmul.mubr.bf16.gmra.mrb[0].mxu0 %v4922
      %v4976 = vpop.f32.mrb[0].mxu0
      %v4977 = vadd.f32 %v4892, %v4976
      %v4978 = vpop.f32.mrb[0].mxu0
      %v4979 = vpop.f32.mrb[0].mxu0
      %v4980 = vadd.f32 %v4892, %v4979
      %v4981 = vpop.f32.mrb[0].mxu0
      %4982 = vmatprep.mubr.bf16.mxu0 0
      %4983 = vmatmul.mubr.bf16.gmra.mrb[0].mxu0 %v4924
      %v4984 = vpop.f32.mrb[0].mxu0
      %v4985 = vadd.f32 %v4892, %v4984
      %v4986 = vpop.f32.mrb[0].mxu0
      %v4987 = vpop.f32.mrb[0].mxu0
      %v4988 = vadd.f32 %v4892, %v4987
      %v4989 = vpop.f32.mrb[0].mxu0
      %4990 = vmatprep.mubr.bf16.mxu0 0
      %4991 = vmatmul.mubr.bf16.gmra.mrb[0].mxu0 %v4926
      %v4992 = vpop.f32.mrb[0].mxu0
      %v4993 = vadd.f32 %v4892, %v4992
      %v4994 = vpop.f32.mrb[0].mxu0
      %v4995 = vpop.f32.mrb[0].mxu0
      %v4996 = vadd.f32 %v4892, %v4995
      %v4997 = vpop.f32.mrb[0].mxu0
      %4998 = vmatprep.mubr.bf16.mxu0 0
      %4999 = vmatmul.mubr.bf16.gmra.mrb[0].mxu0 %v4928
      %v5000 = vpop.f32.mrb[0].mxu0
      %v5001 = vadd.f32 %v4892, %v5000
      %v5002 = vpop.f32.mrb[0].mxu0
      %v5003 = vpop.f32.mrb[0].mxu0
      %v5004 = vadd.f32 %v4892, %v5003
      %v5005 = vpop.f32.mrb[0].mxu0
      %5006 = vmatprep.mubr.bf16.mxu0 0
      %5007 = vmatmul.mubr.bf16.gmra.mrb[0].mxu0 %v4930
      %v5008 = vpop.f32.mrb[0].mxu0
      %v5009 = vadd.f32 %v4892, %v5008
      %v5010 = vpop.f32.mrb[0].mxu0
      %v5011 = vpop.f32.mrb[0].mxu0
      %v5012 = vadd.f32 %v4892, %v5011
      %v5013 = vpop.f32.mrb[0].mxu0
      %5014 = vmatprep.mubr.bf16.mxu0 0
      %5015 = vmatmul.mubr.bf16.gmra.mrb[0].mxu0 %v4932
      %v5016 = vpop.f32.mrb[0].mxu0
      %v5017 = vadd.f32 %v4892, %v5016
      %v5018 = vpop.f32.mrb[0].mxu0
      %v5019 = vpop.f32.mrb[0].mxu0
      %v5020 = vadd.f32 %v4892, %v5019
      %v5021 = vpop.f32.mrb[0].mxu0
      %5022 = vmatprep.mubr.bf16.mxu0 0
      %5023 = vmatmul.mubr.bf16.gmra.mrb[0].mxu0 %v4934
      %v5024 = vpop.f32.mrb[0].mxu0
      %v5025 = vadd.f32 %v4892, %v5024
      %v5026 = vpop.f32.mrb[0].mxu0
      %v5027 = vpop.f32.mrb[0].mxu0
      %v5028 = vadd.f32 %v4892, %v5027
      %v5029 = vpop.f32.mrb[0].mxu0
      %5030 = vmatprep.mubr.bf16.mxu0 0
      %5031 = vmatmul.mubr.bf16.gmra.mrb[0].mxu0 %v4936
      %v5032 = vpop.f32.mrb[0].mxu0
      %v5033 = vadd.f32 %v4892, %v5032
      %v5034 = vpop.f32.mrb[0].mxu0
      %v5035 = vpop.f32.mrb[0].mxu0
      %v5036 = vadd.f32 %v4892, %v5035
      %v5037 = vpop.f32.mrb[0].mxu0
      %5038 = vdwg.mxu0
      %v5039 = vmax.f32 %v4977, 0.0
      %v5040 = vmax.f32 %v4980, 0.0
      %v5041 = vmax.f32 %v4985, 0.0
      %v5042 = vmax.f32 %v4988, 0.0
      %v5043 = vmax.f32 %v4993, 0.0
      %v5044 = vmax.f32 %v4996, 0.0
      %v5045 = vmax.f32 %v5001, 0.0
      %v5046 = vmax.f32 %v5004, 0.0
      %v5047 = vmax.f32 %v5009, 0.0
      %v5048 = vmax.f32 %v5012, 0.0
      %v5049 = vmax.f32 %v5017, 0.0
      %v5050 = vmax.f32 %v5020, 0.0
      %v5051 = vmax.f32 %v5025, 0.0
      %v5052 = vmax.f32 %v5028, 0.0
      %v5053 = vmax.f32 %v5033, 0.0
      %v5054 = vmax.f32 %v5036, 0.0
      %5055 = vst.msk [vmem:[%s328] sm:$0xff] %vm2774, %v5039
      %5056 = vst.msk [vmem:[%s328 + $0x8] sm:$0xff] %vm2774, %v5040
      %5057 = vst.msk [vmem:[%s328 + $0x10] sm:$0xff] %vm2774, %v5041
      %5058 = vst.msk [vmem:[%s328 + $0x18] sm:$0xff] %vm2774, %v5042
      %5059 = vst.msk [vmem:[%s328 + $0x20] sm:$0xff] %vm2774, %v5043
      %5060 = vst.msk [vmem:[%s328 + $0x28] sm:$0xff] %vm2774, %v5044
      %5061 = vst.msk [vmem:[%s328 + $0x30] sm:$0xff] %vm2774, %v5045
      %5062 = vst.msk [vmem:[%s328 + $0x38] sm:$0xff] %vm2774, %v5046
      %5063 = vst.msk [vmem:[%s328 + $0x40] sm:$0xff] %vm2774, %v5047
      %5064 = vst.msk [vmem:[%s328 + $0x48] sm:$0xff] %vm2774, %v5048
      %5065 = vst.msk [vmem:[%s328 + $0x50] sm:$0xff] %vm2774, %v5049
      %5066 = vst.msk [vmem:[%s328 + $0x58] sm:$0xff] %vm2774, %v5050
      %5067 = vst.msk [vmem:[%s328 + $0x60] sm:$0xff] %vm2774, %v5051
      %5068 = vst.msk [vmem:[%s328 + $0x68] sm:$0xff] %vm2774, %v5052
      %5069 = vst.msk [vmem:[%s328 + $0x70] sm:$0xff] %vm2774, %v5053
      %5070 = vst.msk [vmem:[%s328 + $0x78] sm:$0xff] %vm2774, %v5054
      %s5071 = smul.u32 8, %s22
      %p5072 = scmp.lt.s32.totalorder %s21, 1
      %s5073 = scalar_select %p5072, %s21, 1
      %p5074 = scmp.lt.s32.totalorder %s5071, 15
      %s5075 = scalar_select %p5074, %s5071, 15
      %s5076 = smul.addr %s5075, 2
      %s5077 = smul.addr %s5073, 32
      %s5078 = sadd.s32 %s5076, %s5077
      %s5079 = smul.addr %s5078, 8
      %s5080 = scalar_lea.vmem %s6, %s5079
      // Predicated region
      $region53: #{down_forward.1} parent=43 // pred_check
        %p5081 = pneg %p189
      $region54: #{down_forward.1} parent=43 // pred_check_branch
        %5083 = sbr.rel (%p5081) target = $region56
      $region55: #{down_forward.1} parent=43 // pred_region
        %s5084 = smul.u32 8, %s22
      $region56: #{down_forward.1} parent=43 // pred_fallthru
        _
    $region44: #{down_forward.1} parent=5 // pred_fallthru
      _
    %p5085 = scmp.le.s32.totalorder 2, %s12
    // Predicated region
    $region57: #{down_forward.1} parent=5 // pred_check
      %p5086 = pneg %p5085
    $region58: #{down_forward.1} parent=5 // pred_check_branch
      %5088 = sbr.rel (%p5086) target = $region60
    $region59: #{down_forward.1} parent=5 // pred_region
      %s5089 = ssub.s32 %s12, 2
      // Predicated region
      $region61: #{down_forward.1} parent=59 // pred_check
        %p5090 = pneg %p195
      $region62: #{down_forward.1} parent=59 // pred_check_branch
        %5092 = sbr.rel (%p5090) target = $region64
      $region63: #{down_forward.1} parent=59 // pred_region
        %s5093 = smul.u32 8, %s24
        %p5094 = scmp.lt.s32.totalorder %s23, 1
        %s5095 = scalar_select %p5094, %s23, 1
        %p5096 = scmp.lt.s32.totalorder %s5093, 15
        %s5097 = scalar_select %p5096, %s5093, 15
        %s5098 = smul.addr %s5097, 2
        %s5099 = smul.addr %s5095, 32
        %s5100 = sadd.s32 %s5098, %s5099
        %s5101 = smul.addr %s5100, 8
        %s5102 = scalar_lea.vmem %s6, %s5101
      $region64: #{down_forward.1} parent=59 // pred_fallthru
        _
    $region60: #{down_forward.1} parent=5 // pred_fallthru
      _
  $region6: #{down_forward.1} parent=0 // loop_footer
    %s16 = sadd.s32 1, %s12
  $region7: #{down_forward.1} parent=0 // loop_footer_branch
    %11 = sbr.rel target = $region3
  $region8: #{down_forward.1} parent=0 // loop_exit
    _

</llo_original>
